<compile_context>
chip_gen: v7x
topology: tpu7x:2x2x1
jax: 0.10.0
libtpu: 0.0.40
codegen_flags: <defaults>
</compile_context>

<pallas_src>
import jax
import jax.numpy as jnp
from jax.experimental import pallas as pl
from jax.experimental.pallas import tpu as pltpu

D_IN = 784
D_H = 400
D_Z = 20
DZ_PAD = 128          # latent padded to one full lane group
D_LAT2 = 2 * DZ_PAD   # fused [mu | logvar] width (mu in lanes [0,128), logvar in [128,256))


def _vae_kernel(x_ref, eps_ref,
                w1_ref, b1_ref, wmv_ref, bmv_ref, w3_ref, b3_ref, w4_ref, b4_ref,
                recon_ref, mulv_ref):
    # encode: h1 = relu(x @ W1^T + b1)                         (TB, 400), f32 accumulation
    h1 = jnp.dot(x_ref[...], w1_ref[...], preferred_element_type=jnp.float32)
    h1 = jnp.maximum(h1 + b1_ref[...], 0.0)

    # fused latent projection: [mu | logvar] in one MXU launch  (TB, 256)
    mulv = jnp.dot(h1.astype(jnp.bfloat16), wmv_ref[...],
                   preferred_element_type=jnp.float32) + bmv_ref[...]
    mulv_ref[...] = mulv                                       # lane-dense, unmasked store

    mu = mulv[:, :DZ_PAD]                                      # vreg-aligned split (free)
    logvar = mulv[:, DZ_PAD:]

    # reparameterize (eps supplied from the host so semantics match torch.randn_like)
    z = mu + eps_ref[...] * jnp.exp(0.5 * logvar)              # (TB, 128), f32

    # decode
    h3 = jnp.dot(z.astype(jnp.bfloat16), w3_ref[...],
                 preferred_element_type=jnp.float32)
    h3 = jnp.maximum(h3 + b3_ref[...], 0.0)
    logits = jnp.dot(h3.astype(jnp.bfloat16), w4_ref[...],
                     preferred_element_type=jnp.float32) + b4_ref[...]
    recon_ref[...] = jax.nn.sigmoid(logits)


def init_params(key):
    """Deterministic init matching nn.Linear (uniform(-1/sqrt(fan_in), 1/sqrt(fan_in))).
    Weights are returned already transposed to (in, out); biases as (1, out)."""
    def linear(key, fan_in, fan_out):
        kw, kb = jax.random.split(key)
        bound = 1.0 / jnp.sqrt(jnp.float32(fan_in))
        wt = jax.random.uniform(kw, (fan_in, fan_out), jnp.float32, -bound, bound)
        b = jax.random.uniform(kb, (1, fan_out), jnp.float32, -bound, bound)
        return wt, b

    k1, k21, k22, k3, k4 = jax.random.split(key, 5)
    w1t, b1 = linear(k1, D_IN, D_H)
    w21t, b21 = linear(k21, D_H, D_Z)
    w22t, b22 = linear(k22, D_H, D_Z)
    w3t, b3 = linear(k3, D_Z, D_H)
    w4t, b4 = linear(k4, D_H, D_IN)
    return (w1t, b1, w21t, b21, w22t, b22, w3t, b3, w4t, b4)


def prepare_params(params):
    """One-time preprocessing: fuse mu/logvar weights, pad the latent dim to 128 lanes, and
    pre-cast matmul operands to bf16 (biases stay f32).  Done once, outside the hot path."""
    w1t, b1, w21t, b21, w22t, b22, w3t, b3, w4t, b4 = params
    wmv = jnp.zeros((D_H, D_LAT2), jnp.float32)
    wmv = wmv.at[:, :D_Z].set(w21t).at[:, DZ_PAD:DZ_PAD + D_Z].set(w22t)
    bmv = jnp.zeros((1, D_LAT2), jnp.float32)
    bmv = bmv.at[:, :D_Z].set(b21).at[:, DZ_PAD:DZ_PAD + D_Z].set(b22)
    w3p = jnp.zeros((DZ_PAD, D_H), jnp.float32).at[:D_Z, :].set(w3t)
    bf16 = lambda w: w.astype(jnp.bfloat16)
    return (bf16(w1t), b1, bf16(wmv), bmv, bf16(w3p), b3, bf16(w4t), b4)


def vae_forward(x, eps, prepared, *, tb=256):
    """x: any shape reshapeable to (-1, 784); eps: (B, 20). Returns (recon, mu, logvar), f32."""
    x2 = x.reshape(-1, D_IN)
    B = x2.shape[0]
    n_tiles = -(-B // tb)          # cdiv
    Bp = n_tiles * tb
    pad = Bp - B

    x2 = x2.astype(jnp.bfloat16)   # halves x HBM/DMA traffic; MXU is natively bf16
    epsp = jnp.pad(eps.astype(jnp.float32), ((0, pad), (0, DZ_PAD - D_Z)))
    if pad:
        x2 = jnp.pad(x2, ((0, pad), (0, 0)))   # zero rows -> finite outputs, sliced off below

    w1, b1, wmv, bmv, w3, b3, w4, b4 = prepared

    batch = lambda n: pl.BlockSpec((tb, n), lambda i: (i, 0))
    resident = lambda r, c: pl.BlockSpec((r, c), lambda i: (0, 0))  # constant index: no re-DMA

    grid_spec = pltpu.PrefetchScalarGridSpec(
        num_scalar_prefetch=0,
        grid=(n_tiles,),
        in_specs=[
            batch(D_IN),             # x        (bf16)
            batch(DZ_PAD),           # eps      (f32, lane-padded)
            resident(D_IN, D_H),     # W1^T     (bf16)
            resident(1, D_H),        # b1       (f32)
            resident(D_H, D_LAT2),   # [W21|W22]^T padded (bf16)
            resident(1, D_LAT2),     # [b21|b22]  padded  (f32)
            resident(DZ_PAD, D_H),   # W3^T     padded    (bf16)
            resident(1, D_H),        # b3       (f32)
            resident(D_H, D_IN),     # W4^T     (bf16)
            resident(1, D_IN),       # b4       (f32)
        ],
        out_specs=[
            batch(D_IN),             # recon
            batch(D_LAT2),           # fused [mu | logvar] (lane-dense)
        ],
    )

    recon, mulv = pl.pallas_call(
        _vae_kernel,
        out_shape=(
            jax.ShapeDtypeStruct((Bp, D_IN), jnp.float32),
            jax.ShapeDtypeStruct((Bp, D_LAT2), jnp.float32),
        ),
        grid_spec=grid_spec,
        compiler_params=pltpu.CompilerParams(
            dimension_semantics=("parallel",),     # v7x: both TCs split the batch tiles
            vmem_limit_bytes=32 * 1024 * 1024,     # ample headroom, < v7x 64 MiB physical
        ),
    )(x2, epsp, w1, b1, wmv, bmv, w3, b3, w4, b4)

    recon = recon[:B]
    mu = mulv[:B, :D_Z]
    logvar = mulv[:B, DZ_PAD:DZ_PAD + D_Z]
    return recon, mu, logvar


def vae_forward_ref(x, eps, params):
    """Pure-JAX f32 reference for correctness checking (unfused, unpadded)."""
    w1t, b1, w21t, b21, w22t, b22, w3t, b3, w4t, b4 = params
    x2 = x.reshape(-1, D_IN).astype(jnp.float32)
    h1 = jnp.maximum(x2 @ w1t + b1, 0.0)
    mu = h1 @ w21t + b21
    logvar = h1 @ w22t + b22
    z = mu + eps * jnp.exp(0.5 * logvar)
    h3 = jnp.maximum(z @ w3t + b3, 0.0)
    recon = jax.nn.sigmoid(h3 @ w4t + b4)
    return recon, mu, logvar


if __name__ == "__main__":
    key = jax.random.PRNGKey(0)
    kp, kx, ke = jax.random.split(key, 3)

    params = init_params(kp)
    prepared = prepare_params(params)

    # MNIST-like NCHW input.  B=300 with tb=128 exercises a multi-step grid (3 tiles) and an
    # explicitly zero-padded final partial tile, while staying small/fast.
    B = 300
    x = jax.random.uniform(kx, (B, 1, 28, 28), jnp.float32)
    eps = jax.random.normal(ke, (B, D_Z), jnp.float32)  # stands in for torch.randn_like(std)

    recon, mu, logvar = vae_forward(x, eps, prepared, tb=128)
    jax.block_until_ready((recon, mu, logvar))

    r_ref, m_ref, lv_ref = vae_forward_ref(x, eps, params)
    # bf16 matmul operands (f32 accumulation) -> tolerance loosened vs the pure-f32 reference.
    assert jnp.allclose(recon, r_ref, atol=2e-2, rtol=2e-2), "recon mismatch"
    assert jnp.allclose(mu, m_ref, atol=2e-2, rtol=2e-2), "mu mismatch"
    assert jnp.allclose(logvar, lv_ref, atol=2e-2, rtol=2e-2), "logvar mismatch"

    print("KERNEL_OK")
</pallas_src>

<mosaic_0001>
module attributes {stable_mosaic.version = 11 : i64} {
  func.func @_vae_kernel(%arg0: i32, %arg1: memref<128x784xbf16, #tpu.memory_space<vmem>>, %arg2: memref<128x128xf32, #tpu.memory_space<vmem>>, %arg3: memref<784x400xbf16, #tpu.memory_space<vmem>>, %arg4: memref<1x400xf32, #tpu.memory_space<vmem>>, %arg5: memref<400x256xbf16, #tpu.memory_space<vmem>>, %arg6: memref<1x256xf32, #tpu.memory_space<vmem>>, %arg7: memref<128x400xbf16, #tpu.memory_space<vmem>>, %arg8: memref<1x400xf32, #tpu.memory_space<vmem>>, %arg9: memref<400x784xbf16, #tpu.memory_space<vmem>>, %arg10: memref<1x784xf32, #tpu.memory_space<vmem>>, %arg11: memref<128x784xf32, #tpu.memory_space<vmem>>, %arg12: memref<128x256xf32, #tpu.memory_space<vmem>>) attributes {dimension_semantics = [#tpu.dimension_semantics<parallel>], iteration_bounds = array<i64: 3>, scalar_prefetch = 0 : i64, scratch_operands = 0 : i64, tpu.core_type = #tpu.core_type<tc>, window_params = [{transform_indices = @transform_0, window_bounds = array<i64: 128, 784>}, {transform_indices = @transform_1, window_bounds = array<i64: 128, 128>}, {pipeline_mode = #tpu.pipeline_mode<synchronous>, transform_indices = @transform_2, window_bounds = array<i64: 784, 400>}, {pipeline_mode = #tpu.pipeline_mode<synchronous>, transform_indices = @transform_3, window_bounds = array<i64: 1, 400>}, {pipeline_mode = #tpu.pipeline_mode<synchronous>, transform_indices = @transform_4, window_bounds = array<i64: 400, 256>}, {pipeline_mode = #tpu.pipeline_mode<synchronous>, transform_indices = @transform_5, window_bounds = array<i64: 1, 256>}, {pipeline_mode = #tpu.pipeline_mode<synchronous>, transform_indices = @transform_6, window_bounds = array<i64: 128, 400>}, {pipeline_mode = #tpu.pipeline_mode<synchronous>, transform_indices = @transform_7, window_bounds = array<i64: 1, 400>}, {pipeline_mode = #tpu.pipeline_mode<synchronous>, transform_indices = @transform_8, window_bounds = array<i64: 400, 784>}, {pipeline_mode = #tpu.pipeline_mode<synchronous>, transform_indices = @transform_9, window_bounds = array<i64: 1, 784>}, {transform_indices = @transform_10, window_bounds = array<i64: 128, 784>}, {transform_indices = @transform_11, window_bounds = array<i64: 128, 256>}]} {
    %c0 = arith.constant 0 : index
    %c0_0 = arith.constant 0 : index
    %0 = vector.load %arg1[%c0, %c0_0] : memref<128x784xbf16, #tpu.memory_space<vmem>>, vector<128x784xbf16>
    %c0_1 = arith.constant 0 : index
    %c0_2 = arith.constant 0 : index
    %1 = vector.load %arg3[%c0_1, %c0_2] : memref<784x400xbf16, #tpu.memory_space<vmem>>, vector<784x400xbf16>
    %cst = arith.constant dense<0.000000e+00> : vector<128x400xf32>
    %2 = tpu.matmul %0, %1, %cst {dimension_numbers = #tpu.dot_dimension_numbers<[1], [0], [0], [1], [0, 0, 1, 1], [], []>} : vector<128x784xbf16>, vector<784x400xbf16>, vector<128x400xf32> -> vector<128x400xf32>
    %c0_3 = arith.constant 0 : index
    %c0_4 = arith.constant 0 : index
    %3 = vector.load %arg4[%c0_3, %c0_4] : memref<1x400xf32, #tpu.memory_space<vmem>>, vector<1x400xf32>
    %4 = vector.broadcast %3 : vector<1x400xf32> to vector<128x400xf32>
    %5 = arith.addf %2, %4 : vector<128x400xf32>
    %cst_5 = arith.constant 0.000000e+00 : f32
    %6 = vector.broadcast %cst_5 : f32 to vector<128x400xf32>
    %7 = arith.maximumf %5, %6 : vector<128x400xf32>
    %8 = arith.truncf %7 : vector<128x400xf32> to vector<128x400xbf16>
    %c0_6 = arith.constant 0 : index
    %c0_7 = arith.constant 0 : index
    %9 = vector.load %arg5[%c0_6, %c0_7] : memref<400x256xbf16, #tpu.memory_space<vmem>>, vector<400x256xbf16>
    %cst_8 = arith.constant dense<0.000000e+00> : vector<128x256xf32>
    %10 = tpu.matmul %8, %9, %cst_8 {dimension_numbers = #tpu.dot_dimension_numbers<[1], [0], [0], [1], [0, 0, 1, 1], [], []>} : vector<128x400xbf16>, vector<400x256xbf16>, vector<128x256xf32> -> vector<128x256xf32>
    %c0_9 = arith.constant 0 : index
    %c0_10 = arith.constant 0 : index
    %11 = vector.load %arg6[%c0_9, %c0_10] : memref<1x256xf32, #tpu.memory_space<vmem>>, vector<1x256xf32>
    %12 = vector.broadcast %11 : vector<1x256xf32> to vector<128x256xf32>
    %13 = arith.addf %10, %12 : vector<128x256xf32>
    %c0_11 = arith.constant 0 : index
    %c0_12 = arith.constant 0 : index
    %14 = vector.load %arg12[%c0_11, %c0_12] : memref<128x256xf32, #tpu.memory_space<vmem>>, vector<128x256xf32>
    tpu.vector_store %arg12[%c0_11, %c0_12], %13 {strides = array<i32>} : memref<128x256xf32, #tpu.memory_space<vmem>>, vector<128x256xf32>,
    %15 = vector.extract_strided_slice %13 {offsets = [0, 0], sizes = [128, 128], strides = [1, 1]} : vector<128x256xf32> to vector<128x128xf32>
    %16 = vector.extract_strided_slice %13 {offsets = [0, 128], sizes = [128, 128], strides = [1, 1]} : vector<128x256xf32> to vector<128x128xf32>
    %c0_13 = arith.constant 0 : index
    %c0_14 = arith.constant 0 : index
    %17 = vector.load %arg2[%c0_13, %c0_14] : memref<128x128xf32, #tpu.memory_space<vmem>>, vector<128x128xf32>
    %cst_15 = arith.constant 5.000000e-01 : f32
    %18 = vector.broadcast %cst_15 : f32 to vector<128x128xf32>
    %19 = arith.mulf %18, %16 : vector<128x128xf32>
    %20 = math.exp %19 : vector<128x128xf32>
    %21 = arith.mulf %17, %20 : vector<128x128xf32>
    %22 = arith.addf %15, %21 : vector<128x128xf32>
    %23 = arith.truncf %22 : vector<128x128xf32> to vector<128x128xbf16>
    %c0_16 = arith.constant 0 : index
    %c0_17 = arith.constant 0 : index
    %24 = vector.load %arg7[%c0_16, %c0_17] : memref<128x400xbf16, #tpu.memory_space<vmem>>, vector<128x400xbf16>
    %cst_18 = arith.constant dense<0.000000e+00> : vector<128x400xf32>
    %25 = tpu.matmul %23, %24, %cst_18 {dimension_numbers = #tpu.dot_dimension_numbers<[1], [0], [0], [1], [0, 0, 1, 1], [], []>} : vector<128x128xbf16>, vector<128x400xbf16>, vector<128x400xf32> -> vector<128x400xf32>
    %c0_19 = arith.constant 0 : index
    %c0_20 = arith.constant 0 : index
    %26 = vector.load %arg8[%c0_19, %c0_20] : memref<1x400xf32, #tpu.memory_space<vmem>>, vector<1x400xf32>
    %27 = vector.broadcast %26 : vector<1x400xf32> to vector<128x400xf32>
    %28 = arith.addf %25, %27 : vector<128x400xf32>
    %cst_21 = arith.constant 0.000000e+00 : f32
    %29 = vector.broadcast %cst_21 : f32 to vector<128x400xf32>
    %30 = arith.maximumf %28, %29 : vector<128x400xf32>
    %31 = arith.truncf %30 : vector<128x400xf32> to vector<128x400xbf16>
    %c0_22 = arith.constant 0 : index
    %c0_23 = arith.constant 0 : index
    %32 = vector.load %arg9[%c0_22, %c0_23] : memref<400x784xbf16, #tpu.memory_space<vmem>>, vector<400x784xbf16>
    %cst_24 = arith.constant dense<0.000000e+00> : vector<128x784xf32>
    %33 = tpu.matmul %31, %32, %cst_24 {dimension_numbers = #tpu.dot_dimension_numbers<[1], [0], [0], [1], [0, 0, 1, 1], [], []>} : vector<128x400xbf16>, vector<400x784xbf16>, vector<128x784xf32> -> vector<128x784xf32>
    %c0_25 = arith.constant 0 : index
    %c0_26 = arith.constant 0 : index
    %34 = vector.load %arg10[%c0_25, %c0_26] : memref<1x784xf32, #tpu.memory_space<vmem>>, vector<1x784xf32>
    %35 = vector.broadcast %34 : vector<1x784xf32> to vector<128x784xf32>
    %36 = arith.addf %33, %35 : vector<128x784xf32>
    %37 = arith.negf %36 : vector<128x784xf32>
    %38 = math.exp %37 : vector<128x784xf32>
    %cst_27 = arith.constant 1.000000e+00 : f32
    %39 = vector.broadcast %cst_27 : f32 to vector<128x784xf32>
    %40 = arith.addf %39, %38 : vector<128x784xf32>
    %41 = arith.divf %39, %40 : vector<128x784xf32>
    %c0_28 = arith.constant 0 : index
    %c0_29 = arith.constant 0 : index
    %42 = vector.load %arg11[%c0_28, %c0_29] : memref<128x784xf32, #tpu.memory_space<vmem>>, vector<128x784xf32>
    tpu.vector_store %arg11[%c0_28, %c0_29], %41 {strides = array<i32>} : memref<128x784xf32, #tpu.memory_space<vmem>>, vector<128x784xf32>,
    return
  }
  func.func @transform_0(%arg0: i32) -> (i32, i32) {
    %c0_i32 = arith.constant 0 : i32
    %c0_i32_0 = arith.constant 0 : i32
    return %arg0, %c0_i32 : i32, i32
  }
  func.func @transform_1(%arg0: i32) -> (i32, i32) {
    %c0_i32 = arith.constant 0 : i32
    %c0_i32_0 = arith.constant 0 : i32
    return %arg0, %c0_i32 : i32, i32
  }
  func.func @transform_2(%arg0: i32) -> (i32, i32) {
    %c0_i32 = arith.constant 0 : i32
    %c0_i32_0 = arith.constant 0 : i32
    %c0_i32_1 = arith.constant 0 : i32
    return %c0_i32, %c0_i32_0 : i32, i32
  }
  func.func @transform_3(%arg0: i32) -> (i32, i32) {
    %c0_i32 = arith.constant 0 : i32
    %c0_i32_0 = arith.constant 0 : i32
    %c0_i32_1 = arith.constant 0 : i32
    return %c0_i32, %c0_i32_0 : i32, i32
  }
  func.func @transform_4(%arg0: i32) -> (i32, i32) {
    %c0_i32 = arith.constant 0 : i32
    %c0_i32_0 = arith.constant 0 : i32
    %c0_i32_1 = arith.constant 0 : i32
    return %c0_i32, %c0_i32_0 : i32, i32
  }
  func.func @transform_5(%arg0: i32) -> (i32, i32) {
    %c0_i32 = arith.constant 0 : i32
    %c0_i32_0 = arith.constant 0 : i32
    %c0_i32_1 = arith.constant 0 : i32
    return %c0_i32, %c0_i32_0 : i32, i32
  }
  func.func @transform_6(%arg0: i32) -> (i32, i32) {
    %c0_i32 = arith.constant 0 : i32
    %c0_i32_0 = arith.constant 0 : i32
    %c0_i32_1 = arith.constant 0 : i32
    return %c0_i32, %c0_i32_0 : i32, i32
  }
  func.func @transform_7(%arg0: i32) -> (i32, i32) {
    %c0_i32 = arith.constant 0 : i32
    %c0_i32_0 = arith.constant 0 : i32
    %c0_i32_1 = arith.constant 0 : i32
    return %c0_i32, %c0_i32_0 : i32, i32
  }
  func.func @transform_8(%arg0: i32) -> (i32, i32) {
    %c0_i32 = arith.constant 0 : i32
    %c0_i32_0 = arith.constant 0 : i32
    %c0_i32_1 = arith.constant 0 : i32
    return %c0_i32, %c0_i32_0 : i32, i32
  }
  func.func @transform_9(%arg0: i32) -> (i32, i32) {
    %c0_i32 = arith.constant 0 : i32
    %c0_i32_0 = arith.constant 0 : i32
    %c0_i32_1 = arith.constant 0 : i32
    return %c0_i32, %c0_i32_0 : i32, i32
  }
  func.func @transform_10(%arg0: i32) -> (i32, i32) {
    %c0_i32 = arith.constant 0 : i32
    %c0_i32_0 = arith.constant 0 : i32
    return %arg0, %c0_i32 : i32, i32
  }
  func.func @transform_11(%arg0: i32) -> (i32, i32) {
    %c0_i32 = arith.constant 0 : i32
    %c0_i32_0 = arith.constant 0 : i32
    return %arg0, %c0_i32 : i32, i32
  }
}

</mosaic_0001>

<llo_original>
// kernel: tpu_custom_call.1
$region0: #{tpu_custom_call.1}
  #allocation0 [shape = 'u32[]', space=smem, size = 0x4, offset = 0x4, fixed_abs, tag = 'smem constant byte address 0x4 - core index']
  #allocation1 [shape = 'u32[144,128]{1,0:T(1,128)}', space=vmem, size = 0x12000, scoped, tag = 'internal scratch']
  %s0 = inlined_call_operand.vmem [shape: bf16[384,784], index: 0, kind: input, shape index: {}]
  %s1 = inlined_call_operand.vmem [shape: f32[384,128], index: 1, kind: input, shape index: {}]
  %s2 = inlined_call_operand.vmem [shape: bf16[784,400], index: 2, kind: input, shape index: {}]
  %s3 = inlined_call_operand.vmem [shape: f32[1,400], index: 3, kind: input, shape index: {}]
  %s4 = inlined_call_operand.vmem [shape: bf16[400,256], index: 4, kind: input, shape index: {}]
  %s5 = inlined_call_operand.vmem [shape: f32[1,256], index: 5, kind: input, shape index: {}]
  %s6 = inlined_call_operand.vmem [shape: bf16[128,400], index: 6, kind: input, shape index: {}]
  %s7 = inlined_call_operand.vmem [shape: f32[1,400], index: 7, kind: input, shape index: {}]
  %s8 = inlined_call_operand.vmem [shape: bf16[400,784], index: 8, kind: input, shape index: {}]
  %s9 = inlined_call_operand.vmem [shape: f32[1,784], index: 9, kind: input, shape index: {}]
  %s10 = inlined_call_operand.vmem [shape: f32[384,784], index: 10, kind: output, shape index: {0}]
  %s11 = inlined_call_operand.hbm [shape: f32[384,256], index: 11, kind: output, shape index: {1}]
  %12 = xla_tuple %s10, %s11
  %s13 = sld [smem:[#allocation0]]
  $region81: #{tpu_custom_call.1} parent=0
    _
  %s15 = ssub.s32 1, %s13
  %s16 = scalar_select 0, %s15, %s13
  $region1: #{tpu_custom_call.1} parent=0
    #allocation2 [shape = 'u8[262144]{0}', space=vmem, size = 0x40000, scoped, tag = 'output window, operand 1']
    #allocation3 [shape = 's32[2]{0}', space=sflag, size = 0x8, scoped, tag = 'scoped memory for tpu_custom_call.1']
    %17 = vsyncpa [#allocation3], 0
    %s18 = scalar_lea.sflag [#allocation3], 1
    %19 = vsyncpa %s18, 0
    loop: start=0, step=1, limit=5
    $region2: #{tpu_custom_call.1} parent=1 // loop_pre_header
      _
    $region3: #{tpu_custom_call.1} parent=1 // loop_header
      %s21 = sphi 0, %s25
      %p22 = scmp.ge.s32.totalorder %s21, 5
      %s31 = sphi 0, %s33
      %s34 = sphi 0, %s31
      %s35 = sphi 0, %s34
      %s51 = sphi 0, %s35
      %s57 = sphi 0, %s59
      %s60 = sphi 0, %s57
      %s61 = sphi 0, %s60
      %s77 = sphi 0, %s61
      %s81 = sphi 0, %s81
      %s83 = sphi 0, %s81
      %s84 = sphi 0, %s83
      %s98 = sphi 0, %s84
      %s102 = sphi 0, %s102
      %s104 = sphi 0, %s102
      %s105 = sphi 0, %s104
      %s119 = sphi 0, %s105
      %s123 = sphi 0, %s123
      %s125 = sphi 0, %s123
      %s126 = sphi 0, %s125
      %s140 = sphi 0, %s126
      %s144 = sphi 0, %s144
      %s146 = sphi 0, %s144
      %s147 = sphi 0, %s146
      %s161 = sphi 0, %s147
      %s165 = sphi 0, %s165
      %s167 = sphi 0, %s165
      %s168 = sphi 0, %s167
      %s182 = sphi 0, %s168
      %s186 = sphi 0, %s186
      %s188 = sphi 0, %s186
      %s189 = sphi 0, %s188
      %s203 = sphi 0, %s189
      %s207 = sphi 0, %s207
      %s209 = sphi 0, %s207
      %s210 = sphi 0, %s209
      %s224 = sphi 0, %s210
      %s228 = sphi 0, %s228
      %s230 = sphi 0, %s228
      %s231 = sphi 0, %s230
      %s245 = sphi 0, %s231
      %s251 = sphi 0, %s253
      %s254 = sphi 0, %s251
      %s255 = sphi 0, %s254
      %s271 = sphi 0, %s255
      %s277 = sphi 0, %s279
      %s280 = sphi 0, %s277
      %s281 = sphi 0, %s280
      %s297 = sphi 0, %s281
    $region4: #{tpu_custom_call.1} parent=1 // loop_header_branch
      %24 = sbr.rel (%p22) target = $region8
    $region5: #{tpu_custom_call.1} parent=1 // loop_body
      %s26 = ssub.s32 %s21, 1
      %s27 = ssub.s32 %s21, 2
      %s28 = sadd.s32 %s21, 1
      %s29 = ssub.s32 %s21, %s28
      %p30 = scmp.eq.s32.totalorder %s29, 0
      %s32 = sadd.s32 %s31, 1
      %s33 = scalar_select %p30, %s31, %s32
      %p36 = pneg %p30
      %p37 = scmp.eq.s32.totalorder %s21, 2
      %p38 = por %p36, %p37
      %p39 = scmp.ne.s32.totalorder %s31, %s34
      %p40 = scmp.eq.s32.totalorder %s21, 0
      %p41 = por %p39, %p40
      %p42 = scmp.ne.s32.totalorder %s31, %s34
      %p43 = scmp.eq.s32.totalorder %s26, 2
      %p44 = por %p42, %p43
      %p45 = scmp.ne.s32.totalorder %s34, %s35
      %p46 = scmp.eq.s32.totalorder %s26, 0
      %p47 = por %p45, %p46
      %p48 = scmp.ne.s32.totalorder %s34, %s35
      %p49 = scmp.eq.s32.totalorder %s27, 2
      %p50 = por %p48, %p49
      %p52 = scmp.ne.s32.totalorder %s35, %s51
      %p53 = scmp.eq.s32.totalorder %s27, 0
      %p54 = por %p52, %p53
      %s55 = ssub.s32 %s21, %s28
      %p56 = scmp.eq.s32.totalorder %s55, 0
      %s58 = sadd.s32 %s57, 1
      %s59 = scalar_select %p56, %s57, %s58
      %p62 = pneg %p56
      %p63 = scmp.eq.s32.totalorder %s21, 2
      %p64 = por %p62, %p63
      %p65 = scmp.ne.s32.totalorder %s57, %s60
      %p66 = scmp.eq.s32.totalorder %s21, 0
      %p67 = por %p65, %p66
      %p68 = scmp.ne.s32.totalorder %s57, %s60
      %p69 = scmp.eq.s32.totalorder %s26, 2
      %p70 = por %p68, %p69
      %p71 = scmp.ne.s32.totalorder %s60, %s61
      %p72 = scmp.eq.s32.totalorder %s26, 0
      %p73 = por %p71, %p72
      %p74 = scmp.ne.s32.totalorder %s60, %s61
      %p75 = scmp.eq.s32.totalorder %s27, 2
      %p76 = por %p74, %p75
      %p78 = scmp.ne.s32.totalorder %s61, %s77
      %p79 = scmp.eq.s32.totalorder %s27, 0
      %p80 = por %p78, %p79
      %s82 = sadd.s32 %s81, 1
      %p85 = scmp.eq.s32.totalorder %s21, 2
      %p86 = scmp.ne.s32.totalorder %s81, %s83
      %p87 = scmp.eq.s32.totalorder %s21, 0
      %p88 = por %p86, %p87
      %p89 = scmp.ne.s32.totalorder %s81, %s83
      %p90 = scmp.eq.s32.totalorder %s26, 2
      %p91 = por %p89, %p90
      %p92 = scmp.ne.s32.totalorder %s83, %s84
      %p93 = scmp.eq.s32.totalorder %s26, 0
      %p94 = por %p92, %p93
      %p95 = scmp.ne.s32.totalorder %s83, %s84
      %p96 = scmp.eq.s32.totalorder %s27, 2
      %p97 = por %p95, %p96
      %p99 = scmp.ne.s32.totalorder %s84, %s98
      %p100 = scmp.eq.s32.totalorder %s27, 0
      %p101 = por %p99, %p100
      %s103 = sadd.s32 %s102, 1
      %p106 = scmp.eq.s32.totalorder %s21, 2
      %p107 = scmp.ne.s32.totalorder %s102, %s104
      %p108 = scmp.eq.s32.totalorder %s21, 0
      %p109 = por %p107, %p108
      %p110 = scmp.ne.s32.totalorder %s102, %s104
      %p111 = scmp.eq.s32.totalorder %s26, 2
      %p112 = por %p110, %p111
      %p113 = scmp.ne.s32.totalorder %s104, %s105
      %p114 = scmp.eq.s32.totalorder %s26, 0
      %p115 = por %p113, %p114
      %p116 = scmp.ne.s32.totalorder %s104, %s105
      %p117 = scmp.eq.s32.totalorder %s27, 2
      %p118 = por %p116, %p117
      %p120 = scmp.ne.s32.totalorder %s105, %s119
      %p121 = scmp.eq.s32.totalorder %s27, 0
      %p122 = por %p120, %p121
      %s124 = sadd.s32 %s123, 1
      %p127 = scmp.eq.s32.totalorder %s21, 2
      %p128 = scmp.ne.s32.totalorder %s123, %s125
      %p129 = scmp.eq.s32.totalorder %s21, 0
      %p130 = por %p128, %p129
      %p131 = scmp.ne.s32.totalorder %s123, %s125
      %p132 = scmp.eq.s32.totalorder %s26, 2
      %p133 = por %p131, %p132
      %p134 = scmp.ne.s32.totalorder %s125, %s126
      %p135 = scmp.eq.s32.totalorder %s26, 0
      %p136 = por %p134, %p135
      %p137 = scmp.ne.s32.totalorder %s125, %s126
      %p138 = scmp.eq.s32.totalorder %s27, 2
      %p139 = por %p137, %p138
      %p141 = scmp.ne.s32.totalorder %s126, %s140
      %p142 = scmp.eq.s32.totalorder %s27, 0
      %p143 = por %p141, %p142
      %s145 = sadd.s32 %s144, 1
      %p148 = scmp.eq.s32.totalorder %s21, 2
      %p149 = scmp.ne.s32.totalorder %s144, %s146
      %p150 = scmp.eq.s32.totalorder %s21, 0
      %p151 = por %p149, %p150
      %p152 = scmp.ne.s32.totalorder %s144, %s146
      %p153 = scmp.eq.s32.totalorder %s26, 2
      %p154 = por %p152, %p153
      %p155 = scmp.ne.s32.totalorder %s146, %s147
      %p156 = scmp.eq.s32.totalorder %s26, 0
      %p157 = por %p155, %p156
      %p158 = scmp.ne.s32.totalorder %s146, %s147
      %p159 = scmp.eq.s32.totalorder %s27, 2
      %p160 = por %p158, %p159
      %p162 = scmp.ne.s32.totalorder %s147, %s161
      %p163 = scmp.eq.s32.totalorder %s27, 0
      %p164 = por %p162, %p163
      %s166 = sadd.s32 %s165, 1
      %p169 = scmp.eq.s32.totalorder %s21, 2
      %p170 = scmp.ne.s32.totalorder %s165, %s167
      %p171 = scmp.eq.s32.totalorder %s21, 0
      %p172 = por %p170, %p171
      %p173 = scmp.ne.s32.totalorder %s165, %s167
      %p174 = scmp.eq.s32.totalorder %s26, 2
      %p175 = por %p173, %p174
      %p176 = scmp.ne.s32.totalorder %s167, %s168
      %p177 = scmp.eq.s32.totalorder %s26, 0
      %p178 = por %p176, %p177
      %p179 = scmp.ne.s32.totalorder %s167, %s168
      %p180 = scmp.eq.s32.totalorder %s27, 2
      %p181 = por %p179, %p180
      %p183 = scmp.ne.s32.totalorder %s168, %s182
      %p184 = scmp.eq.s32.totalorder %s27, 0
      %p185 = por %p183, %p184
      %s187 = sadd.s32 %s186, 1
      %p190 = scmp.eq.s32.totalorder %s21, 2
      %p191 = scmp.ne.s32.totalorder %s186, %s188
      %p192 = scmp.eq.s32.totalorder %s21, 0
      %p193 = por %p191, %p192
      %p194 = scmp.ne.s32.totalorder %s186, %s188
      %p195 = scmp.eq.s32.totalorder %s26, 2
      %p196 = por %p194, %p195
      %p197 = scmp.ne.s32.totalorder %s188, %s189
      %p198 = scmp.eq.s32.totalorder %s26, 0
      %p199 = por %p197, %p198
      %p200 = scmp.ne.s32.totalorder %s188, %s189
      %p201 = scmp.eq.s32.totalorder %s27, 2
      %p202 = por %p200, %p201
      %p204 = scmp.ne.s32.totalorder %s189, %s203
      %p205 = scmp.eq.s32.totalorder %s27, 0
      %p206 = por %p204, %p205
      %s208 = sadd.s32 %s207, 1
      %p211 = scmp.eq.s32.totalorder %s21, 2
      %p212 = scmp.ne.s32.totalorder %s207, %s209
      %p213 = scmp.eq.s32.totalorder %s21, 0
      %p214 = por %p212, %p213
      %p215 = scmp.ne.s32.totalorder %s207, %s209
      %p216 = scmp.eq.s32.totalorder %s26, 2
      %p217 = por %p215, %p216
      %p218 = scmp.ne.s32.totalorder %s209, %s210
      %p219 = scmp.eq.s32.totalorder %s26, 0
      %p220 = por %p218, %p219
      %p221 = scmp.ne.s32.totalorder %s209, %s210
      %p222 = scmp.eq.s32.totalorder %s27, 2
      %p223 = por %p221, %p222
      %p225 = scmp.ne.s32.totalorder %s210, %s224
      %p226 = scmp.eq.s32.totalorder %s27, 0
      %p227 = por %p225, %p226
      %s229 = sadd.s32 %s228, 1
      %p232 = scmp.eq.s32.totalorder %s21, 2
      %p233 = scmp.ne.s32.totalorder %s228, %s230
      %p234 = scmp.eq.s32.totalorder %s21, 0
      %p235 = por %p233, %p234
      %p236 = scmp.ne.s32.totalorder %s228, %s230
      %p237 = scmp.eq.s32.totalorder %s26, 2
      %p238 = por %p236, %p237
      %p239 = scmp.ne.s32.totalorder %s230, %s231
      %p240 = scmp.eq.s32.totalorder %s26, 0
      %p241 = por %p239, %p240
      %p242 = scmp.ne.s32.totalorder %s230, %s231
      %p243 = scmp.eq.s32.totalorder %s27, 2
      %p244 = por %p242, %p243
      %p246 = scmp.ne.s32.totalorder %s231, %s245
      %p247 = scmp.eq.s32.totalorder %s27, 0
      %p248 = por %p246, %p247
      %s249 = ssub.s32 %s21, %s28
      %p250 = scmp.eq.s32.totalorder %s249, 0
      %s252 = sadd.s32 %s251, 1
      %s253 = scalar_select %p250, %s251, %s252
      %p256 = pneg %p250
      %p257 = scmp.eq.s32.totalorder %s21, 2
      %p258 = por %p256, %p257
      %p259 = scmp.ne.s32.totalorder %s251, %s254
      %p260 = scmp.eq.s32.totalorder %s21, 0
      %p261 = por %p259, %p260
      %p262 = scmp.ne.s32.totalorder %s251, %s254
      %p263 = scmp.eq.s32.totalorder %s26, 2
      %p264 = por %p262, %p263
      %p265 = scmp.ne.s32.totalorder %s254, %s255
      %p266 = scmp.eq.s32.totalorder %s26, 0
      %p267 = por %p265, %p266
      %p268 = scmp.ne.s32.totalorder %s254, %s255
      %p269 = scmp.eq.s32.totalorder %s27, 2
      %p270 = por %p268, %p269
      %p272 = scmp.ne.s32.totalorder %s255, %s271
      %p273 = scmp.eq.s32.totalorder %s27, 0
      %p274 = por %p272, %p273
      %s275 = ssub.s32 %s21, %s28
      %p276 = scmp.eq.s32.totalorder %s275, 0
      %s278 = sadd.s32 %s277, 1
      %s279 = scalar_select %p276, %s277, %s278
      %p282 = pneg %p276
      %p283 = scmp.eq.s32.totalorder %s21, 2
      %p284 = por %p282, %p283
      %p285 = scmp.ne.s32.totalorder %s277, %s280
      %p286 = scmp.eq.s32.totalorder %s21, 0
      %p287 = por %p285, %p286
      %p288 = scmp.ne.s32.totalorder %s277, %s280
      %p289 = scmp.eq.s32.totalorder %s26, 2
      %p290 = por %p288, %p289
      %p291 = scmp.ne.s32.totalorder %s280, %s281
      %p292 = scmp.eq.s32.totalorder %s26, 0
      %p293 = por %p291, %p292
      %p294 = scmp.ne.s32.totalorder %s280, %s281
      %p295 = scmp.eq.s32.totalorder %s27, 2
      %p296 = por %p294, %p295
      %p298 = scmp.ne.s32.totalorder %s281, %s297
      %p299 = scmp.eq.s32.totalorder %s27, 0
      %p300 = por %p298, %p299
      %p301 = scmp.le.s32.totalorder 1, %s21
      %p302 = scmp.lt.s32.totalorder %s21, 4
      %p303 = pnand %p301, %p302
      %p304 = pneg %p303
      // Predicated region
      $region9: #{tpu_custom_call.1} parent=5 // pred_check
        _
      $region10: #{tpu_custom_call.1} parent=5 // pred_check_branch
        %306 = sbr.rel (%p303) target = $region12
      $region11: #{tpu_custom_call.1} parent=5 // pred_region
        %s307 = ssub.s32 %s21, 1
        // Predicated region
        $region13: #{tpu_custom_call.1} parent=11 // pred_check
          %p308 = pneg %p94
        $region14: #{tpu_custom_call.1} parent=11 // pred_check_branch
          %310 = sbr.rel (%p308) target = $region16
        $region15: #{tpu_custom_call.1} parent=11 // pred_region
          _
        $region16: #{tpu_custom_call.1} parent=11 // pred_fallthru
          _
        // Predicated region
        $region17: #{tpu_custom_call.1} parent=11 // pred_check
          %p311 = pneg %p115
        $region18: #{tpu_custom_call.1} parent=11 // pred_check_branch
          %313 = sbr.rel (%p311) target = $region20
        $region19: #{tpu_custom_call.1} parent=11 // pred_region
          _
        $region20: #{tpu_custom_call.1} parent=11 // pred_fallthru
          _
        // Predicated region
        $region21: #{tpu_custom_call.1} parent=11 // pred_check
          %p314 = pneg %p136
        $region22: #{tpu_custom_call.1} parent=11 // pred_check_branch
          %316 = sbr.rel (%p314) target = $region24
        $region23: #{tpu_custom_call.1} parent=11 // pred_region
          _
        $region24: #{tpu_custom_call.1} parent=11 // pred_fallthru
          _
        // Predicated region
        $region25: #{tpu_custom_call.1} parent=11 // pred_check
          %p317 = pneg %p157
        $region26: #{tpu_custom_call.1} parent=11 // pred_check_branch
          %319 = sbr.rel (%p317) target = $region28
        $region27: #{tpu_custom_call.1} parent=11 // pred_region
          _
        $region28: #{tpu_custom_call.1} parent=11 // pred_fallthru
          _
        // Predicated region
        $region29: #{tpu_custom_call.1} parent=11 // pred_check
          %p320 = pneg %p178
        $region30: #{tpu_custom_call.1} parent=11 // pred_check_branch
          %322 = sbr.rel (%p320) target = $region32
        $region31: #{tpu_custom_call.1} parent=11 // pred_region
          _
        $region32: #{tpu_custom_call.1} parent=11 // pred_fallthru
          _
        // Predicated region
        $region33: #{tpu_custom_call.1} parent=11 // pred_check
          %p323 = pneg %p199
        $region34: #{tpu_custom_call.1} parent=11 // pred_check_branch
          %325 = sbr.rel (%p323) target = $region36
        $region35: #{tpu_custom_call.1} parent=11 // pred_region
          _
        $region36: #{tpu_custom_call.1} parent=11 // pred_fallthru
          _
        // Predicated region
        $region37: #{tpu_custom_call.1} parent=11 // pred_check
          %p326 = pneg %p220
        $region38: #{tpu_custom_call.1} parent=11 // pred_check_branch
          %328 = sbr.rel (%p326) target = $region40
        $region39: #{tpu_custom_call.1} parent=11 // pred_region
          _
        $region40: #{tpu_custom_call.1} parent=11 // pred_fallthru
          _
        // Predicated region
        $region41: #{tpu_custom_call.1} parent=11 // pred_check
          %p329 = pneg %p241
        $region42: #{tpu_custom_call.1} parent=11 // pred_check_branch
          %331 = sbr.rel (%p329) target = $region44
        $region43: #{tpu_custom_call.1} parent=11 // pred_region
          _
        $region44: #{tpu_custom_call.1} parent=11 // pred_fallthru
          _
      $region12: #{tpu_custom_call.1} parent=5 // pred_fallthru
        _
      %p332 = scmp.lt.s32.totalorder %s21, 3
      // Predicated region
      $region45: #{tpu_custom_call.1} parent=5 // pred_check
        %p333 = pneg %p332
      $region46: #{tpu_custom_call.1} parent=5 // pred_check_branch
        %335 = sbr.rel (%p333) target = $region48
      $region47: #{tpu_custom_call.1} parent=5 // pred_region
        // Predicated region
        $region49: #{tpu_custom_call.1} parent=47 // pred_check
          %p336 = pneg %p41
        $region50: #{tpu_custom_call.1} parent=47 // pred_check_branch
          %338 = sbr.rel (%p336) target = $region52
        $region51: #{tpu_custom_call.1} parent=47 // pred_region
          %s339 = smul.u32 16, %s21
          %p340 = scmp.lt.s32.totalorder %s339, 47
          %s341 = scalar_select %p340, %s339, 47
          %s342 = smul.addr %s341, 7
          %s343 = smul.addr %s342, 4
          %s344 = scalar_lea.vmem %s0, %s343
          %s345 = smul.u32 16, %s21
        $region52: #{tpu_custom_call.1} parent=47 // pred_fallthru
          _
        // Predicated region
        $region53: #{tpu_custom_call.1} parent=47 // pred_check
          %p346 = pneg %p67
        $region54: #{tpu_custom_call.1} parent=47 // pred_check_branch
          %348 = sbr.rel (%p346) target = $region56
        $region55: #{tpu_custom_call.1} parent=47 // pred_region
          %s349 = smul.u32 16, %s21
          %p350 = scmp.lt.s32.totalorder %s349, 47
          %s351 = scalar_select %p350, %s349, 47
          %s352 = smul.addr %s351, 8
          %s353 = scalar_lea.vmem %s1, %s352
          %s354 = smul.u32 16, %s21
        $region56: #{tpu_custom_call.1} parent=47 // pred_fallthru
          _
      $region48: #{tpu_custom_call.1} parent=5 // pred_fallthru
        _
      %p355 = scmp.le.s32.totalorder 1, %s21
      %p356 = scmp.lt.s32.totalorder %s21, 4
      %p357 = pnand %p355, %p356
      %p358 = pneg %p357
      // Predicated region
      $region57: #{tpu_custom_call.1} parent=5 // pred_check
        _
      $region58: #{tpu_custom_call.1} parent=5 // pred_check_branch
        %360 = sbr.rel (%p357) target = $region60
      $region59: #{tpu_custom_call.1} parent=5 // pred_region
        %s361 = ssub.s32 %s21, 1
        %s362 = smul.u32 16, %s26
        %p363 = scmp.lt.s32.totalorder %s362, 47
        %s364 = scalar_select %p363, %s362, 47
        %s365 = smul.addr %s364, 7
        %s366 = smul.addr %s365, 4
        %s367 = scalar_lea.vmem %s0, %s366
        %p368 = pneg %p47
        %p369 = pneg %p44
        %s370 = smul.u32 16, %s26
        %p371 = scmp.lt.s32.totalorder %s370, 47
        %s372 = scalar_select %p371, %s370, 47
        %s373 = smul.addr %s372, 8
        %s374 = scalar_lea.vmem %s1, %s373
        %p375 = pneg %p73
        %p376 = pneg %p70
        %p377 = pneg %p94
        %p378 = pneg %p91
        %p379 = pneg %p115
        %p380 = pneg %p112
        %p381 = pneg %p136
        %p382 = pneg %p133
        %p383 = pneg %p157
        %p384 = pneg %p154
        %p385 = pneg %p178
        %p386 = pneg %p175
        %p387 = pneg %p199
        %p388 = pneg %p196
        %p389 = pneg %p220
        %p390 = pneg %p217
        %p391 = pneg %p241
        %p392 = pneg %p238
        %p393 = pneg %p267
        %p394 = pneg %p264
        %s395 = smul.u32 16, %s26
        %p396 = scmp.lt.s32.totalorder %s395, 47
        %s397 = scalar_select %p396, %s395, 47
        %s398 = smul.addr %s397, 7
        %s399 = smul.addr %s398, 8
        %s400 = scalar_lea.vmem %s10, %s399
        %p401 = pneg %p293
        %p402 = pneg %p290
        %s403 = sand.u32 %s280, 1
        %s404 = scalar_lea.sflag [#allocation3], %s403
        %s405 = sand.u32 %s280, 1
        %s406 = smul.addr %s405, 256
        %s407 = scalar_lea.vmem [#allocation2], %s406
        %s408 = smul.u32 16, %s26
        %p409 = scmp.lt.s32.totalorder %s408, 47
        %s410 = scalar_select %p409, %s408, 47
        %s411 = smul.addr %s410, 7
        %s412 = smul.addr %s411, 4
        %s413 = scalar_lea.vmem %s0, %s412
        %s414 = smul.u32 16, %s26
        %s415 = smul.u32 16, %s26
        %p416 = scmp.lt.s32.totalorder %s415, 47
        %s417 = scalar_select %p416, %s415, 47
        %s418 = smul.addr %s417, 8
        %s419 = scalar_lea.vmem %s1, %s418
        %s420 = smul.u32 16, %s26
        %s421 = smul.u32 16, %s26
        %p422 = scmp.lt.s32.totalorder %s421, 47
        %s423 = scalar_select %p422, %s421, 47
        %s424 = smul.addr %s423, 7
        %s425 = smul.addr %s424, 8
        %s426 = scalar_lea.vmem %s10, %s425
        %s427 = smul.u32 16, %s26
        %s428 = smul.u32 16, %s26
        %v430 = vld [vmem:[%s413] sm:$0xff]
        %v431 = vld [vmem:[%s413 + $0x8] sm:$0xff]
        %v432 = vld [vmem:[%s413 + $0x10] sm:$0xff]
        %v433 = vld [vmem:[%s413 + $0x18] sm:$0xf]
        %v434 = vld [vmem:[%s413 + $0x1c] sm:$0xff]
        %v435 = vld [vmem:[%s413 + $0x24] sm:$0xff]
        %v436 = vld [vmem:[%s413 + $0x2c] sm:$0xff]
        %v437 = vld [vmem:[%s413 + $0x34] sm:$0xf]
        %v438 = vld [vmem:[%s413 + $0x38] sm:$0xff]
        %v439 = vld [vmem:[%s413 + $0x40] sm:$0xff]
        %v440 = vld [vmem:[%s413 + $0x48] sm:$0xff]
        %v441 = vld [vmem:[%s413 + $0x50] sm:$0xf]
        %v442 = vld [vmem:[%s413 + $0x54] sm:$0xff]
        %v443 = vld [vmem:[%s413 + $0x5c] sm:$0xff]
        %v444 = vld [vmem:[%s413 + $0x64] sm:$0xff]
        %v445 = vld [vmem:[%s413 + $0x6c] sm:$0xf]
        %v446 = vld [vmem:[%s413 + $0x70] sm:$0xff]
        %v447 = vld [vmem:[%s413 + $0x78] sm:$0xff]
        %v448 = vld [vmem:[%s413 + $0x80] sm:$0xff]
        %v449 = vld [vmem:[%s413 + $0x88] sm:$0xf]
        %v450 = vld [vmem:[%s413 + $0x8c] sm:$0xff]
        %v451 = vld [vmem:[%s413 + $0x94] sm:$0xff]
        %v452 = vld [vmem:[%s413 + $0x9c] sm:$0xff]
        %v453 = vld [vmem:[%s413 + $0xa4] sm:$0xf]
        %v454 = vld [vmem:[%s413 + $0xa8] sm:$0xff]
        %v455 = vld [vmem:[%s413 + $0xb0] sm:$0xff]
        %v456 = vld [vmem:[%s413 + $0xb8] sm:$0xff]
        %v457 = vld [vmem:[%s413 + $0xc0] sm:$0xf]
        %v458 = vld [vmem:[%s413 + $0xc4] sm:$0xff]
        %v459 = vld [vmem:[%s413 + $0xcc] sm:$0xff]
        %v460 = vld [vmem:[%s413 + $0xd4] sm:$0xff]
        %v461 = vld [vmem:[%s413 + $0xdc] sm:$0xf]
        %v462 = vld [vmem:[%s413 + $0xe0] sm:$0xff]
        %v463 = vld [vmem:[%s413 + $0xe8] sm:$0xff]
        %v464 = vld [vmem:[%s413 + $0xf0] sm:$0xff]
        %v465 = vld [vmem:[%s413 + $0xf8] sm:$0xf]
        %v466 = vld [vmem:[%s413 + $0xfc] sm:$0xff]
        %v467 = vld [vmem:[%s413 + $0x104] sm:$0xff]
        %v468 = vld [vmem:[%s413 + $0x10c] sm:$0xff]
        %v469 = vld [vmem:[%s413 + $0x114] sm:$0xf]
        %v470 = vld [vmem:[%s413 + $0x118] sm:$0xff]
        %v471 = vld [vmem:[%s413 + $0x120] sm:$0xff]
        %v472 = vld [vmem:[%s413 + $0x128] sm:$0xff]
        %v473 = vld [vmem:[%s413 + $0x130] sm:$0xf]
        %v474 = vld [vmem:[%s413 + $0x134] sm:$0xff]
        %v475 = vld [vmem:[%s413 + $0x13c] sm:$0xff]
        %v476 = vld [vmem:[%s413 + $0x144] sm:$0xff]
        %v477 = vld [vmem:[%s413 + $0x14c] sm:$0xf]
        %v478 = vld [vmem:[%s413 + $0x150] sm:$0xff]
        %v479 = vld [vmem:[%s413 + $0x158] sm:$0xff]
        %v480 = vld [vmem:[%s413 + $0x160] sm:$0xff]
        %v481 = vld [vmem:[%s413 + $0x168] sm:$0xf]
        %v482 = vld [vmem:[%s413 + $0x16c] sm:$0xff]
        %v483 = vld [vmem:[%s413 + $0x174] sm:$0xff]
        %v484 = vld [vmem:[%s413 + $0x17c] sm:$0xff]
        %v485 = vld [vmem:[%s413 + $0x184] sm:$0xf]
        %v486 = vld [vmem:[%s413 + $0x188] sm:$0xff]
        %v487 = vld [vmem:[%s413 + $0x190] sm:$0xff]
        %v488 = vld [vmem:[%s413 + $0x198] sm:$0xff]
        %v489 = vld [vmem:[%s413 + $0x1a0] sm:$0xf]
        %v490 = vld [vmem:[%s413 + $0x1a4] sm:$0xff]
        %v491 = vld [vmem:[%s413 + $0x1ac] sm:$0xff]
        %v492 = vld [vmem:[%s413 + $0x1b4] sm:$0xff]
        %v493 = vld [vmem:[%s413 + $0x1bc] sm:$0xf]
        %v494 = vld [vmem:[%s2] sm:$0xff]
        %v495 = vld [vmem:[%s2 + $0x8] sm:$0xff]
        %v496 = vld [vmem:[%s2 + $0x10] sm:$0xff]
        %v497 = vld [vmem:[%s2 + $0x18] sm:$0xff]
        %v498 = vld [vmem:[%s2 + $0x20] sm:$0xff]
        %v499 = vld [vmem:[%s2 + $0x28] sm:$0xff]
        %v500 = vld [vmem:[%s2 + $0x30] sm:$0xff]
        %v501 = vld [vmem:[%s2 + $0x38] sm:$0xff]
        %v502 = vld [vmem:[%s2 + $0x40] sm:$0xff]
        %v503 = vld [vmem:[%s2 + $0x48] sm:$0xff]
        %v504 = vld [vmem:[%s2 + $0x50] sm:$0xff]
        %v505 = vld [vmem:[%s2 + $0x58] sm:$0xff]
        %v506 = vld [vmem:[%s2 + $0x60] sm:$0xff]
        %v507 = vld [vmem:[%s2 + $0x68] sm:$0xff]
        %v508 = vld [vmem:[%s2 + $0x70] sm:$0xff]
        %v509 = vld [vmem:[%s2 + $0x78] sm:$0xff]
        %v510 = vld [vmem:[%s2 + $0x80] sm:$0xff]
        %v511 = vld [vmem:[%s2 + $0x88] sm:$0xff]
        %v512 = vld [vmem:[%s2 + $0x90] sm:$0xff]
        %v513 = vld [vmem:[%s2 + $0x98] sm:$0xff]
        %v514 = vld [vmem:[%s2 + $0xa0] sm:$0xff]
        %v515 = vld [vmem:[%s2 + $0xa8] sm:$0xff]
        %v516 = vld [vmem:[%s2 + $0xb0] sm:$0xff]
        %v517 = vld [vmem:[%s2 + $0xb8] sm:$0xff]
        %v518 = vld [vmem:[%s2 + $0xc0] sm:$0xff]
        %v519 = vld [vmem:[%s2 + $0xc8] sm:$0xff]
        %v520 = vld [vmem:[%s2 + $0xd0] sm:$0xff]
        %v521 = vld [vmem:[%s2 + $0xd8] sm:$0xff]
        %v522 = vld [vmem:[%s2 + $0xe0] sm:$0xff]
        %v523 = vld [vmem:[%s2 + $0xe8] sm:$0xff]
        %v524 = vld [vmem:[%s2 + $0xf0] sm:$0xff]
        %v525 = vld [vmem:[%s2 + $0xf8] sm:$0xff]
        %v526 = vld [vmem:[%s2 + $0x100] sm:$0xff]
        %v527 = vld [vmem:[%s2 + $0x108] sm:$0xff]
        %v528 = vld [vmem:[%s2 + $0x110] sm:$0xff]
        %v529 = vld [vmem:[%s2 + $0x118] sm:$0xff]
        %v530 = vld [vmem:[%s2 + $0x120] sm:$0xff]
        %v531 = vld [vmem:[%s2 + $0x128] sm:$0xff]
        %v532 = vld [vmem:[%s2 + $0x130] sm:$0xff]
        %v533 = vld [vmem:[%s2 + $0x138] sm:$0xff]
        %v534 = vld [vmem:[%s2 + $0x140] sm:$0xff]
        %v535 = vld [vmem:[%s2 + $0x148] sm:$0xff]
        %v536 = vld [vmem:[%s2 + $0x150] sm:$0xff]
        %v537 = vld [vmem:[%s2 + $0x158] sm:$0xff]
        %v538 = vld [vmem:[%s2 + $0x160] sm:$0xff]
        %v539 = vld [vmem:[%s2 + $0x168] sm:$0xff]
        %v540 = vld [vmem:[%s2 + $0x170] sm:$0xff]
        %v541 = vld [vmem:[%s2 + $0x178] sm:$0xff]
        %v542 = vld [vmem:[%s2 + $0x180] sm:$0xff]
        %v543 = vld [vmem:[%s2 + $0x188] sm:$0xff]
        %v544 = vld [vmem:[%s2 + $0x190] sm:$0xff]
        %v545 = vld [vmem:[%s2 + $0x198] sm:$0xff]
        %v546 = vld [vmem:[%s2 + $0x1a0] sm:$0xff]
        %v547 = vld [vmem:[%s2 + $0x1a8] sm:$0xff]
        %v548 = vld [vmem:[%s2 + $0x1b0] sm:$0xff]
        %v549 = vld [vmem:[%s2 + $0x1b8] sm:$0xff]
        %v550 = vld [vmem:[%s2 + $0x1c0] sm:$0xff]
        %v551 = vld [vmem:[%s2 + $0x1c8] sm:$0xff]
        %v552 = vld [vmem:[%s2 + $0x1d0] sm:$0xff]
        %v553 = vld [vmem:[%s2 + $0x1d8] sm:$0xff]
        %v554 = vld [vmem:[%s2 + $0x1e0] sm:$0xff]
        %v555 = vld [vmem:[%s2 + $0x1e8] sm:$0xff]
        %v556 = vld [vmem:[%s2 + $0x1f0] sm:$0xff]
        %v557 = vld [vmem:[%s2 + $0x1f8] sm:$0xff]
        %v558 = vld [vmem:[%s2 + $0x200] sm:$0xff]
        %v559 = vld [vmem:[%s2 + $0x208] sm:$0xff]
        %v560 = vld [vmem:[%s2 + $0x210] sm:$0xff]
        %v561 = vld [vmem:[%s2 + $0x218] sm:$0xff]
        %v562 = vld [vmem:[%s2 + $0x220] sm:$0xff]
        %v563 = vld [vmem:[%s2 + $0x228] sm:$0xff]
        %v564 = vld [vmem:[%s2 + $0x230] sm:$0xff]
        %v565 = vld [vmem:[%s2 + $0x238] sm:$0xff]
        %v566 = vld [vmem:[%s2 + $0x240] sm:$0xff]
        %v567 = vld [vmem:[%s2 + $0x248] sm:$0xff]
        %v568 = vld [vmem:[%s2 + $0x250] sm:$0xff]
        %v569 = vld [vmem:[%s2 + $0x258] sm:$0xff]
        %v570 = vld [vmem:[%s2 + $0x260] sm:$0xff]
        %v571 = vld [vmem:[%s2 + $0x268] sm:$0xff]
        %v572 = vld [vmem:[%s2 + $0x270] sm:$0xff]
        %v573 = vld [vmem:[%s2 + $0x278] sm:$0xff]
        %v574 = vld [vmem:[%s2 + $0x280] sm:$0xff]
        %v575 = vld [vmem:[%s2 + $0x288] sm:$0xff]
        %v576 = vld [vmem:[%s2 + $0x290] sm:$0xff]
        %v577 = vld [vmem:[%s2 + $0x298] sm:$0xff]
        %v578 = vld [vmem:[%s2 + $0x2a0] sm:$0xff]
        %v579 = vld [vmem:[%s2 + $0x2a8] sm:$0xff]
        %v580 = vld [vmem:[%s2 + $0x2b0] sm:$0xff]
        %v581 = vld [vmem:[%s2 + $0x2b8] sm:$0xff]
        %v582 = vld [vmem:[%s2 + $0x2c0] sm:$0xff]
        %v583 = vld [vmem:[%s2 + $0x2c8] sm:$0xff]
        %v584 = vld [vmem:[%s2 + $0x2d0] sm:$0xff]
        %v585 = vld [vmem:[%s2 + $0x2d8] sm:$0xff]
        %v586 = vld [vmem:[%s2 + $0x2e0] sm:$0xff]
        %v587 = vld [vmem:[%s2 + $0x2e8] sm:$0xff]
        %v588 = vld [vmem:[%s2 + $0x2f0] sm:$0xff]
        %v589 = vld [vmem:[%s2 + $0x2f8] sm:$0xff]
        %v590 = vld [vmem:[%s2 + $0x300] sm:$0xff]
        %v591 = vld [vmem:[%s2 + $0x308] sm:$0xff]
        %v592 = vld [vmem:[%s2 + $0x310] sm:$0xff]
        %v593 = vld [vmem:[%s2 + $0x318] sm:$0xff]
        %v594 = vld [vmem:[%s2 + $0x320] sm:$0xff]
        %v595 = vld [vmem:[%s2 + $0x328] sm:$0xff]
        %v596 = vld [vmem:[%s2 + $0x330] sm:$0xff]
        %v597 = vld [vmem:[%s2 + $0x338] sm:$0xff]
        %v598 = vld [vmem:[%s2 + $0x340] sm:$0xff]
        %v599 = vld [vmem:[%s2 + $0x348] sm:$0xff]
        %v600 = vld [vmem:[%s2 + $0x350] sm:$0xff]
        %v601 = vld [vmem:[%s2 + $0x358] sm:$0xff]
        %v602 = vld [vmem:[%s2 + $0x360] sm:$0xff]
        %v603 = vld [vmem:[%s2 + $0x368] sm:$0xff]
        %v604 = vld [vmem:[%s2 + $0x370] sm:$0xff]
        %v605 = vld [vmem:[%s2 + $0x378] sm:$0xff]
        %v606 = vld [vmem:[%s2 + $0x380] sm:$0xff]
        %v607 = vld [vmem:[%s2 + $0x388] sm:$0xff]
        %v608 = vld [vmem:[%s2 + $0x390] sm:$0xff]
        %v609 = vld [vmem:[%s2 + $0x398] sm:$0xff]
        %v610 = vld [vmem:[%s2 + $0x3a0] sm:$0xff]
        %v611 = vld [vmem:[%s2 + $0x3a8] sm:$0xff]
        %v612 = vld [vmem:[%s2 + $0x3b0] sm:$0xff]
        %v613 = vld [vmem:[%s2 + $0x3b8] sm:$0xff]
        %v614 = vld [vmem:[%s2 + $0x3c0] sm:$0xff]
        %v615 = vld [vmem:[%s2 + $0x3c8] sm:$0xff]
        %v616 = vld [vmem:[%s2 + $0x3d0] sm:$0xff]
        %v617 = vld [vmem:[%s2 + $0x3d8] sm:$0xff]
        %v618 = vld [vmem:[%s2 + $0x3e0] sm:$0xff]
        %v619 = vld [vmem:[%s2 + $0x3e8] sm:$0xff]
        %v620 = vld [vmem:[%s2 + $0x3f0] sm:$0xff]
        %v621 = vld [vmem:[%s2 + $0x3f8] sm:$0xff]
        %v622 = vld [vmem:[%s2 + $0x400] sm:$0xff]
        %v623 = vld [vmem:[%s2 + $0x408] sm:$0xff]
        %v624 = vld [vmem:[%s2 + $0x410] sm:$0xff]
        %v625 = vld [vmem:[%s2 + $0x418] sm:$0xff]
        %v626 = vld [vmem:[%s2 + $0x420] sm:$0xff]
        %v627 = vld [vmem:[%s2 + $0x428] sm:$0xff]
        %v628 = vld [vmem:[%s2 + $0x430] sm:$0xff]
        %v629 = vld [vmem:[%s2 + $0x438] sm:$0xff]
        %v630 = vld [vmem:[%s2 + $0x440] sm:$0xff]
        %v631 = vld [vmem:[%s2 + $0x448] sm:$0xff]
        %v632 = vld [vmem:[%s2 + $0x450] sm:$0xff]
        %v633 = vld [vmem:[%s2 + $0x458] sm:$0xff]
        %v634 = vld [vmem:[%s2 + $0x460] sm:$0xff]
        %v635 = vld [vmem:[%s2 + $0x468] sm:$0xff]
        %v636 = vld [vmem:[%s2 + $0x470] sm:$0xff]
        %v637 = vld [vmem:[%s2 + $0x478] sm:$0xff]
        %v638 = vld [vmem:[%s2 + $0x480] sm:$0xff]
        %v639 = vld [vmem:[%s2 + $0x488] sm:$0xff]
        %v640 = vld [vmem:[%s2 + $0x490] sm:$0xff]
        %v641 = vld [vmem:[%s2 + $0x498] sm:$0xff]
        %v642 = vld [vmem:[%s2 + $0x4a0] sm:$0xff]
        %v643 = vld [vmem:[%s2 + $0x4a8] sm:$0xff]
        %v644 = vld [vmem:[%s2 + $0x4b0] sm:$0xff]
        %v645 = vld [vmem:[%s2 + $0x4b8] sm:$0xff]
        %v646 = vld [vmem:[%s2 + $0x4c0] sm:$0xff]
        %v647 = vld [vmem:[%s2 + $0x4c8] sm:$0xff]
        %v648 = vld [vmem:[%s2 + $0x4d0] sm:$0xff]
        %v649 = vld [vmem:[%s2 + $0x4d8] sm:$0xff]
        %v650 = vld [vmem:[%s2 + $0x4e0] sm:$0xff]
        %v651 = vld [vmem:[%s2 + $0x4e8] sm:$0xff]
        %v652 = vld [vmem:[%s2 + $0x4f0] sm:$0xff]
        %v653 = vld [vmem:[%s2 + $0x4f8] sm:$0xff]
        %v654 = vld [vmem:[%s2 + $0x500] sm:$0xff]
        %v655 = vld [vmem:[%s2 + $0x508] sm:$0xff]
        %v656 = vld [vmem:[%s2 + $0x510] sm:$0xff]
        %v657 = vld [vmem:[%s2 + $0x518] sm:$0xff]
        %v658 = vld [vmem:[%s2 + $0x520] sm:$0xff]
        %v659 = vld [vmem:[%s2 + $0x528] sm:$0xff]
        %v660 = vld [vmem:[%s2 + $0x530] sm:$0xff]
        %v661 = vld [vmem:[%s2 + $0x538] sm:$0xff]
        %v662 = vld [vmem:[%s2 + $0x540] sm:$0xff]
        %v663 = vld [vmem:[%s2 + $0x548] sm:$0xff]
        %v664 = vld [vmem:[%s2 + $0x550] sm:$0xff]
        %v665 = vld [vmem:[%s2 + $0x558] sm:$0xff]
        %v666 = vld [vmem:[%s2 + $0x560] sm:$0xff]
        %v667 = vld [vmem:[%s2 + $0x568] sm:$0xff]
        %v668 = vld [vmem:[%s2 + $0x570] sm:$0xff]
        %v669 = vld [vmem:[%s2 + $0x578] sm:$0xff]
        %v670 = vld [vmem:[%s2 + $0x580] sm:$0xff]
        %v671 = vld [vmem:[%s2 + $0x588] sm:$0xff]
        %v672 = vld [vmem:[%s2 + $0x590] sm:$0xff]
        %v673 = vld [vmem:[%s2 + $0x598] sm:$0xff]
        %v674 = vld [vmem:[%s2 + $0x5a0] sm:$0xff]
        %v675 = vld [vmem:[%s2 + $0x5a8] sm:$0xff]
        %v676 = vld [vmem:[%s2 + $0x5b0] sm:$0xff]
        %v677 = vld [vmem:[%s2 + $0x5b8] sm:$0xff]
        %v678 = vld [vmem:[%s2 + $0x5c0] sm:$0xff]
        %v679 = vld [vmem:[%s2 + $0x5c8] sm:$0xff]
        %v680 = vld [vmem:[%s2 + $0x5d0] sm:$0xff]
        %v681 = vld [vmem:[%s2 + $0x5d8] sm:$0xff]
        %v682 = vld [vmem:[%s2 + $0x5e0] sm:$0xff]
        %v683 = vld [vmem:[%s2 + $0x5e8] sm:$0xff]
        %v684 = vld [vmem:[%s2 + $0x5f0] sm:$0xff]
        %v685 = vld [vmem:[%s2 + $0x5f8] sm:$0xff]
        %v686 = vld [vmem:[%s2 + $0x600] sm:$0xff]
        %v687 = vld [vmem:[%s2 + $0x608] sm:$0xff]
        %v688 = vld [vmem:[%s2 + $0x610] sm:$0xff]
        %v689 = vld [vmem:[%s2 + $0x618] sm:$0xff]
        %v690 = vld [vmem:[%s3] sm:$0xf]
        %v692 = vlaneseq
        %v693 = vshrl.u32 %v692, 7
        %v694 = vsub.s32 0, %v693
        %v695 = vrot.slane %v690, %v694
        %v696 = vlaneseq
        %v697 = vshrl.u32 %v696, 7
        %v698 = vsub.s32 1, %v697
        %v699 = vrot.slane %v690, %v698
        %v700 = vlaneseq
        %v701 = vshrl.u32 %v700, 7
        %v702 = vsub.s32 2, %v701
        %v703 = vrot.slane %v690, %v702
        %v704 = vlaneseq
        %v705 = vshrl.u32 %v704, 7
        %v706 = vsub.s32 3, %v705
        %v707 = vrot.slane %v690, %v706
        %v776 = vunpack.c.l.b16 %v430
        %v777 = vunpack.c.h.b16 %v430
        %v778 = vunpack.c.l.b16 %v431
        %v779 = vunpack.c.h.b16 %v431
        %v780 = vunpack.c.l.b16 %v432
        %v781 = vunpack.c.h.b16 %v432
        %v782 = vunpack.c.l.b16 %v433
        %v783 = vunpack.c.l.b16 %v434
        %v784 = vunpack.c.h.b16 %v434
        %v785 = vunpack.c.l.b16 %v435
        %v786 = vunpack.c.h.b16 %v435
        %v787 = vunpack.c.l.b16 %v436
        %v788 = vunpack.c.h.b16 %v436
        %v789 = vunpack.c.l.b16 %v437
        %v790 = vunpack.c.l.b16 %v438
        %v791 = vunpack.c.h.b16 %v438
        %v792 = vunpack.c.l.b16 %v439
        %v793 = vunpack.c.h.b16 %v439
        %v794 = vunpack.c.l.b16 %v440
        %v795 = vunpack.c.h.b16 %v440
        %v796 = vunpack.c.l.b16 %v441
        %v797 = vunpack.c.l.b16 %v442
        %v798 = vunpack.c.h.b16 %v442
        %v799 = vunpack.c.l.b16 %v443
        %v800 = vunpack.c.h.b16 %v443
        %v801 = vunpack.c.l.b16 %v444
        %v802 = vunpack.c.h.b16 %v444
        %v803 = vunpack.c.l.b16 %v445
        %v804 = vunpack.c.l.b16 %v446
        %v805 = vunpack.c.h.b16 %v446
        %v806 = vunpack.c.l.b16 %v447
        %v807 = vunpack.c.h.b16 %v447
        %v808 = vunpack.c.l.b16 %v448
        %v809 = vunpack.c.h.b16 %v448
        %v810 = vunpack.c.l.b16 %v449
        %v811 = vunpack.c.l.b16 %v450
        %v812 = vunpack.c.h.b16 %v450
        %v813 = vunpack.c.l.b16 %v451
        %v814 = vunpack.c.h.b16 %v451
        %v815 = vunpack.c.l.b16 %v452
        %v816 = vunpack.c.h.b16 %v452
        %v817 = vunpack.c.l.b16 %v453
        %v818 = vunpack.c.l.b16 %v454
        %v819 = vunpack.c.h.b16 %v454
        %v820 = vunpack.c.l.b16 %v455
        %v821 = vunpack.c.h.b16 %v455
        %v822 = vunpack.c.l.b16 %v456
        %v823 = vunpack.c.h.b16 %v456
        %v824 = vunpack.c.l.b16 %v457
        %v825 = vunpack.c.l.b16 %v458
        %v826 = vunpack.c.h.b16 %v458
        %v827 = vunpack.c.l.b16 %v459
        %v828 = vunpack.c.h.b16 %v459
        %v829 = vunpack.c.l.b16 %v460
        %v830 = vunpack.c.h.b16 %v460
        %v831 = vunpack.c.l.b16 %v461
        %v832 = vunpack.c.l.b16 %v462
        %v833 = vunpack.c.h.b16 %v462
        %v834 = vunpack.c.l.b16 %v463
        %v835 = vunpack.c.h.b16 %v463
        %v836 = vunpack.c.l.b16 %v464
        %v837 = vunpack.c.h.b16 %v464
        %v838 = vunpack.c.l.b16 %v465
        %v839 = vunpack.c.l.b16 %v466
        %v840 = vunpack.c.h.b16 %v466
        %v841 = vunpack.c.l.b16 %v467
        %v842 = vunpack.c.h.b16 %v467
        %v843 = vunpack.c.l.b16 %v468
        %v844 = vunpack.c.h.b16 %v468
        %v845 = vunpack.c.l.b16 %v469
        %v846 = vunpack.c.l.b16 %v470
        %v847 = vunpack.c.h.b16 %v470
        %v848 = vunpack.c.l.b16 %v471
        %v849 = vunpack.c.h.b16 %v471
        %v850 = vunpack.c.l.b16 %v472
        %v851 = vunpack.c.h.b16 %v472
        %v852 = vunpack.c.l.b16 %v473
        %v853 = vunpack.c.l.b16 %v474
        %v854 = vunpack.c.h.b16 %v474
        %v855 = vunpack.c.l.b16 %v475
        %v856 = vunpack.c.h.b16 %v475
        %v857 = vunpack.c.l.b16 %v476
        %v858 = vunpack.c.h.b16 %v476
        %v859 = vunpack.c.l.b16 %v477
        %v860 = vunpack.c.l.b16 %v478
        %v861 = vunpack.c.h.b16 %v478
        %v862 = vunpack.c.l.b16 %v479
        %v863 = vunpack.c.h.b16 %v479
        %v864 = vunpack.c.l.b16 %v480
        %v865 = vunpack.c.h.b16 %v480
        %v866 = vunpack.c.l.b16 %v481
        %v867 = vunpack.c.l.b16 %v482
        %v868 = vunpack.c.h.b16 %v482
        %v869 = vunpack.c.l.b16 %v483
        %v870 = vunpack.c.h.b16 %v483
        %v871 = vunpack.c.l.b16 %v484
        %v872 = vunpack.c.h.b16 %v484
        %v873 = vunpack.c.l.b16 %v485
        %v874 = vunpack.c.l.b16 %v486
        %v875 = vunpack.c.h.b16 %v486
        %v876 = vunpack.c.l.b16 %v487
        %v877 = vunpack.c.h.b16 %v487
        %v878 = vunpack.c.l.b16 %v488
        %v879 = vunpack.c.h.b16 %v488
        %v880 = vunpack.c.l.b16 %v489
        %v881 = vunpack.c.l.b16 %v490
        %v882 = vunpack.c.h.b16 %v490
        %v883 = vunpack.c.l.b16 %v491
        %v884 = vunpack.c.h.b16 %v491
        %v885 = vunpack.c.l.b16 %v492
        %v886 = vunpack.c.h.b16 %v492
        %v887 = vunpack.c.l.b16 %v493
        %v888 = vpack.c.b16 %v783, %v776
        %v889 = vpack.c.b16 %v784, %v777
        %v890 = vpack.c.b16 %v785, %v778
        %v891 = vpack.c.b16 %v786, %v779
        %v892 = vpack.c.b16 %v787, %v780
        %v893 = vpack.c.b16 %v788, %v781
        %v894 = vpack.c.b16 %v789, %v782
        %v895 = vpack.c.b16 %v797, %v790
        %v896 = vpack.c.b16 %v798, %v791
        %v897 = vpack.c.b16 %v799, %v792
        %v898 = vpack.c.b16 %v800, %v793
        %v899 = vpack.c.b16 %v801, %v794
        %v900 = vpack.c.b16 %v802, %v795
        %v901 = vpack.c.b16 %v803, %v796
        %v902 = vpack.c.b16 %v811, %v804
        %v903 = vpack.c.b16 %v812, %v805
        %v904 = vpack.c.b16 %v813, %v806
        %v905 = vpack.c.b16 %v814, %v807
        %v906 = vpack.c.b16 %v815, %v808
        %v907 = vpack.c.b16 %v816, %v809
        %v908 = vpack.c.b16 %v817, %v810
        %v909 = vpack.c.b16 %v825, %v818
        %v910 = vpack.c.b16 %v826, %v819
        %v911 = vpack.c.b16 %v827, %v820
        %v912 = vpack.c.b16 %v828, %v821
        %v913 = vpack.c.b16 %v829, %v822
        %v914 = vpack.c.b16 %v830, %v823
        %v915 = vpack.c.b16 %v831, %v824
        %v916 = vpack.c.b16 %v839, %v832
        %v917 = vpack.c.b16 %v840, %v833
        %v918 = vpack.c.b16 %v841, %v834
        %v919 = vpack.c.b16 %v842, %v835
        %v920 = vpack.c.b16 %v843, %v836
        %v921 = vpack.c.b16 %v844, %v837
        %v922 = vpack.c.b16 %v845, %v838
        %v923 = vpack.c.b16 %v853, %v846
        %v924 = vpack.c.b16 %v854, %v847
        %v925 = vpack.c.b16 %v855, %v848
        %v926 = vpack.c.b16 %v856, %v849
        %v927 = vpack.c.b16 %v857, %v850
        %v928 = vpack.c.b16 %v858, %v851
        %v929 = vpack.c.b16 %v859, %v852
        %v930 = vpack.c.b16 %v867, %v860
        %v931 = vpack.c.b16 %v868, %v861
        %v932 = vpack.c.b16 %v869, %v862
        %v933 = vpack.c.b16 %v870, %v863
        %v934 = vpack.c.b16 %v871, %v864
        %v935 = vpack.c.b16 %v872, %v865
        %v936 = vpack.c.b16 %v873, %v866
        %v937 = vpack.c.b16 %v881, %v874
        %v938 = vpack.c.b16 %v882, %v875
        %v939 = vpack.c.b16 %v883, %v876
        %v940 = vpack.c.b16 %v884, %v877
        %v941 = vpack.c.b16 %v885, %v878
        %v942 = vpack.c.b16 %v886, %v879
        %v943 = vpack.c.b16 %v887, %v880
        %v1188 = vunpack.c.l.b16 %v494
        %v1189 = vunpack.c.h.b16 %v494
        %v1190 = vunpack.c.l.b16 %v495
        %v1191 = vunpack.c.h.b16 %v495
        %v1192 = vunpack.c.l.b16 %v496
        %v1193 = vunpack.c.h.b16 %v496
        %v1194 = vunpack.c.l.b16 %v497
        %v1195 = vunpack.c.h.b16 %v497
        %v1196 = vunpack.c.l.b16 %v498
        %v1197 = vunpack.c.h.b16 %v498
        %v1198 = vunpack.c.l.b16 %v499
        %v1199 = vunpack.c.h.b16 %v499
        %v1200 = vunpack.c.l.b16 %v500
        %v1201 = vunpack.c.h.b16 %v500
        %v1202 = vunpack.c.l.b16 %v501
        %v1203 = vunpack.c.h.b16 %v501
        %v1204 = vunpack.c.l.b16 %v502
        %v1205 = vunpack.c.h.b16 %v502
        %v1206 = vunpack.c.l.b16 %v503
        %v1207 = vunpack.c.h.b16 %v503
        %v1208 = vunpack.c.l.b16 %v504
        %v1209 = vunpack.c.h.b16 %v504
        %v1210 = vunpack.c.l.b16 %v505
        %v1211 = vunpack.c.h.b16 %v505
        %v1212 = vunpack.c.l.b16 %v506
        %v1213 = vunpack.c.h.b16 %v506
        %v1214 = vunpack.c.l.b16 %v507
        %v1215 = vunpack.c.h.b16 %v507
        %v1216 = vunpack.c.l.b16 %v508
        %v1217 = vunpack.c.h.b16 %v508
        %v1218 = vunpack.c.l.b16 %v509
        %v1219 = vunpack.c.h.b16 %v509
        %v1220 = vunpack.c.l.b16 %v510
        %v1221 = vunpack.c.h.b16 %v510
        %v1222 = vunpack.c.l.b16 %v511
        %v1223 = vunpack.c.h.b16 %v511
        %v1224 = vunpack.c.l.b16 %v512
        %v1225 = vunpack.c.h.b16 %v512
        %v1226 = vunpack.c.l.b16 %v513
        %v1227 = vunpack.c.h.b16 %v513
        %v1228 = vunpack.c.l.b16 %v514
        %v1229 = vunpack.c.h.b16 %v514
        %v1230 = vunpack.c.l.b16 %v515
        %v1231 = vunpack.c.h.b16 %v515
        %v1232 = vunpack.c.l.b16 %v516
        %v1233 = vunpack.c.h.b16 %v516
        %v1234 = vunpack.c.l.b16 %v517
        %v1235 = vunpack.c.h.b16 %v517
        %v1236 = vunpack.c.l.b16 %v518
        %v1237 = vunpack.c.h.b16 %v518
        %v1238 = vunpack.c.l.b16 %v519
        %v1239 = vunpack.c.h.b16 %v519
        %v1240 = vunpack.c.l.b16 %v520
        %v1241 = vunpack.c.h.b16 %v520
        %v1242 = vunpack.c.l.b16 %v521
        %v1243 = vunpack.c.h.b16 %v521
        %v1244 = vunpack.c.l.b16 %v522
        %v1245 = vunpack.c.h.b16 %v522
        %v1246 = vunpack.c.l.b16 %v523
        %v1247 = vunpack.c.h.b16 %v523
        %v1248 = vunpack.c.l.b16 %v524
        %v1249 = vunpack.c.h.b16 %v524
        %v1250 = vunpack.c.l.b16 %v525
        %v1251 = vunpack.c.h.b16 %v525
        %v1252 = vunpack.c.l.b16 %v526
        %v1253 = vunpack.c.h.b16 %v526
        %v1254 = vunpack.c.l.b16 %v527
        %v1255 = vunpack.c.h.b16 %v527
        %v1256 = vunpack.c.l.b16 %v528
        %v1257 = vunpack.c.h.b16 %v528
        %v1258 = vunpack.c.l.b16 %v529
        %v1259 = vunpack.c.h.b16 %v529
        %v1260 = vunpack.c.l.b16 %v530
        %v1261 = vunpack.c.h.b16 %v530
        %v1262 = vunpack.c.l.b16 %v531
        %v1263 = vunpack.c.h.b16 %v531
        %v1264 = vunpack.c.l.b16 %v532
        %v1265 = vunpack.c.h.b16 %v532
        %v1266 = vunpack.c.l.b16 %v533
        %v1267 = vunpack.c.h.b16 %v533
        %v1268 = vunpack.c.l.b16 %v534
        %v1269 = vunpack.c.h.b16 %v534
        %v1270 = vunpack.c.l.b16 %v535
        %v1271 = vunpack.c.h.b16 %v535
        %v1272 = vunpack.c.l.b16 %v536
        %v1273 = vunpack.c.h.b16 %v536
        %v1274 = vunpack.c.l.b16 %v537
        %v1275 = vunpack.c.h.b16 %v537
        %v1276 = vunpack.c.l.b16 %v538
        %v1277 = vunpack.c.h.b16 %v538
        %v1278 = vunpack.c.l.b16 %v539
        %v1279 = vunpack.c.h.b16 %v539
        %v1280 = vunpack.c.l.b16 %v540
        %v1281 = vunpack.c.h.b16 %v540
        %v1282 = vunpack.c.l.b16 %v541
        %v1283 = vunpack.c.h.b16 %v541
        %v1284 = vunpack.c.l.b16 %v542
        %v1285 = vunpack.c.h.b16 %v542
        %v1286 = vunpack.c.l.b16 %v543
        %v1287 = vunpack.c.h.b16 %v543
        %v1288 = vunpack.c.l.b16 %v544
        %v1289 = vunpack.c.h.b16 %v544
        %v1290 = vunpack.c.l.b16 %v545
        %v1291 = vunpack.c.h.b16 %v545
        %v1292 = vunpack.c.l.b16 %v546
        %v1293 = vunpack.c.h.b16 %v546
        %v1294 = vunpack.c.l.b16 %v547
        %v1295 = vunpack.c.h.b16 %v547
        %v1296 = vunpack.c.l.b16 %v548
        %v1297 = vunpack.c.h.b16 %v548
        %v1298 = vunpack.c.l.b16 %v549
        %v1299 = vunpack.c.h.b16 %v549
        %v1300 = vunpack.c.l.b16 %v550
        %v1301 = vunpack.c.h.b16 %v550
        %v1302 = vunpack.c.l.b16 %v551
        %v1303 = vunpack.c.h.b16 %v551
        %v1304 = vunpack.c.l.b16 %v552
        %v1305 = vunpack.c.h.b16 %v552
        %v1306 = vunpack.c.l.b16 %v553
        %v1307 = vunpack.c.h.b16 %v553
        %v1308 = vunpack.c.l.b16 %v554
        %v1309 = vunpack.c.h.b16 %v554
        %v1310 = vunpack.c.l.b16 %v555
        %v1311 = vunpack.c.h.b16 %v555
        %v1312 = vunpack.c.l.b16 %v556
        %v1313 = vunpack.c.h.b16 %v556
        %v1314 = vunpack.c.l.b16 %v557
        %v1315 = vunpack.c.h.b16 %v557
        %v1316 = vunpack.c.l.b16 %v558
        %v1317 = vunpack.c.h.b16 %v558
        %v1318 = vunpack.c.l.b16 %v559
        %v1319 = vunpack.c.h.b16 %v559
        %v1320 = vunpack.c.l.b16 %v560
        %v1321 = vunpack.c.h.b16 %v560
        %v1322 = vunpack.c.l.b16 %v561
        %v1323 = vunpack.c.h.b16 %v561
        %v1324 = vunpack.c.l.b16 %v562
        %v1325 = vunpack.c.h.b16 %v562
        %v1326 = vunpack.c.l.b16 %v563
        %v1327 = vunpack.c.h.b16 %v563
        %v1328 = vunpack.c.l.b16 %v564
        %v1329 = vunpack.c.h.b16 %v564
        %v1330 = vunpack.c.l.b16 %v565
        %v1331 = vunpack.c.h.b16 %v565
        %v1332 = vunpack.c.l.b16 %v566
        %v1333 = vunpack.c.h.b16 %v566
        %v1334 = vunpack.c.l.b16 %v567
        %v1335 = vunpack.c.h.b16 %v567
        %v1336 = vunpack.c.l.b16 %v568
        %v1337 = vunpack.c.h.b16 %v568
        %v1338 = vunpack.c.l.b16 %v569
        %v1339 = vunpack.c.h.b16 %v569
        %v1340 = vunpack.c.l.b16 %v570
        %v1341 = vunpack.c.h.b16 %v570
        %v1342 = vunpack.c.l.b16 %v571
        %v1343 = vunpack.c.h.b16 %v571
        %v1344 = vunpack.c.l.b16 %v572
        %v1345 = vunpack.c.h.b16 %v572
        %v1346 = vunpack.c.l.b16 %v573
        %v1347 = vunpack.c.h.b16 %v573
        %v1348 = vunpack.c.l.b16 %v574
        %v1349 = vunpack.c.h.b16 %v574
        %v1350 = vunpack.c.l.b16 %v575
        %v1351 = vunpack.c.h.b16 %v575
        %v1352 = vunpack.c.l.b16 %v576
        %v1353 = vunpack.c.h.b16 %v576
        %v1354 = vunpack.c.l.b16 %v577
        %v1355 = vunpack.c.h.b16 %v577
        %v1356 = vunpack.c.l.b16 %v578
        %v1357 = vunpack.c.h.b16 %v578
        %v1358 = vunpack.c.l.b16 %v579
        %v1359 = vunpack.c.h.b16 %v579
        %v1360 = vunpack.c.l.b16 %v580
        %v1361 = vunpack.c.h.b16 %v580
        %v1362 = vunpack.c.l.b16 %v581
        %v1363 = vunpack.c.h.b16 %v581
        %v1364 = vunpack.c.l.b16 %v582
        %v1365 = vunpack.c.h.b16 %v582
        %v1366 = vunpack.c.l.b16 %v583
        %v1367 = vunpack.c.h.b16 %v583
        %v1368 = vunpack.c.l.b16 %v584
        %v1369 = vunpack.c.h.b16 %v584
        %v1370 = vunpack.c.l.b16 %v585
        %v1371 = vunpack.c.h.b16 %v585
        %v1372 = vunpack.c.l.b16 %v586
        %v1373 = vunpack.c.h.b16 %v586
        %v1374 = vunpack.c.l.b16 %v587
        %v1375 = vunpack.c.h.b16 %v587
        %v1376 = vunpack.c.l.b16 %v588
        %v1377 = vunpack.c.h.b16 %v588
        %v1378 = vunpack.c.l.b16 %v589
        %v1379 = vunpack.c.h.b16 %v589
        %v1380 = vunpack.c.l.b16 %v590
        %v1381 = vunpack.c.h.b16 %v590
        %v1382 = vunpack.c.l.b16 %v591
        %v1383 = vunpack.c.h.b16 %v591
        %v1384 = vunpack.c.l.b16 %v592
        %v1385 = vunpack.c.h.b16 %v592
        %v1386 = vunpack.c.l.b16 %v593
        %v1387 = vunpack.c.h.b16 %v593
        %v1388 = vunpack.c.l.b16 %v594
        %v1389 = vunpack.c.h.b16 %v594
        %v1390 = vunpack.c.l.b16 %v595
        %v1391 = vunpack.c.h.b16 %v595
        %v1392 = vunpack.c.l.b16 %v596
        %v1393 = vunpack.c.h.b16 %v596
        %v1394 = vunpack.c.l.b16 %v597
        %v1395 = vunpack.c.h.b16 %v597
        %v1396 = vunpack.c.l.b16 %v598
        %v1397 = vunpack.c.h.b16 %v598
        %v1398 = vunpack.c.l.b16 %v599
        %v1399 = vunpack.c.h.b16 %v599
        %v1400 = vunpack.c.l.b16 %v600
        %v1401 = vunpack.c.h.b16 %v600
        %v1402 = vunpack.c.l.b16 %v601
        %v1403 = vunpack.c.h.b16 %v601
        %v1404 = vunpack.c.l.b16 %v602
        %v1405 = vunpack.c.h.b16 %v602
        %v1406 = vunpack.c.l.b16 %v603
        %v1407 = vunpack.c.h.b16 %v603
        %v1408 = vunpack.c.l.b16 %v604
        %v1409 = vunpack.c.h.b16 %v604
        %v1410 = vunpack.c.l.b16 %v605
        %v1411 = vunpack.c.h.b16 %v605
        %v1412 = vunpack.c.l.b16 %v606
        %v1413 = vunpack.c.h.b16 %v606
        %v1414 = vunpack.c.l.b16 %v607
        %v1415 = vunpack.c.h.b16 %v607
        %v1416 = vunpack.c.l.b16 %v608
        %v1417 = vunpack.c.h.b16 %v608
        %v1418 = vunpack.c.l.b16 %v609
        %v1419 = vunpack.c.h.b16 %v609
        %v1420 = vunpack.c.l.b16 %v610
        %v1421 = vunpack.c.h.b16 %v610
        %v1422 = vunpack.c.l.b16 %v611
        %v1423 = vunpack.c.h.b16 %v611
        %v1424 = vunpack.c.l.b16 %v612
        %v1425 = vunpack.c.h.b16 %v612
        %v1426 = vunpack.c.l.b16 %v613
        %v1427 = vunpack.c.h.b16 %v613
        %v1428 = vunpack.c.l.b16 %v614
        %v1429 = vunpack.c.h.b16 %v614
        %v1430 = vunpack.c.l.b16 %v615
        %v1431 = vunpack.c.h.b16 %v615
        %v1432 = vunpack.c.l.b16 %v616
        %v1433 = vunpack.c.h.b16 %v616
        %v1434 = vunpack.c.l.b16 %v617
        %v1435 = vunpack.c.h.b16 %v617
        %v1436 = vunpack.c.l.b16 %v618
        %v1437 = vunpack.c.h.b16 %v618
        %v1438 = vunpack.c.l.b16 %v619
        %v1439 = vunpack.c.h.b16 %v619
        %v1440 = vunpack.c.l.b16 %v620
        %v1441 = vunpack.c.h.b16 %v620
        %v1442 = vunpack.c.l.b16 %v621
        %v1443 = vunpack.c.h.b16 %v621
        %v1444 = vunpack.c.l.b16 %v622
        %v1445 = vunpack.c.h.b16 %v622
        %v1446 = vunpack.c.l.b16 %v623
        %v1447 = vunpack.c.h.b16 %v623
        %v1448 = vunpack.c.l.b16 %v624
        %v1449 = vunpack.c.h.b16 %v624
        %v1450 = vunpack.c.l.b16 %v625
        %v1451 = vunpack.c.h.b16 %v625
        %v1452 = vunpack.c.l.b16 %v626
        %v1453 = vunpack.c.h.b16 %v626
        %v1454 = vunpack.c.l.b16 %v627
        %v1455 = vunpack.c.h.b16 %v627
        %v1456 = vunpack.c.l.b16 %v628
        %v1457 = vunpack.c.h.b16 %v628
        %v1458 = vunpack.c.l.b16 %v629
        %v1459 = vunpack.c.h.b16 %v629
        %v1460 = vunpack.c.l.b16 %v630
        %v1461 = vunpack.c.h.b16 %v630
        %v1462 = vunpack.c.l.b16 %v631
        %v1463 = vunpack.c.h.b16 %v631
        %v1464 = vunpack.c.l.b16 %v632
        %v1465 = vunpack.c.h.b16 %v632
        %v1466 = vunpack.c.l.b16 %v633
        %v1467 = vunpack.c.h.b16 %v633
        %v1468 = vunpack.c.l.b16 %v634
        %v1469 = vunpack.c.h.b16 %v634
        %v1470 = vunpack.c.l.b16 %v635
        %v1471 = vunpack.c.h.b16 %v635
        %v1472 = vunpack.c.l.b16 %v636
        %v1473 = vunpack.c.h.b16 %v636
        %v1474 = vunpack.c.l.b16 %v637
        %v1475 = vunpack.c.h.b16 %v637
        %v1476 = vunpack.c.l.b16 %v638
        %v1477 = vunpack.c.h.b16 %v638
        %v1478 = vunpack.c.l.b16 %v639
        %v1479 = vunpack.c.h.b16 %v639
        %v1480 = vunpack.c.l.b16 %v640
        %v1481 = vunpack.c.h.b16 %v640
        %v1482 = vunpack.c.l.b16 %v641
        %v1483 = vunpack.c.h.b16 %v641
        %v1484 = vunpack.c.l.b16 %v642
        %v1485 = vunpack.c.h.b16 %v642
        %v1486 = vunpack.c.l.b16 %v643
        %v1487 = vunpack.c.h.b16 %v643
        %v1488 = vunpack.c.l.b16 %v644
        %v1489 = vunpack.c.h.b16 %v644
        %v1490 = vunpack.c.l.b16 %v645
        %v1491 = vunpack.c.h.b16 %v645
        %v1492 = vunpack.c.l.b16 %v646
        %v1493 = vunpack.c.h.b16 %v646
        %v1494 = vunpack.c.l.b16 %v647
        %v1495 = vunpack.c.h.b16 %v647
        %v1496 = vunpack.c.l.b16 %v648
        %v1497 = vunpack.c.h.b16 %v648
        %v1498 = vunpack.c.l.b16 %v649
        %v1499 = vunpack.c.h.b16 %v649
        %v1500 = vunpack.c.l.b16 %v650
        %v1501 = vunpack.c.h.b16 %v650
        %v1502 = vunpack.c.l.b16 %v651
        %v1503 = vunpack.c.h.b16 %v651
        %v1504 = vunpack.c.l.b16 %v652
        %v1505 = vunpack.c.h.b16 %v652
        %v1506 = vunpack.c.l.b16 %v653
        %v1507 = vunpack.c.h.b16 %v653
        %v1508 = vunpack.c.l.b16 %v654
        %v1509 = vunpack.c.h.b16 %v654
        %v1510 = vunpack.c.l.b16 %v655
        %v1511 = vunpack.c.h.b16 %v655
        %v1512 = vunpack.c.l.b16 %v656
        %v1513 = vunpack.c.h.b16 %v656
        %v1514 = vunpack.c.l.b16 %v657
        %v1515 = vunpack.c.h.b16 %v657
        %v1516 = vunpack.c.l.b16 %v658
        %v1517 = vunpack.c.h.b16 %v658
        %v1518 = vunpack.c.l.b16 %v659
        %v1519 = vunpack.c.h.b16 %v659
        %v1520 = vunpack.c.l.b16 %v660
        %v1521 = vunpack.c.h.b16 %v660
        %v1522 = vunpack.c.l.b16 %v661
        %v1523 = vunpack.c.h.b16 %v661
        %v1524 = vunpack.c.l.b16 %v662
        %v1525 = vunpack.c.h.b16 %v662
        %v1526 = vunpack.c.l.b16 %v663
        %v1527 = vunpack.c.h.b16 %v663
        %v1528 = vunpack.c.l.b16 %v664
        %v1529 = vunpack.c.h.b16 %v664
        %v1530 = vunpack.c.l.b16 %v665
        %v1531 = vunpack.c.h.b16 %v665
        %v1532 = vunpack.c.l.b16 %v666
        %v1533 = vunpack.c.h.b16 %v666
        %v1534 = vunpack.c.l.b16 %v667
        %v1535 = vunpack.c.h.b16 %v667
        %v1536 = vunpack.c.l.b16 %v668
        %v1537 = vunpack.c.h.b16 %v668
        %v1538 = vunpack.c.l.b16 %v669
        %v1539 = vunpack.c.h.b16 %v669
        %v1540 = vunpack.c.l.b16 %v670
        %v1541 = vunpack.c.h.b16 %v670
        %v1542 = vunpack.c.l.b16 %v671
        %v1543 = vunpack.c.h.b16 %v671
        %v1544 = vunpack.c.l.b16 %v672
        %v1545 = vunpack.c.h.b16 %v672
        %v1546 = vunpack.c.l.b16 %v673
        %v1547 = vunpack.c.h.b16 %v673
        %v1548 = vunpack.c.l.b16 %v674
        %v1549 = vunpack.c.h.b16 %v674
        %v1550 = vunpack.c.l.b16 %v675
        %v1551 = vunpack.c.h.b16 %v675
        %v1552 = vunpack.c.l.b16 %v676
        %v1553 = vunpack.c.h.b16 %v676
        %v1554 = vunpack.c.l.b16 %v677
        %v1555 = vunpack.c.h.b16 %v677
        %v1556 = vunpack.c.l.b16 %v678
        %v1557 = vunpack.c.h.b16 %v678
        %v1558 = vunpack.c.l.b16 %v679
        %v1559 = vunpack.c.h.b16 %v679
        %v1560 = vunpack.c.l.b16 %v680
        %v1561 = vunpack.c.h.b16 %v680
        %v1562 = vunpack.c.l.b16 %v681
        %v1563 = vunpack.c.h.b16 %v681
        %v1564 = vunpack.c.l.b16 %v682
        %v1565 = vunpack.c.h.b16 %v682
        %v1566 = vunpack.c.l.b16 %v683
        %v1567 = vunpack.c.h.b16 %v683
        %v1568 = vunpack.c.l.b16 %v684
        %v1569 = vunpack.c.h.b16 %v684
        %v1570 = vunpack.c.l.b16 %v685
        %v1571 = vunpack.c.h.b16 %v685
        %v1572 = vunpack.c.l.b16 %v686
        %v1573 = vunpack.c.h.b16 %v686
        %v1574 = vunpack.c.l.b16 %v687
        %v1575 = vunpack.c.h.b16 %v687
        %v1576 = vunpack.c.l.b16 %v688
        %v1577 = vunpack.c.h.b16 %v688
        %v1578 = vunpack.c.l.b16 %v689
        %v1579 = vunpack.c.h.b16 %v689
        %v1580 = vpack.c.b16 %v1192, %v1188
        %v1581 = vpack.c.b16 %v1193, %v1189
        %v1582 = vpack.c.b16 %v1194, %v1190
        %v1583 = vpack.c.b16 %v1195, %v1191
        %v1584 = vpack.c.b16 %v1200, %v1196
        %v1585 = vpack.c.b16 %v1201, %v1197
        %v1586 = vpack.c.b16 %v1202, %v1198
        %v1587 = vpack.c.b16 %v1203, %v1199
        %v1588 = vpack.c.b16 %v1208, %v1204
        %v1589 = vpack.c.b16 %v1209, %v1205
        %v1590 = vpack.c.b16 %v1210, %v1206
        %v1591 = vpack.c.b16 %v1211, %v1207
        %v1592 = vpack.c.b16 %v1216, %v1212
        %v1593 = vpack.c.b16 %v1217, %v1213
        %v1594 = vpack.c.b16 %v1218, %v1214
        %v1595 = vpack.c.b16 %v1219, %v1215
        %v1596 = vpack.c.b16 %v1224, %v1220
        %v1597 = vpack.c.b16 %v1225, %v1221
        %v1598 = vpack.c.b16 %v1226, %v1222
        %v1599 = vpack.c.b16 %v1227, %v1223
        %v1600 = vpack.c.b16 %v1232, %v1228
        %v1601 = vpack.c.b16 %v1233, %v1229
        %v1602 = vpack.c.b16 %v1234, %v1230
        %v1603 = vpack.c.b16 %v1235, %v1231
        %v1604 = vpack.c.b16 %v1240, %v1236
        %v1605 = vpack.c.b16 %v1241, %v1237
        %v1606 = vpack.c.b16 %v1242, %v1238
        %v1607 = vpack.c.b16 %v1243, %v1239
        %v1608 = vpack.c.b16 %v1248, %v1244
        %v1609 = vpack.c.b16 %v1249, %v1245
        %v1610 = vpack.c.b16 %v1250, %v1246
        %v1611 = vpack.c.b16 %v1251, %v1247
        %v1612 = vpack.c.b16 %v1256, %v1252
        %v1613 = vpack.c.b16 %v1257, %v1253
        %v1614 = vpack.c.b16 %v1258, %v1254
        %v1615 = vpack.c.b16 %v1259, %v1255
        %v1616 = vpack.c.b16 %v1264, %v1260
        %v1617 = vpack.c.b16 %v1265, %v1261
        %v1618 = vpack.c.b16 %v1266, %v1262
        %v1619 = vpack.c.b16 %v1267, %v1263
        %v1620 = vpack.c.b16 %v1272, %v1268
        %v1621 = vpack.c.b16 %v1273, %v1269
        %v1622 = vpack.c.b16 %v1274, %v1270
        %v1623 = vpack.c.b16 %v1275, %v1271
        %v1624 = vpack.c.b16 %v1280, %v1276
        %v1625 = vpack.c.b16 %v1281, %v1277
        %v1626 = vpack.c.b16 %v1282, %v1278
        %v1627 = vpack.c.b16 %v1283, %v1279
        %v1628 = vpack.c.b16 %v1288, %v1284
        %v1629 = vpack.c.b16 %v1289, %v1285
        %v1630 = vpack.c.b16 %v1290, %v1286
        %v1631 = vpack.c.b16 %v1291, %v1287
        %v1632 = vpack.c.b16 %v1296, %v1292
        %v1633 = vpack.c.b16 %v1297, %v1293
        %v1634 = vpack.c.b16 %v1298, %v1294
        %v1635 = vpack.c.b16 %v1299, %v1295
        %v1636 = vpack.c.b16 %v1304, %v1300
        %v1637 = vpack.c.b16 %v1305, %v1301
        %v1638 = vpack.c.b16 %v1306, %v1302
        %v1639 = vpack.c.b16 %v1307, %v1303
        %v1640 = vpack.c.b16 %v1312, %v1308
        %v1641 = vpack.c.b16 %v1313, %v1309
        %v1642 = vpack.c.b16 %v1314, %v1310
        %v1643 = vpack.c.b16 %v1315, %v1311
        %v1644 = vpack.c.b16 %v1320, %v1316
        %v1645 = vpack.c.b16 %v1321, %v1317
        %v1646 = vpack.c.b16 %v1322, %v1318
        %v1647 = vpack.c.b16 %v1323, %v1319
        %v1648 = vpack.c.b16 %v1328, %v1324
        %v1649 = vpack.c.b16 %v1329, %v1325
        %v1650 = vpack.c.b16 %v1330, %v1326
        %v1651 = vpack.c.b16 %v1331, %v1327
        %v1652 = vpack.c.b16 %v1336, %v1332
        %v1653 = vpack.c.b16 %v1337, %v1333
        %v1654 = vpack.c.b16 %v1338, %v1334
        %v1655 = vpack.c.b16 %v1339, %v1335
        %v1656 = vpack.c.b16 %v1344, %v1340
        %v1657 = vpack.c.b16 %v1345, %v1341
        %v1658 = vpack.c.b16 %v1346, %v1342
        %v1659 = vpack.c.b16 %v1347, %v1343
        %v1660 = vpack.c.b16 %v1352, %v1348
        %v1661 = vpack.c.b16 %v1353, %v1349
        %v1662 = vpack.c.b16 %v1354, %v1350
        %v1663 = vpack.c.b16 %v1355, %v1351
        %v1664 = vpack.c.b16 %v1360, %v1356
        %v1665 = vpack.c.b16 %v1361, %v1357
        %v1666 = vpack.c.b16 %v1362, %v1358
        %v1667 = vpack.c.b16 %v1363, %v1359
        %v1668 = vpack.c.b16 %v1368, %v1364
        %v1669 = vpack.c.b16 %v1369, %v1365
        %v1670 = vpack.c.b16 %v1370, %v1366
        %v1671 = vpack.c.b16 %v1371, %v1367
        %v1672 = vpack.c.b16 %v1376, %v1372
        %v1673 = vpack.c.b16 %v1377, %v1373
        %v1674 = vpack.c.b16 %v1378, %v1374
        %v1675 = vpack.c.b16 %v1379, %v1375
        %v1676 = vpack.c.b16 %v1384, %v1380
        %v1677 = vpack.c.b16 %v1385, %v1381
        %v1678 = vpack.c.b16 %v1386, %v1382
        %v1679 = vpack.c.b16 %v1387, %v1383
        %v1680 = vpack.c.b16 %v1392, %v1388
        %v1681 = vpack.c.b16 %v1393, %v1389
        %v1682 = vpack.c.b16 %v1394, %v1390
        %v1683 = vpack.c.b16 %v1395, %v1391
        %v1684 = vpack.c.b16 %v1400, %v1396
        %v1685 = vpack.c.b16 %v1401, %v1397
        %v1686 = vpack.c.b16 %v1402, %v1398
        %v1687 = vpack.c.b16 %v1403, %v1399
        %v1688 = vpack.c.b16 %v1408, %v1404
        %v1689 = vpack.c.b16 %v1409, %v1405
        %v1690 = vpack.c.b16 %v1410, %v1406
        %v1691 = vpack.c.b16 %v1411, %v1407
        %v1692 = vpack.c.b16 %v1416, %v1412
        %v1693 = vpack.c.b16 %v1417, %v1413
        %v1694 = vpack.c.b16 %v1418, %v1414
        %v1695 = vpack.c.b16 %v1419, %v1415
        %v1696 = vpack.c.b16 %v1424, %v1420
        %v1697 = vpack.c.b16 %v1425, %v1421
        %v1698 = vpack.c.b16 %v1426, %v1422
        %v1699 = vpack.c.b16 %v1427, %v1423
        %v1700 = vpack.c.b16 %v1432, %v1428
        %v1701 = vpack.c.b16 %v1433, %v1429
        %v1702 = vpack.c.b16 %v1434, %v1430
        %v1703 = vpack.c.b16 %v1435, %v1431
        %v1704 = vpack.c.b16 %v1440, %v1436
        %v1705 = vpack.c.b16 %v1441, %v1437
        %v1706 = vpack.c.b16 %v1442, %v1438
        %v1707 = vpack.c.b16 %v1443, %v1439
        %v1708 = vpack.c.b16 %v1448, %v1444
        %v1709 = vpack.c.b16 %v1449, %v1445
        %v1710 = vpack.c.b16 %v1450, %v1446
        %v1711 = vpack.c.b16 %v1451, %v1447
        %v1712 = vpack.c.b16 %v1456, %v1452
        %v1713 = vpack.c.b16 %v1457, %v1453
        %v1714 = vpack.c.b16 %v1458, %v1454
        %v1715 = vpack.c.b16 %v1459, %v1455
        %v1716 = vpack.c.b16 %v1464, %v1460
        %v1717 = vpack.c.b16 %v1465, %v1461
        %v1718 = vpack.c.b16 %v1466, %v1462
        %v1719 = vpack.c.b16 %v1467, %v1463
        %v1720 = vpack.c.b16 %v1472, %v1468
        %v1721 = vpack.c.b16 %v1473, %v1469
        %v1722 = vpack.c.b16 %v1474, %v1470
        %v1723 = vpack.c.b16 %v1475, %v1471
        %v1724 = vpack.c.b16 %v1480, %v1476
        %v1725 = vpack.c.b16 %v1481, %v1477
        %v1726 = vpack.c.b16 %v1482, %v1478
        %v1727 = vpack.c.b16 %v1483, %v1479
        %v1728 = vpack.c.b16 %v1488, %v1484
        %v1729 = vpack.c.b16 %v1489, %v1485
        %v1730 = vpack.c.b16 %v1490, %v1486
        %v1731 = vpack.c.b16 %v1491, %v1487
        %v1732 = vpack.c.b16 %v1496, %v1492
        %v1733 = vpack.c.b16 %v1497, %v1493
        %v1734 = vpack.c.b16 %v1498, %v1494
        %v1735 = vpack.c.b16 %v1499, %v1495
        %v1736 = vpack.c.b16 %v1504, %v1500
        %v1737 = vpack.c.b16 %v1505, %v1501
        %v1738 = vpack.c.b16 %v1506, %v1502
        %v1739 = vpack.c.b16 %v1507, %v1503
        %v1740 = vpack.c.b16 %v1512, %v1508
        %v1741 = vpack.c.b16 %v1513, %v1509
        %v1742 = vpack.c.b16 %v1514, %v1510
        %v1743 = vpack.c.b16 %v1515, %v1511
        %v1744 = vpack.c.b16 %v1520, %v1516
        %v1745 = vpack.c.b16 %v1521, %v1517
        %v1746 = vpack.c.b16 %v1522, %v1518
        %v1747 = vpack.c.b16 %v1523, %v1519
        %v1748 = vpack.c.b16 %v1528, %v1524
        %v1749 = vpack.c.b16 %v1529, %v1525
        %v1750 = vpack.c.b16 %v1530, %v1526
        %v1751 = vpack.c.b16 %v1531, %v1527
        %v1752 = vpack.c.b16 %v1536, %v1532
        %v1753 = vpack.c.b16 %v1537, %v1533
        %v1754 = vpack.c.b16 %v1538, %v1534
        %v1755 = vpack.c.b16 %v1539, %v1535
        %v1756 = vpack.c.b16 %v1544, %v1540
        %v1757 = vpack.c.b16 %v1545, %v1541
        %v1758 = vpack.c.b16 %v1546, %v1542
        %v1759 = vpack.c.b16 %v1547, %v1543
        %v1760 = vpack.c.b16 %v1552, %v1548
        %v1761 = vpack.c.b16 %v1553, %v1549
        %v1762 = vpack.c.b16 %v1554, %v1550
        %v1763 = vpack.c.b16 %v1555, %v1551
        %v1764 = vpack.c.b16 %v1560, %v1556
        %v1765 = vpack.c.b16 %v1561, %v1557
        %v1766 = vpack.c.b16 %v1562, %v1558
        %v1767 = vpack.c.b16 %v1563, %v1559
        %v1768 = vpack.c.b16 %v1568, %v1564
        %v1769 = vpack.c.b16 %v1569, %v1565
        %v1770 = vpack.c.b16 %v1570, %v1566
        %v1771 = vpack.c.b16 %v1571, %v1567
        %v1772 = vpack.c.b16 %v1576, %v1572
        %v1773 = vpack.c.b16 %v1577, %v1573
        %v1774 = vpack.c.b16 %v1578, %v1574
        %v1775 = vpack.c.b16 %v1579, %v1575
        %vm1972 = vcmask 130048
        %v1974 = vsel %vm1972, %v894, 0
        %v1977 = vsel %vm1972, %v901, 0
        %v1980 = vsel %vm1972, %v908, 0
        %v1983 = vsel %vm1972, %v915, 0
        %v1986 = vsel %vm1972, %v922, 0
        %v1989 = vsel %vm1972, %v929, 0
        %v1992 = vsel %vm1972, %v936, 0
        %v1995 = vsel %vm1972, %v943, 0
        %1997 = vmatprep.subr.bf16.mxu0 %v1581
        %1998 = vmatpush1.bf16.msra.mxu0 %v1580
        %1999 = vmatprep.subr.bf16.mxu0 %v1585
        %2000 = vmatpush1.bf16.msra.mxu0 %v1584
        %2001 = vmatprep.subr.bf16.mxu0 %v1589
        %2002 = vmatpush1.bf16.msra.mxu0 %v1588
        %2003 = vmatprep.subr.bf16.mxu0 %v1593
        %2004 = vmatpush1.bf16.msra.mxu0 %v1592
        %2005 = vmatprep.subr.bf16.mxu0 %v1597
        %2006 = vmatpush1.bf16.msra.mxu0 %v1596
        %2007 = vmatprep.subr.bf16.mxu0 %v1601
        %2008 = vmatpush1.bf16.msra.mxu0 %v1600
        %2009 = vmatprep.subr.bf16.mxu0 %v1605
        %2010 = vmatpush1.bf16.msra.mxu0 %v1604
        %2011 = vmatprep.subr.bf16.mxu0 %v1609
        %2012 = vmatpush1.bf16.msra.mxu0 %v1608
        %2013 = vmatprep.subr.bf16.mxu0 %v1613
        %2014 = vmatpush1.bf16.msra.mxu0 %v1612
        %2015 = vmatprep.subr.bf16.mxu0 %v1617
        %2016 = vmatpush1.bf16.msra.mxu0 %v1616
        %2017 = vmatprep.subr.bf16.mxu0 %v1621
        %2018 = vmatpush1.bf16.msra.mxu0 %v1620
        %2019 = vmatprep.subr.bf16.mxu0 %v1625
        %2020 = vmatpush1.bf16.msra.mxu0 %v1624
        %2021 = vmatprep.subr.bf16.mxu0 %v1629
        %2022 = vmatpush1.bf16.msra.mxu0 %v1628
        %2023 = vmatprep.subr.bf16.mxu0 %v1633
        %2024 = vmatpush1.bf16.msra.mxu0 %v1632
        %2025 = vmatprep.subr.bf16.mxu0 %v1637
        %2026 = vmatpush1.bf16.msra.mxu0 %v1636
        %2027 = vmatprep.subr.bf16.mxu0 %v1641
        %2028 = vmatpush1.bf16.msra.mxu0 %v1640
        %2029 = vmatprep.mubr.bf16.mxu0 %v889
        %2030 = vmatmul.mubr.bf16.gmra.mrb[0].mxu0 %v888
        %v2031 = vpop.f32.mrb[0].mxu0
        %v2032 = vadd.f32 %v695, %v2031
        %v2033 = vpop.f32.mrb[0].mxu0
        %v2034 = vadd.f32 %v699, %v2033
        %v2035 = vpop.f32.mrb[0].mxu0
        %v2036 = vadd.f32 %v695, %v2035
        %v2037 = vpop.f32.mrb[0].mxu0
        %v2038 = vadd.f32 %v699, %v2037
        %2039 = vmatprep.mubr.bf16.mxu0 %v896
        %2040 = vmatmul.mubr.bf16.gmra.mrb[0].mxu0 %v895
        %v2041 = vpop.f32.mrb[0].mxu0
        %v2042 = vadd.f32 %v695, %v2041
        %v2043 = vpop.f32.mrb[0].mxu0
        %v2044 = vadd.f32 %v699, %v2043
        %v2045 = vpop.f32.mrb[0].mxu0
        %v2046 = vadd.f32 %v695, %v2045
        %v2047 = vpop.f32.mrb[0].mxu0
        %v2048 = vadd.f32 %v699, %v2047
        %2049 = vmatprep.mubr.bf16.mxu0 %v903
        %2050 = vmatmul.mubr.bf16.gmra.mrb[0].mxu0 %v902
        %v2051 = vpop.f32.mrb[0].mxu0
        %v2052 = vadd.f32 %v695, %v2051
        %v2053 = vpop.f32.mrb[0].mxu0
        %v2054 = vadd.f32 %v699, %v2053
        %v2055 = vpop.f32.mrb[0].mxu0
        %v2056 = vadd.f32 %v695, %v2055
        %v2057 = vpop.f32.mrb[0].mxu0
        %v2058 = vadd.f32 %v699, %v2057
        %2059 = vmatprep.mubr.bf16.mxu0 %v910
        %2060 = vmatmul.mubr.bf16.gmra.mrb[0].mxu0 %v909
        %v2061 = vpop.f32.mrb[0].mxu0
        %v2062 = vadd.f32 %v695, %v2061
        %v2063 = vpop.f32.mrb[0].mxu0
        %v2064 = vadd.f32 %v699, %v2063
        %v2065 = vpop.f32.mrb[0].mxu0
        %v2066 = vadd.f32 %v695, %v2065
        %v2067 = vpop.f32.mrb[0].mxu0
        %v2068 = vadd.f32 %v699, %v2067
        %2069 = vmatprep.mubr.bf16.mxu0 %v917
        %2070 = vmatmul.mubr.bf16.gmra.mrb[0].mxu0 %v916
        %v2071 = vpop.f32.mrb[0].mxu0
        %v2072 = vadd.f32 %v695, %v2071
        %v2073 = vpop.f32.mrb[0].mxu0
        %v2074 = vadd.f32 %v699, %v2073
        %v2075 = vpop.f32.mrb[0].mxu0
        %v2076 = vadd.f32 %v695, %v2075
        %v2077 = vpop.f32.mrb[0].mxu0
        %v2078 = vadd.f32 %v699, %v2077
        %2079 = vmatprep.mubr.bf16.mxu0 %v924
        %2080 = vmatmul.mubr.bf16.gmra.mrb[0].mxu0 %v923
        %v2081 = vpop.f32.mrb[0].mxu0
        %v2082 = vadd.f32 %v695, %v2081
        %v2083 = vpop.f32.mrb[0].mxu0
        %v2084 = vadd.f32 %v699, %v2083
        %v2085 = vpop.f32.mrb[0].mxu0
        %v2086 = vadd.f32 %v695, %v2085
        %v2087 = vpop.f32.mrb[0].mxu0
        %v2088 = vadd.f32 %v699, %v2087
        %2089 = vmatprep.mubr.bf16.mxu0 %v931
        %2090 = vmatmul.mubr.bf16.gmra.mrb[0].mxu0 %v930
        %v2091 = vpop.f32.mrb[0].mxu0
        %v2092 = vadd.f32 %v695, %v2091
        %v2093 = vpop.f32.mrb[0].mxu0
        %v2094 = vadd.f32 %v699, %v2093
        %v2095 = vpop.f32.mrb[0].mxu0
        %v2096 = vadd.f32 %v695, %v2095
        %v2097 = vpop.f32.mrb[0].mxu0
        %v2098 = vadd.f32 %v699, %v2097
        %2099 = vmatprep.mubr.bf16.mxu0 %v938
        %2100 = vmatmul.mubr.bf16.gmra.mrb[0].mxu0 %v937
        %v2101 = vpop.f32.mrb[0].mxu0
        %v2102 = vadd.f32 %v695, %v2101
        %v2103 = vpop.f32.mrb[0].mxu0
        %v2104 = vadd.f32 %v699, %v2103
        %v2105 = vpop.f32.mrb[0].mxu0
        %v2106 = vadd.f32 %v695, %v2105
        %v2107 = vpop.f32.mrb[0].mxu0
        %v2108 = vadd.f32 %v699, %v2107
        %2109 = vdwg.mxu0
        %2110 = vmatprep.subr.bf16.mxu0 %v1645
        %2111 = vmatpush1.bf16.msra.mxu0 %v1644
        %2112 = vmatprep.subr.bf16.mxu0 %v1649
        %2113 = vmatpush1.bf16.msra.mxu0 %v1648
        %2114 = vmatprep.subr.bf16.mxu0 %v1653
        %2115 = vmatpush1.bf16.msra.mxu0 %v1652
        %2116 = vmatprep.subr.bf16.mxu0 %v1657
        %2117 = vmatpush1.bf16.msra.mxu0 %v1656
        %2118 = vmatprep.subr.bf16.mxu0 %v1661
        %2119 = vmatpush1.bf16.msra.mxu0 %v1660
        %2120 = vmatprep.subr.bf16.mxu0 %v1665
        %2121 = vmatpush1.bf16.msra.mxu0 %v1664
        %2122 = vmatprep.subr.bf16.mxu0 %v1669
        %2123 = vmatpush1.bf16.msra.mxu0 %v1668
        %2124 = vmatprep.subr.bf16.mxu0 %v1673
        %2125 = vmatpush1.bf16.msra.mxu0 %v1672
        %2126 = vmatprep.subr.bf16.mxu0 %v1677
        %2127 = vmatpush1.bf16.msra.mxu0 %v1676
        %2128 = vmatprep.subr.bf16.mxu0 %v1681
        %2129 = vmatpush1.bf16.msra.mxu0 %v1680
        %2130 = vmatprep.subr.bf16.mxu0 %v1685
        %2131 = vmatpush1.bf16.msra.mxu0 %v1684
        %2132 = vmatprep.subr.bf16.mxu0 %v1689
        %2133 = vmatpush1.bf16.msra.mxu0 %v1688
        %2134 = vmatprep.subr.bf16.mxu0 %v1693
        %2135 = vmatpush1.bf16.msra.mxu0 %v1692
        %2136 = vmatprep.subr.bf16.mxu0 %v1697
        %2137 = vmatpush1.bf16.msra.mxu0 %v1696
        %2138 = vmatprep.subr.bf16.mxu0 %v1701
        %2139 = vmatpush1.bf16.msra.mxu0 %v1700
        %2140 = vmatprep.subr.bf16.mxu0 %v1705
        %2141 = vmatpush1.bf16.msra.mxu0 %v1704
        %2142 = vmatprep.mubr.bf16.mxu0 %v891
        %2143 = vmatmul.mubr.bf16.gmra.mrb[0].mxu0 %v890
        %v2144 = vpop.f32.mrb[0].mxu0
        %v2145 = vadd.f32 %v2032, %v2144
        %v2146 = vpop.f32.mrb[0].mxu0
        %v2147 = vadd.f32 %v2034, %v2146
        %v2148 = vpop.f32.mrb[0].mxu0
        %v2149 = vadd.f32 %v2036, %v2148
        %v2150 = vpop.f32.mrb[0].mxu0
        %v2151 = vadd.f32 %v2038, %v2150
        %2152 = vmatprep.mubr.bf16.mxu0 %v898
        %2153 = vmatmul.mubr.bf16.gmra.mrb[0].mxu0 %v897
        %v2154 = vpop.f32.mrb[0].mxu0
        %v2155 = vadd.f32 %v2042, %v2154
        %v2156 = vpop.f32.mrb[0].mxu0
        %v2157 = vadd.f32 %v2044, %v2156
        %v2158 = vpop.f32.mrb[0].mxu0
        %v2159 = vadd.f32 %v2046, %v2158
        %v2160 = vpop.f32.mrb[0].mxu0
        %v2161 = vadd.f32 %v2048, %v2160
        %2162 = vmatprep.mubr.bf16.mxu0 %v905
        %2163 = vmatmul.mubr.bf16.gmra.mrb[0].mxu0 %v904
        %v2164 = vpop.f32.mrb[0].mxu0
        %v2165 = vadd.f32 %v2052, %v2164
        %v2166 = vpop.f32.mrb[0].mxu0
        %v2167 = vadd.f32 %v2054, %v2166
        %v2168 = vpop.f32.mrb[0].mxu0
        %v2169 = vadd.f32 %v2056, %v2168
        %v2170 = vpop.f32.mrb[0].mxu0
        %v2171 = vadd.f32 %v2058, %v2170
        %2172 = vmatprep.mubr.bf16.mxu0 %v912
        %2173 = vmatmul.mubr.bf16.gmra.mrb[0].mxu0 %v911
        %v2174 = vpop.f32.mrb[0].mxu0
        %v2175 = vadd.f32 %v2062, %v2174
        %v2176 = vpop.f32.mrb[0].mxu0
        %v2177 = vadd.f32 %v2064, %v2176
        %v2178 = vpop.f32.mrb[0].mxu0
        %v2179 = vadd.f32 %v2066, %v2178
        %v2180 = vpop.f32.mrb[0].mxu0
        %v2181 = vadd.f32 %v2068, %v2180
        %2182 = vmatprep.mubr.bf16.mxu0 %v919
        %2183 = vmatmul.mubr.bf16.gmra.mrb[0].mxu0 %v918
        %v2184 = vpop.f32.mrb[0].mxu0
        %v2185 = vadd.f32 %v2072, %v2184
        %v2186 = vpop.f32.mrb[0].mxu0
        %v2187 = vadd.f32 %v2074, %v2186
        %v2188 = vpop.f32.mrb[0].mxu0
        %v2189 = vadd.f32 %v2076, %v2188
        %v2190 = vpop.f32.mrb[0].mxu0
        %v2191 = vadd.f32 %v2078, %v2190
        %2192 = vmatprep.mubr.bf16.mxu0 %v926
        %2193 = vmatmul.mubr.bf16.gmra.mrb[0].mxu0 %v925
        %v2194 = vpop.f32.mrb[0].mxu0
        %v2195 = vadd.f32 %v2082, %v2194
        %v2196 = vpop.f32.mrb[0].mxu0
        %v2197 = vadd.f32 %v2084, %v2196
        %v2198 = vpop.f32.mrb[0].mxu0
        %v2199 = vadd.f32 %v2086, %v2198
        %v2200 = vpop.f32.mrb[0].mxu0
        %v2201 = vadd.f32 %v2088, %v2200
        %2202 = vmatprep.mubr.bf16.mxu0 %v933
        %2203 = vmatmul.mubr.bf16.gmra.mrb[0].mxu0 %v932
        %v2204 = vpop.f32.mrb[0].mxu0
        %v2205 = vadd.f32 %v2092, %v2204
        %v2206 = vpop.f32.mrb[0].mxu0
        %v2207 = vadd.f32 %v2094, %v2206
        %v2208 = vpop.f32.mrb[0].mxu0
        %v2209 = vadd.f32 %v2096, %v2208
        %v2210 = vpop.f32.mrb[0].mxu0
        %v2211 = vadd.f32 %v2098, %v2210
        %2212 = vmatprep.mubr.bf16.mxu0 %v940
        %2213 = vmatmul.mubr.bf16.gmra.mrb[0].mxu0 %v939
        %v2214 = vpop.f32.mrb[0].mxu0
        %v2215 = vadd.f32 %v2102, %v2214
        %v2216 = vpop.f32.mrb[0].mxu0
        %v2217 = vadd.f32 %v2104, %v2216
        %v2218 = vpop.f32.mrb[0].mxu0
        %v2219 = vadd.f32 %v2106, %v2218
        %v2220 = vpop.f32.mrb[0].mxu0
        %v2221 = vadd.f32 %v2108, %v2220
        %2222 = vdwg.mxu0
        %2223 = vmatprep.subr.bf16.mxu0 %v1709
        %2224 = vmatpush1.bf16.msra.mxu0 %v1708
        %2225 = vmatprep.subr.bf16.mxu0 %v1713
        %2226 = vmatpush1.bf16.msra.mxu0 %v1712
        %2227 = vmatprep.subr.bf16.mxu0 %v1717
        %2228 = vmatpush1.bf16.msra.mxu0 %v1716
        %2229 = vmatprep.subr.bf16.mxu0 %v1721
        %2230 = vmatpush1.bf16.msra.mxu0 %v1720
        %2231 = vmatprep.subr.bf16.mxu0 %v1725
        %2232 = vmatpush1.bf16.msra.mxu0 %v1724
        %2233 = vmatprep.subr.bf16.mxu0 %v1729
        %2234 = vmatpush1.bf16.msra.mxu0 %v1728
        %2235 = vmatprep.subr.bf16.mxu0 %v1733
        %2236 = vmatpush1.bf16.msra.mxu0 %v1732
        %2237 = vmatprep.subr.bf16.mxu0 %v1737
        %2238 = vmatpush1.bf16.msra.mxu0 %v1736
        %2239 = vmatprep.subr.bf16.mxu0 %v1741
        %2240 = vmatpush1.bf16.msra.mxu0 %v1740
        %2241 = vmatprep.subr.bf16.mxu0 %v1745
        %2242 = vmatpush1.bf16.msra.mxu0 %v1744
        %2243 = vmatprep.subr.bf16.mxu0 %v1749
        %2244 = vmatpush1.bf16.msra.mxu0 %v1748
        %2245 = vmatprep.subr.bf16.mxu0 %v1753
        %2246 = vmatpush1.bf16.msra.mxu0 %v1752
        %2247 = vmatprep.subr.bf16.mxu0 %v1757
        %2248 = vmatpush1.bf16.msra.mxu0 %v1756
        %2249 = vmatprep.subr.bf16.mxu0 %v1761
        %2250 = vmatpush1.bf16.msra.mxu0 %v1760
        %2251 = vmatprep.subr.bf16.mxu0 %v1765
        %2252 = vmatpush1.bf16.msra.mxu0 %v1764
        %2253 = vmatprep.subr.bf16.mxu0 %v1769
        %2254 = vmatpush1.bf16.msra.mxu0 %v1768
        %2255 = vmatprep.mubr.bf16.mxu0 %v893
        %2256 = vmatmul.mubr.bf16.gmra.mrb[0].mxu0 %v892
        %v2257 = vpop.f32.mrb[0].mxu0
        %v2258 = vadd.f32 %v2145, %v2257
        %v2259 = vpop.f32.mrb[0].mxu0
        %v2260 = vadd.f32 %v2147, %v2259
        %v2261 = vpop.f32.mrb[0].mxu0
        %v2262 = vadd.f32 %v2149, %v2261
        %v2263 = vpop.f32.mrb[0].mxu0
        %v2264 = vadd.f32 %v2151, %v2263
        %2265 = vmatprep.mubr.bf16.mxu0 %v900
        %2266 = vmatmul.mubr.bf16.gmra.mrb[0].mxu0 %v899
        %v2267 = vpop.f32.mrb[0].mxu0
        %v2268 = vadd.f32 %v2155, %v2267
        %v2269 = vpop.f32.mrb[0].mxu0
        %v2270 = vadd.f32 %v2157, %v2269
        %v2271 = vpop.f32.mrb[0].mxu0
        %v2272 = vadd.f32 %v2159, %v2271
        %v2273 = vpop.f32.mrb[0].mxu0
        %v2274 = vadd.f32 %v2161, %v2273
        %2275 = vmatprep.mubr.bf16.mxu0 %v907
        %2276 = vmatmul.mubr.bf16.gmra.mrb[0].mxu0 %v906
        %v2277 = vpop.f32.mrb[0].mxu0
        %v2278 = vadd.f32 %v2165, %v2277
        %v2279 = vpop.f32.mrb[0].mxu0
        %v2280 = vadd.f32 %v2167, %v2279
        %v2281 = vpop.f32.mrb[0].mxu0
        %v2282 = vadd.f32 %v2169, %v2281
        %v2283 = vpop.f32.mrb[0].mxu0
        %v2284 = vadd.f32 %v2171, %v2283
        %2285 = vmatprep.mubr.bf16.mxu0 %v914
        %2286 = vmatmul.mubr.bf16.gmra.mrb[0].mxu0 %v913
        %v2287 = vpop.f32.mrb[0].mxu0
        %v2288 = vadd.f32 %v2175, %v2287
        %v2289 = vpop.f32.mrb[0].mxu0
        %v2290 = vadd.f32 %v2177, %v2289
        %v2291 = vpop.f32.mrb[0].mxu0
        %v2292 = vadd.f32 %v2179, %v2291
        %v2293 = vpop.f32.mrb[0].mxu0
        %v2294 = vadd.f32 %v2181, %v2293
        %2295 = vmatprep.mubr.bf16.mxu0 %v921
        %2296 = vmatmul.mubr.bf16.gmra.mrb[0].mxu0 %v920
        %v2297 = vpop.f32.mrb[0].mxu0
        %v2298 = vadd.f32 %v2185, %v2297
        %v2299 = vpop.f32.mrb[0].mxu0
        %v2300 = vadd.f32 %v2187, %v2299
        %v2301 = vpop.f32.mrb[0].mxu0
        %v2302 = vadd.f32 %v2189, %v2301
        %v2303 = vpop.f32.mrb[0].mxu0
        %v2304 = vadd.f32 %v2191, %v2303
        %2305 = vmatprep.mubr.bf16.mxu0 %v928
        %2306 = vmatmul.mubr.bf16.gmra.mrb[0].mxu0 %v927
        %v2307 = vpop.f32.mrb[0].mxu0
        %v2308 = vadd.f32 %v2195, %v2307
        %v2309 = vpop.f32.mrb[0].mxu0
        %v2310 = vadd.f32 %v2197, %v2309
        %v2311 = vpop.f32.mrb[0].mxu0
        %v2312 = vadd.f32 %v2199, %v2311
        %v2313 = vpop.f32.mrb[0].mxu0
        %v2314 = vadd.f32 %v2201, %v2313
        %2315 = vmatprep.mubr.bf16.mxu0 %v935
        %2316 = vmatmul.mubr.bf16.gmra.mrb[0].mxu0 %v934
        %v2317 = vpop.f32.mrb[0].mxu0
        %v2318 = vadd.f32 %v2205, %v2317
        %v2319 = vpop.f32.mrb[0].mxu0
        %v2320 = vadd.f32 %v2207, %v2319
        %v2321 = vpop.f32.mrb[0].mxu0
        %v2322 = vadd.f32 %v2209, %v2321
        %v2323 = vpop.f32.mrb[0].mxu0
        %v2324 = vadd.f32 %v2211, %v2323
        %2325 = vmatprep.mubr.bf16.mxu0 %v942
        %2326 = vmatmul.mubr.bf16.gmra.mrb[0].mxu0 %v941
        %v2327 = vpop.f32.mrb[0].mxu0
        %v2328 = vadd.f32 %v2215, %v2327
        %v2329 = vpop.f32.mrb[0].mxu0
        %v2330 = vadd.f32 %v2217, %v2329
        %v2331 = vpop.f32.mrb[0].mxu0
        %v2332 = vadd.f32 %v2219, %v2331
        %v2333 = vpop.f32.mrb[0].mxu0
        %v2334 = vadd.f32 %v2221, %v2333
        %2335 = vdwg.mxu0
        %2336 = vmatprep.subr.bf16.mxu0 %v1773
        %2337 = vmatpush1.bf16.msra.mxu0 %v1772
        %2338 = vmatprep.subr.bf16.mxu0 0
        %2339 = vmatpush1.bf16.msra.mxu0 0
        %2340 = vmatprep.subr.bf16.mxu0 0
        %2341 = vmatpush1.bf16.msra.mxu0 0
        %2342 = vmatprep.subr.bf16.mxu0 0
        %2343 = vmatpush1.bf16.msra.mxu0 0
        %2344 = vmatprep.subr.bf16.mxu0 0
        %2345 = vmatpush1.bf16.msra.mxu0 0
        %2346 = vmatprep.subr.bf16.mxu0 0
        %2347 = vmatpush1.bf16.msra.mxu0 0
        %2348 = vmatprep.subr.bf16.mxu0 0
        %2349 = vmatpush1.bf16.msra.mxu0 0
        %2350 = vmatprep.subr.bf16.mxu0 0
        %2351 = vmatpush1.bf16.msra.mxu0 0
        %2352 = vmatprep.subr.bf16.mxu0 0
        %2353 = vmatpush1.bf16.msra.mxu0 0
        %2354 = vmatprep.subr.bf16.mxu0 0
        %2355 = vmatpush1.bf16.msra.mxu0 0
        %2356 = vmatprep.subr.bf16.mxu0 0
        %2357 = vmatpush1.bf16.msra.mxu0 0
        %2358 = vmatprep.subr.bf16.mxu0 0
        %2359 = vmatpush1.bf16.msra.mxu0 0
        %2360 = vmatprep.subr.bf16.mxu0 0
        %2361 = vmatpush1.bf16.msra.mxu0 0
        %2362 = vmatprep.subr.bf16.mxu0 0
        %2363 = vmatpush1.bf16.msra.mxu0 0
        %2364 = vmatprep.subr.bf16.mxu0 0
        %2365 = vmatpush1.bf16.msra.mxu0 0
        %2366 = vmatprep.subr.bf16.mxu0 0
        %2367 = vmatpush1.bf16.msra.mxu0 0
        %2368 = vmatprep.mubr.bf16.mxu0 0
        %2369 = vmatmul.mubr.bf16.gmra.mrb[0].mxu0 %v1974
        %v2370 = vpop.f32.mrb[0].mxu0
        %v2371 = vadd.f32 %v2258, %v2370
        %v2372 = vpop.f32.mrb[0].mxu0
        %v2373 = vadd.f32 %v2260, %v2372
        %v2374 = vpop.f32.mrb[0].mxu0
        %v2375 = vadd.f32 %v2262, %v2374
        %v2376 = vpop.f32.mrb[0].mxu0
        %v2377 = vadd.f32 %v2264, %v2376
        %2378 = vmatprep.mubr.bf16.mxu0 0
        %2379 = vmatmul.mubr.bf16.gmra.mrb[0].mxu0 %v1977
        %v2380 = vpop.f32.mrb[0].mxu0
        %v2381 = vadd.f32 %v2268, %v2380
        %v2382 = vpop.f32.mrb[0].mxu0
        %v2383 = vadd.f32 %v2270, %v2382
        %v2384 = vpop.f32.mrb[0].mxu0
        %v2385 = vadd.f32 %v2272, %v2384
        %v2386 = vpop.f32.mrb[0].mxu0
        %v2387 = vadd.f32 %v2274, %v2386
        %2388 = vmatprep.mubr.bf16.mxu0 0
        %2389 = vmatmul.mubr.bf16.gmra.mrb[0].mxu0 %v1980
        %v2390 = vpop.f32.mrb[0].mxu0
        %v2391 = vadd.f32 %v2278, %v2390
        %v2392 = vpop.f32.mrb[0].mxu0
        %v2393 = vadd.f32 %v2280, %v2392
        %v2394 = vpop.f32.mrb[0].mxu0
        %v2395 = vadd.f32 %v2282, %v2394
        %v2396 = vpop.f32.mrb[0].mxu0
        %v2397 = vadd.f32 %v2284, %v2396
        %2398 = vmatprep.mubr.bf16.mxu0 0
        %2399 = vmatmul.mubr.bf16.gmra.mrb[0].mxu0 %v1983
        %v2400 = vpop.f32.mrb[0].mxu0
        %v2401 = vadd.f32 %v2288, %v2400
        %v2402 = vpop.f32.mrb[0].mxu0
        %v2403 = vadd.f32 %v2290, %v2402
        %v2404 = vpop.f32.mrb[0].mxu0
        %v2405 = vadd.f32 %v2292, %v2404
        %v2406 = vpop.f32.mrb[0].mxu0
        %v2407 = vadd.f32 %v2294, %v2406
        %2408 = vmatprep.mubr.bf16.mxu0 0
        %2409 = vmatmul.mubr.bf16.gmra.mrb[0].mxu0 %v1986
        %v2410 = vpop.f32.mrb[0].mxu0
        %v2411 = vadd.f32 %v2298, %v2410
        %v2412 = vpop.f32.mrb[0].mxu0
        %v2413 = vadd.f32 %v2300, %v2412
        %v2414 = vpop.f32.mrb[0].mxu0
        %v2415 = vadd.f32 %v2302, %v2414
        %v2416 = vpop.f32.mrb[0].mxu0
        %v2417 = vadd.f32 %v2304, %v2416
        %2418 = vmatprep.mubr.bf16.mxu0 0
        %2419 = vmatmul.mubr.bf16.gmra.mrb[0].mxu0 %v1989
        %v2420 = vpop.f32.mrb[0].mxu0
        %v2421 = vadd.f32 %v2308, %v2420
        %v2422 = vpop.f32.mrb[0].mxu0
        %v2423 = vadd.f32 %v2310, %v2422
        %v2424 = vpop.f32.mrb[0].mxu0
        %v2425 = vadd.f32 %v2312, %v2424
        %v2426 = vpop.f32.mrb[0].mxu0
        %v2427 = vadd.f32 %v2314, %v2426
        %2428 = vmatprep.mubr.bf16.mxu0 0
        %2429 = vmatmul.mubr.bf16.gmra.mrb[0].mxu0 %v1992
        %v2430 = vpop.f32.mrb[0].mxu0
        %v2431 = vadd.f32 %v2318, %v2430
        %v2432 = vpop.f32.mrb[0].mxu0
        %v2433 = vadd.f32 %v2320, %v2432
        %v2434 = vpop.f32.mrb[0].mxu0
        %v2435 = vadd.f32 %v2322, %v2434
        %v2436 = vpop.f32.mrb[0].mxu0
        %v2437 = vadd.f32 %v2324, %v2436
        %2438 = vmatprep.mubr.bf16.mxu0 0
        %2439 = vmatmul.mubr.bf16.gmra.mrb[0].mxu0 %v1995
        %v2440 = vpop.f32.mrb[0].mxu0
        %v2441 = vadd.f32 %v2328, %v2440
        %v2442 = vpop.f32.mrb[0].mxu0
        %v2443 = vadd.f32 %v2330, %v2442
        %v2444 = vpop.f32.mrb[0].mxu0
        %v2445 = vadd.f32 %v2332, %v2444
        %v2446 = vpop.f32.mrb[0].mxu0
        %v2447 = vadd.f32 %v2334, %v2446
        %2448 = vdwg.mxu0
        %2449 = vmatprep.subr.bf16.mxu0 %v1583
        %2450 = vmatpush1.bf16.msra.mxu0 %v1582
        %2451 = vmatprep.subr.bf16.mxu0 %v1587
        %2452 = vmatpush1.bf16.msra.mxu0 %v1586
        %2453 = vmatprep.subr.bf16.mxu0 %v1591
        %2454 = vmatpush1.bf16.msra.mxu0 %v1590
        %2455 = vmatprep.subr.bf16.mxu0 %v1595
        %2456 = vmatpush1.bf16.msra.mxu0 %v1594
        %2457 = vmatprep.subr.bf16.mxu0 %v1599
        %2458 = vmatpush1.bf16.msra.mxu0 %v1598
        %2459 = vmatprep.subr.bf16.mxu0 %v1603
        %2460 = vmatpush1.bf16.msra.mxu0 %v1602
        %2461 = vmatprep.subr.bf16.mxu0 %v1607
        %2462 = vmatpush1.bf16.msra.mxu0 %v1606
        %2463 = vmatprep.subr.bf16.mxu0 %v1611
        %2464 = vmatpush1.bf16.msra.mxu0 %v1610
        %2465 = vmatprep.subr.bf16.mxu0 %v1615
        %2466 = vmatpush1.bf16.msra.mxu0 %v1614
        %2467 = vmatprep.subr.bf16.mxu0 %v1619
        %2468 = vmatpush1.bf16.msra.mxu0 %v1618
        %2469 = vmatprep.subr.bf16.mxu0 %v1623
        %2470 = vmatpush1.bf16.msra.mxu0 %v1622
        %2471 = vmatprep.subr.bf16.mxu0 %v1627
        %2472 = vmatpush1.bf16.msra.mxu0 %v1626
        %2473 = vmatprep.subr.bf16.mxu0 %v1631
        %2474 = vmatpush1.bf16.msra.mxu0 %v1630
        %2475 = vmatprep.subr.bf16.mxu0 %v1635
        %2476 = vmatpush1.bf16.msra.mxu0 %v1634
        %2477 = vmatprep.subr.bf16.mxu0 %v1639
        %2478 = vmatpush1.bf16.msra.mxu0 %v1638
        %2479 = vmatprep.subr.bf16.mxu0 %v1643
        %2480 = vmatpush1.bf16.msra.mxu0 %v1642
        %2481 = vmatprep.mubr.bf16.mxu0 %v889
        %2482 = vmatmul.mubr.bf16.gmra.mrb[0].mxu0 %v888
        %v2483 = vpop.f32.mrb[0].mxu0
        %v2484 = vadd.f32 %v703, %v2483
        %v2485 = vpop.f32.mrb[0].mxu0
        %v2486 = vadd.f32 %v707, %v2485
        %v2487 = vpop.f32.mrb[0].mxu0
        %v2488 = vadd.f32 %v703, %v2487
        %v2489 = vpop.f32.mrb[0].mxu0
        %v2490 = vadd.f32 %v707, %v2489
        %2491 = vmatprep.mubr.bf16.mxu0 %v896
        %2492 = vmatmul.mubr.bf16.gmra.mrb[0].mxu0 %v895
        %v2493 = vpop.f32.mrb[0].mxu0
        %v2494 = vadd.f32 %v703, %v2493
        %v2495 = vpop.f32.mrb[0].mxu0
        %v2496 = vadd.f32 %v707, %v2495
        %v2497 = vpop.f32.mrb[0].mxu0
        %v2498 = vadd.f32 %v703, %v2497
        %v2499 = vpop.f32.mrb[0].mxu0
        %v2500 = vadd.f32 %v707, %v2499
        %2501 = vmatprep.mubr.bf16.mxu0 %v903
        %2502 = vmatmul.mubr.bf16.gmra.mrb[0].mxu0 %v902
        %v2503 = vpop.f32.mrb[0].mxu0
        %v2504 = vadd.f32 %v703, %v2503
        %v2505 = vpop.f32.mrb[0].mxu0
        %v2506 = vadd.f32 %v707, %v2505
        %v2507 = vpop.f32.mrb[0].mxu0
        %v2508 = vadd.f32 %v703, %v2507
        %v2509 = vpop.f32.mrb[0].mxu0
        %v2510 = vadd.f32 %v707, %v2509
        %2511 = vmatprep.mubr.bf16.mxu0 %v910
        %2512 = vmatmul.mubr.bf16.gmra.mrb[0].mxu0 %v909
        %v2513 = vpop.f32.mrb[0].mxu0
        %v2514 = vadd.f32 %v703, %v2513
        %v2515 = vpop.f32.mrb[0].mxu0
        %v2516 = vadd.f32 %v707, %v2515
        %v2517 = vpop.f32.mrb[0].mxu0
        %v2518 = vadd.f32 %v703, %v2517
        %v2519 = vpop.f32.mrb[0].mxu0
        %v2520 = vadd.f32 %v707, %v2519
        %2521 = vmatprep.mubr.bf16.mxu0 %v917
        %2522 = vmatmul.mubr.bf16.gmra.mrb[0].mxu0 %v916
        %v2523 = vpop.f32.mrb[0].mxu0
        %v2524 = vadd.f32 %v703, %v2523
        %v2525 = vpop.f32.mrb[0].mxu0
        %v2526 = vadd.f32 %v707, %v2525
        %v2527 = vpop.f32.mrb[0].mxu0
        %v2528 = vadd.f32 %v703, %v2527
        %v2529 = vpop.f32.mrb[0].mxu0
        %v2530 = vadd.f32 %v707, %v2529
        %2531 = vmatprep.mubr.bf16.mxu0 %v924
        %2532 = vmatmul.mubr.bf16.gmra.mrb[0].mxu0 %v923
        %v2533 = vpop.f32.mrb[0].mxu0
        %v2534 = vadd.f32 %v703, %v2533
        %v2535 = vpop.f32.mrb[0].mxu0
        %v2536 = vadd.f32 %v707, %v2535
        %v2537 = vpop.f32.mrb[0].mxu0
        %v2538 = vadd.f32 %v703, %v2537
        %v2539 = vpop.f32.mrb[0].mxu0
        %v2540 = vadd.f32 %v707, %v2539
        %2541 = vmatprep.mubr.bf16.mxu0 %v931
        %2542 = vmatmul.mubr.bf16.gmra.mrb[0].mxu0 %v930
        %v2543 = vpop.f32.mrb[0].mxu0
        %v2544 = vadd.f32 %v703, %v2543
        %v2545 = vpop.f32.mrb[0].mxu0
        %v2546 = vadd.f32 %v707, %v2545
        %v2547 = vpop.f32.mrb[0].mxu0
        %v2548 = vadd.f32 %v703, %v2547
        %v2549 = vpop.f32.mrb[0].mxu0
        %v2550 = vadd.f32 %v707, %v2549
        %2551 = vmatprep.mubr.bf16.mxu0 %v938
        %2552 = vmatmul.mubr.bf16.gmra.mrb[0].mxu0 %v937
        %v2553 = vpop.f32.mrb[0].mxu0
        %v2554 = vadd.f32 %v703, %v2553
        %v2555 = vpop.f32.mrb[0].mxu0
        %v2556 = vadd.f32 %v707, %v2555
        %v2557 = vpop.f32.mrb[0].mxu0
        %v2558 = vadd.f32 %v703, %v2557
        %v2559 = vpop.f32.mrb[0].mxu0
        %v2560 = vadd.f32 %v707, %v2559
        %2561 = vdwg.mxu0
        %2562 = vmatprep.subr.bf16.mxu0 %v1647
        %2563 = vmatpush1.bf16.msra.mxu0 %v1646
        %2564 = vmatprep.subr.bf16.mxu0 %v1651
        %2565 = vmatpush1.bf16.msra.mxu0 %v1650
        %2566 = vmatprep.subr.bf16.mxu0 %v1655
        %2567 = vmatpush1.bf16.msra.mxu0 %v1654
        %2568 = vmatprep.subr.bf16.mxu0 %v1659
        %2569 = vmatpush1.bf16.msra.mxu0 %v1658
        %2570 = vmatprep.subr.bf16.mxu0 %v1663
        %2571 = vmatpush1.bf16.msra.mxu0 %v1662
        %2572 = vmatprep.subr.bf16.mxu0 %v1667
        %2573 = vmatpush1.bf16.msra.mxu0 %v1666
        %2574 = vmatprep.subr.bf16.mxu0 %v1671
        %2575 = vmatpush1.bf16.msra.mxu0 %v1670
        %2576 = vmatprep.subr.bf16.mxu0 %v1675
        %2577 = vmatpush1.bf16.msra.mxu0 %v1674
        %2578 = vmatprep.subr.bf16.mxu0 %v1679
        %2579 = vmatpush1.bf16.msra.mxu0 %v1678
        %2580 = vmatprep.subr.bf16.mxu0 %v1683
        %2581 = vmatpush1.bf16.msra.mxu0 %v1682
        %2582 = vmatprep.subr.bf16.mxu0 %v1687
        %2583 = vmatpush1.bf16.msra.mxu0 %v1686
        %2584 = vmatprep.subr.bf16.mxu0 %v1691
        %2585 = vmatpush1.bf16.msra.mxu0 %v1690
        %2586 = vmatprep.subr.bf16.mxu0 %v1695
        %2587 = vmatpush1.bf16.msra.mxu0 %v1694
        %2588 = vmatprep.subr.bf16.mxu0 %v1699
        %2589 = vmatpush1.bf16.msra.mxu0 %v1698
        %2590 = vmatprep.subr.bf16.mxu0 %v1703
        %2591 = vmatpush1.bf16.msra.mxu0 %v1702
        %2592 = vmatprep.subr.bf16.mxu0 %v1707
        %2593 = vmatpush1.bf16.msra.mxu0 %v1706
        %2594 = vmatprep.mubr.bf16.mxu0 %v891
        %2595 = vmatmul.mubr.bf16.gmra.mrb[0].mxu0 %v890
        %v2596 = vpop.f32.mrb[0].mxu0
        %v2597 = vadd.f32 %v2484, %v2596
        %v2598 = vpop.f32.mrb[0].mxu0
        %v2599 = vadd.f32 %v2486, %v2598
        %v2600 = vpop.f32.mrb[0].mxu0
        %v2601 = vadd.f32 %v2488, %v2600
        %v2602 = vpop.f32.mrb[0].mxu0
        %v2603 = vadd.f32 %v2490, %v2602
        %2604 = vmatprep.mubr.bf16.mxu0 %v898
        %2605 = vmatmul.mubr.bf16.gmra.mrb[0].mxu0 %v897
        %v2606 = vpop.f32.mrb[0].mxu0
        %v2607 = vadd.f32 %v2494, %v2606
        %v2608 = vpop.f32.mrb[0].mxu0
        %v2609 = vadd.f32 %v2496, %v2608
        %v2610 = vpop.f32.mrb[0].mxu0
        %v2611 = vadd.f32 %v2498, %v2610
        %v2612 = vpop.f32.mrb[0].mxu0
        %v2613 = vadd.f32 %v2500, %v2612
        %2614 = vmatprep.mubr.bf16.mxu0 %v905
        %2615 = vmatmul.mubr.bf16.gmra.mrb[0].mxu0 %v904
        %v2616 = vpop.f32.mrb[0].mxu0
        %v2617 = vadd.f32 %v2504, %v2616
        %v2618 = vpop.f32.mrb[0].mxu0
        %v2619 = vadd.f32 %v2506, %v2618
        %v2620 = vpop.f32.mrb[0].mxu0
        %v2621 = vadd.f32 %v2508, %v2620
        %v2622 = vpop.f32.mrb[0].mxu0
        %v2623 = vadd.f32 %v2510, %v2622
        %2624 = vmatprep.mubr.bf16.mxu0 %v912
        %2625 = vmatmul.mubr.bf16.gmra.mrb[0].mxu0 %v911
        %v2626 = vpop.f32.mrb[0].mxu0
        %v2627 = vadd.f32 %v2514, %v2626
        %v2628 = vpop.f32.mrb[0].mxu0
        %v2629 = vadd.f32 %v2516, %v2628
        %v2630 = vpop.f32.mrb[0].mxu0
        %v2631 = vadd.f32 %v2518, %v2630
        %v2632 = vpop.f32.mrb[0].mxu0
        %v2633 = vadd.f32 %v2520, %v2632
        %2634 = vmatprep.mubr.bf16.mxu0 %v919
        %2635 = vmatmul.mubr.bf16.gmra.mrb[0].mxu0 %v918
        %v2636 = vpop.f32.mrb[0].mxu0
        %v2637 = vadd.f32 %v2524, %v2636
        %v2638 = vpop.f32.mrb[0].mxu0
        %v2639 = vadd.f32 %v2526, %v2638
        %v2640 = vpop.f32.mrb[0].mxu0
        %v2641 = vadd.f32 %v2528, %v2640
        %v2642 = vpop.f32.mrb[0].mxu0
        %v2643 = vadd.f32 %v2530, %v2642
        %2644 = vmatprep.mubr.bf16.mxu0 %v926
        %2645 = vmatmul.mubr.bf16.gmra.mrb[0].mxu0 %v925
        %v2646 = vpop.f32.mrb[0].mxu0
        %v2647 = vadd.f32 %v2534, %v2646
        %v2648 = vpop.f32.mrb[0].mxu0
        %v2649 = vadd.f32 %v2536, %v2648
        %v2650 = vpop.f32.mrb[0].mxu0
        %v2651 = vadd.f32 %v2538, %v2650
        %v2652 = vpop.f32.mrb[0].mxu0
        %v2653 = vadd.f32 %v2540, %v2652
        %2654 = vmatprep.mubr.bf16.mxu0 %v933
        %2655 = vmatmul.mubr.bf16.gmra.mrb[0].mxu0 %v932
        %v2656 = vpop.f32.mrb[0].mxu0
        %v2657 = vadd.f32 %v2544, %v2656
        %v2658 = vpop.f32.mrb[0].mxu0
        %v2659 = vadd.f32 %v2546, %v2658
        %v2660 = vpop.f32.mrb[0].mxu0
        %v2661 = vadd.f32 %v2548, %v2660
        %v2662 = vpop.f32.mrb[0].mxu0
        %v2663 = vadd.f32 %v2550, %v2662
        %2664 = vmatprep.mubr.bf16.mxu0 %v940
        %2665 = vmatmul.mubr.bf16.gmra.mrb[0].mxu0 %v939
        %v2666 = vpop.f32.mrb[0].mxu0
        %v2667 = vadd.f32 %v2554, %v2666
        %v2668 = vpop.f32.mrb[0].mxu0
        %v2669 = vadd.f32 %v2556, %v2668
        %v2670 = vpop.f32.mrb[0].mxu0
        %v2671 = vadd.f32 %v2558, %v2670
        %v2672 = vpop.f32.mrb[0].mxu0
        %v2673 = vadd.f32 %v2560, %v2672
        %2674 = vdwg.mxu0
        %2675 = vmatprep.subr.bf16.mxu0 %v1711
        %2676 = vmatpush1.bf16.msra.mxu0 %v1710
        %2677 = vmatprep.subr.bf16.mxu0 %v1715
        %2678 = vmatpush1.bf16.msra.mxu0 %v1714
        %2679 = vmatprep.subr.bf16.mxu0 %v1719
        %2680 = vmatpush1.bf16.msra.mxu0 %v1718
        %2681 = vmatprep.subr.bf16.mxu0 %v1723
        %2682 = vmatpush1.bf16.msra.mxu0 %v1722
        %2683 = vmatprep.subr.bf16.mxu0 %v1727
        %2684 = vmatpush1.bf16.msra.mxu0 %v1726
        %2685 = vmatprep.subr.bf16.mxu0 %v1731
        %2686 = vmatpush1.bf16.msra.mxu0 %v1730
        %2687 = vmatprep.subr.bf16.mxu0 %v1735
        %2688 = vmatpush1.bf16.msra.mxu0 %v1734
        %2689 = vmatprep.subr.bf16.mxu0 %v1739
        %2690 = vmatpush1.bf16.msra.mxu0 %v1738
        %2691 = vmatprep.subr.bf16.mxu0 %v1743
        %2692 = vmatpush1.bf16.msra.mxu0 %v1742
        %2693 = vmatprep.subr.bf16.mxu0 %v1747
        %2694 = vmatpush1.bf16.msra.mxu0 %v1746
        %2695 = vmatprep.subr.bf16.mxu0 %v1751
        %2696 = vmatpush1.bf16.msra.mxu0 %v1750
        %2697 = vmatprep.subr.bf16.mxu0 %v1755
        %2698 = vmatpush1.bf16.msra.mxu0 %v1754
        %2699 = vmatprep.subr.bf16.mxu0 %v1759
        %2700 = vmatpush1.bf16.msra.mxu0 %v1758
        %2701 = vmatprep.subr.bf16.mxu0 %v1763
        %2702 = vmatpush1.bf16.msra.mxu0 %v1762
        %2703 = vmatprep.subr.bf16.mxu0 %v1767
        %2704 = vmatpush1.bf16.msra.mxu0 %v1766
        %2705 = vmatprep.subr.bf16.mxu0 %v1771
        %2706 = vmatpush1.bf16.msra.mxu0 %v1770
        %2707 = vmatprep.mubr.bf16.mxu0 %v893
        %2708 = vmatmul.mubr.bf16.gmra.mrb[0].mxu0 %v892
        %v2709 = vpop.f32.mrb[0].mxu0
        %v2710 = vadd.f32 %v2597, %v2709
        %v2711 = vpop.f32.mrb[0].mxu0
        %v2712 = vadd.f32 %v2599, %v2711
        %v2713 = vpop.f32.mrb[0].mxu0
        %v2714 = vadd.f32 %v2601, %v2713
        %v2715 = vpop.f32.mrb[0].mxu0
        %v2716 = vadd.f32 %v2603, %v2715
        %2717 = vmatprep.mubr.bf16.mxu0 %v900
        %2718 = vmatmul.mubr.bf16.gmra.mrb[0].mxu0 %v899
        %v2719 = vpop.f32.mrb[0].mxu0
        %v2720 = vadd.f32 %v2607, %v2719
        %v2721 = vpop.f32.mrb[0].mxu0
        %v2722 = vadd.f32 %v2609, %v2721
        %v2723 = vpop.f32.mrb[0].mxu0
        %v2724 = vadd.f32 %v2611, %v2723
        %v2725 = vpop.f32.mrb[0].mxu0
        %v2726 = vadd.f32 %v2613, %v2725
        %2727 = vmatprep.mubr.bf16.mxu0 %v907
        %2728 = vmatmul.mubr.bf16.gmra.mrb[0].mxu0 %v906
        %v2729 = vpop.f32.mrb[0].mxu0
        %v2730 = vadd.f32 %v2617, %v2729
        %v2731 = vpop.f32.mrb[0].mxu0
        %v2732 = vadd.f32 %v2619, %v2731
        %v2733 = vpop.f32.mrb[0].mxu0
        %v2734 = vadd.f32 %v2621, %v2733
        %v2735 = vpop.f32.mrb[0].mxu0
        %v2736 = vadd.f32 %v2623, %v2735
        %2737 = vmatprep.mubr.bf16.mxu0 %v914
        %2738 = vmatmul.mubr.bf16.gmra.mrb[0].mxu0 %v913
        %v2739 = vpop.f32.mrb[0].mxu0
        %v2740 = vadd.f32 %v2627, %v2739
        %v2741 = vpop.f32.mrb[0].mxu0
        %v2742 = vadd.f32 %v2629, %v2741
        %v2743 = vpop.f32.mrb[0].mxu0
        %v2744 = vadd.f32 %v2631, %v2743
        %v2745 = vpop.f32.mrb[0].mxu0
        %v2746 = vadd.f32 %v2633, %v2745
        %2747 = vmatprep.mubr.bf16.mxu0 %v921
        %2748 = vmatmul.mubr.bf16.gmra.mrb[0].mxu0 %v920
        %v2749 = vpop.f32.mrb[0].mxu0
        %v2750 = vadd.f32 %v2637, %v2749
        %v2751 = vpop.f32.mrb[0].mxu0
        %v2752 = vadd.f32 %v2639, %v2751
        %v2753 = vpop.f32.mrb[0].mxu0
        %v2754 = vadd.f32 %v2641, %v2753
        %v2755 = vpop.f32.mrb[0].mxu0
        %v2756 = vadd.f32 %v2643, %v2755
        %2757 = vmatprep.mubr.bf16.mxu0 %v928
        %2758 = vmatmul.mubr.bf16.gmra.mrb[0].mxu0 %v927
        %v2759 = vpop.f32.mrb[0].mxu0
        %v2760 = vadd.f32 %v2647, %v2759
        %v2761 = vpop.f32.mrb[0].mxu0
        %v2762 = vadd.f32 %v2649, %v2761
        %v2763 = vpop.f32.mrb[0].mxu0
        %v2764 = vadd.f32 %v2651, %v2763
        %v2765 = vpop.f32.mrb[0].mxu0
        %v2766 = vadd.f32 %v2653, %v2765
        %2767 = vmatprep.mubr.bf16.mxu0 %v935
        %2768 = vmatmul.mubr.bf16.gmra.mrb[0].mxu0 %v934
        %v2769 = vpop.f32.mrb[0].mxu0
        %v2770 = vadd.f32 %v2657, %v2769
        %v2771 = vpop.f32.mrb[0].mxu0
        %v2772 = vadd.f32 %v2659, %v2771
        %v2773 = vpop.f32.mrb[0].mxu0
        %v2774 = vadd.f32 %v2661, %v2773
        %v2775 = vpop.f32.mrb[0].mxu0
        %v2776 = vadd.f32 %v2663, %v2775
        %2777 = vmatprep.mubr.bf16.mxu0 %v942
        %2778 = vmatmul.mubr.bf16.gmra.mrb[0].mxu0 %v941
        %v2779 = vpop.f32.mrb[0].mxu0
        %v2780 = vadd.f32 %v2667, %v2779
        %v2781 = vpop.f32.mrb[0].mxu0
        %v2782 = vadd.f32 %v2669, %v2781
        %v2783 = vpop.f32.mrb[0].mxu0
        %v2784 = vadd.f32 %v2671, %v2783
        %v2785 = vpop.f32.mrb[0].mxu0
        %v2786 = vadd.f32 %v2673, %v2785
        %2787 = vdwg.mxu0
        %2788 = vmatprep.subr.bf16.mxu0 %v1775
        %2789 = vmatpush1.bf16.msra.mxu0 %v1774
        %2790 = vmatprep.subr.bf16.mxu0 0
        %2791 = vmatpush1.bf16.msra.mxu0 0
        %2792 = vmatprep.subr.bf16.mxu0 0
        %2793 = vmatpush1.bf16.msra.mxu0 0
        %2794 = vmatprep.subr.bf16.mxu0 0
        %2795 = vmatpush1.bf16.msra.mxu0 0
        %2796 = vmatprep.subr.bf16.mxu0 0
        %2797 = vmatpush1.bf16.msra.mxu0 0
        %2798 = vmatprep.subr.bf16.mxu0 0
        %2799 = vmatpush1.bf16.msra.mxu0 0
        %2800 = vmatprep.subr.bf16.mxu0 0
        %2801 = vmatpush1.bf16.msra.mxu0 0
        %2802 = vmatprep.subr.bf16.mxu0 0
        %2803 = vmatpush1.bf16.msra.mxu0 0
        %2804 = vmatprep.subr.bf16.mxu0 0
        %2805 = vmatpush1.bf16.msra.mxu0 0
        %2806 = vmatprep.subr.bf16.mxu0 0
        %2807 = vmatpush1.bf16.msra.mxu0 0
        %2808 = vmatprep.subr.bf16.mxu0 0
        %2809 = vmatpush1.bf16.msra.mxu0 0
        %2810 = vmatprep.subr.bf16.mxu0 0
        %2811 = vmatpush1.bf16.msra.mxu0 0
        %2812 = vmatprep.subr.bf16.mxu0 0
        %2813 = vmatpush1.bf16.msra.mxu0 0
        %2814 = vmatprep.subr.bf16.mxu0 0
        %2815 = vmatpush1.bf16.msra.mxu0 0
        %2816 = vmatprep.subr.bf16.mxu0 0
        %2817 = vmatpush1.bf16.msra.mxu0 0
        %2818 = vmatprep.subr.bf16.mxu0 0
        %2819 = vmatpush1.bf16.msra.mxu0 0
        %2820 = vmatprep.mubr.bf16.mxu0 0
        %2821 = vmatmul.mubr.bf16.gmra.mrb[0].mxu0 %v1974
        %v2822 = vpop.f32.mrb[0].mxu0
        %v2823 = vadd.f32 %v2710, %v2822
        %v2824 = vpop.f32.mrb[0].mxu0
        %v2825 = vadd.f32 %v2712, %v2824
        %v2826 = vpop.f32.mrb[0].mxu0
        %v2827 = vadd.f32 %v2714, %v2826
        %v2828 = vpop.f32.mrb[0].mxu0
        %v2829 = vadd.f32 %v2716, %v2828
        %2830 = vmatprep.mubr.bf16.mxu0 0
        %2831 = vmatmul.mubr.bf16.gmra.mrb[0].mxu0 %v1977
        %v2832 = vpop.f32.mrb[0].mxu0
        %v2833 = vadd.f32 %v2720, %v2832
        %v2834 = vpop.f32.mrb[0].mxu0
        %v2835 = vadd.f32 %v2722, %v2834
        %v2836 = vpop.f32.mrb[0].mxu0
        %v2837 = vadd.f32 %v2724, %v2836
        %v2838 = vpop.f32.mrb[0].mxu0
        %v2839 = vadd.f32 %v2726, %v2838
        %2840 = vmatprep.mubr.bf16.mxu0 0
        %2841 = vmatmul.mubr.bf16.gmra.mrb[0].mxu0 %v1980
        %v2842 = vpop.f32.mrb[0].mxu0
        %v2843 = vadd.f32 %v2730, %v2842
        %v2844 = vpop.f32.mrb[0].mxu0
        %v2845 = vadd.f32 %v2732, %v2844
        %v2846 = vpop.f32.mrb[0].mxu0
        %v2847 = vadd.f32 %v2734, %v2846
        %v2848 = vpop.f32.mrb[0].mxu0
        %v2849 = vadd.f32 %v2736, %v2848
        %2850 = vmatprep.mubr.bf16.mxu0 0
        %2851 = vmatmul.mubr.bf16.gmra.mrb[0].mxu0 %v1983
        %v2852 = vpop.f32.mrb[0].mxu0
        %v2853 = vadd.f32 %v2740, %v2852
        %v2854 = vpop.f32.mrb[0].mxu0
        %v2855 = vadd.f32 %v2742, %v2854
        %v2856 = vpop.f32.mrb[0].mxu0
        %v2857 = vadd.f32 %v2744, %v2856
        %v2858 = vpop.f32.mrb[0].mxu0
        %v2859 = vadd.f32 %v2746, %v2858
        %2860 = vmatprep.mubr.bf16.mxu0 0
        %2861 = vmatmul.mubr.bf16.gmra.mrb[0].mxu0 %v1986
        %v2862 = vpop.f32.mrb[0].mxu0
        %v2863 = vadd.f32 %v2750, %v2862
        %v2864 = vpop.f32.mrb[0].mxu0
        %v2865 = vadd.f32 %v2752, %v2864
        %v2866 = vpop.f32.mrb[0].mxu0
        %v2867 = vadd.f32 %v2754, %v2866
        %v2868 = vpop.f32.mrb[0].mxu0
        %v2869 = vadd.f32 %v2756, %v2868
        %2870 = vmatprep.mubr.bf16.mxu0 0
        %2871 = vmatmul.mubr.bf16.gmra.mrb[0].mxu0 %v1989
        %v2872 = vpop.f32.mrb[0].mxu0
        %v2873 = vadd.f32 %v2760, %v2872
        %v2874 = vpop.f32.mrb[0].mxu0
        %v2875 = vadd.f32 %v2762, %v2874
        %v2876 = vpop.f32.mrb[0].mxu0
        %v2877 = vadd.f32 %v2764, %v2876
        %v2878 = vpop.f32.mrb[0].mxu0
        %v2879 = vadd.f32 %v2766, %v2878
        %2880 = vmatprep.mubr.bf16.mxu0 0
        %2881 = vmatmul.mubr.bf16.gmra.mrb[0].mxu0 %v1992
        %v2882 = vpop.f32.mrb[0].mxu0
        %v2883 = vadd.f32 %v2770, %v2882
        %v2884 = vpop.f32.mrb[0].mxu0
        %v2885 = vadd.f32 %v2772, %v2884
        %v2886 = vpop.f32.mrb[0].mxu0
        %v2887 = vadd.f32 %v2774, %v2886
        %v2888 = vpop.f32.mrb[0].mxu0
        %v2889 = vadd.f32 %v2776, %v2888
        %2890 = vmatprep.mubr.bf16.mxu0 0
        %2891 = vmatmul.mubr.bf16.gmra.mrb[0].mxu0 %v1995
        %v2892 = vpop.f32.mrb[0].mxu0
        %v2893 = vadd.f32 %v2780, %v2892
        %v2894 = vpop.f32.mrb[0].mxu0
        %v2895 = vadd.f32 %v2782, %v2894
        %v2896 = vpop.f32.mrb[0].mxu0
        %v2897 = vadd.f32 %v2784, %v2896
        %v2898 = vpop.f32.mrb[0].mxu0
        %v2899 = vadd.f32 %v2786, %v2898
        %2900 = vdwg.mxu0
        %v2901 = vmax.f32 %v2371, 0.0
        %v2902 = vmax.f32 %v2373, 0.0
        %v2903 = vmax.f32 %v2823, 0.0
        %v2904 = vmax.f32 %v2825, 0.0
        %v2905 = vmax.f32 %v2375, 0.0
        %v2906 = vmax.f32 %v2377, 0.0
        %v2907 = vmax.f32 %v2827, 0.0
        %v2908 = vmax.f32 %v2829, 0.0
        %v2909 = vmax.f32 %v2381, 0.0
        %v2910 = vmax.f32 %v2383, 0.0
        %v2911 = vmax.f32 %v2833, 0.0
        %v2912 = vmax.f32 %v2835, 0.0
        %v2913 = vmax.f32 %v2385, 0.0
        %v2914 = vmax.f32 %v2387, 0.0
        %v2915 = vmax.f32 %v2837, 0.0
        %v2916 = vmax.f32 %v2839, 0.0
        %v2917 = vmax.f32 %v2391, 0.0
        %v2918 = vmax.f32 %v2393, 0.0
        %v2919 = vmax.f32 %v2843, 0.0
        %v2920 = vmax.f32 %v2845, 0.0
        %v2921 = vmax.f32 %v2395, 0.0
        %v2922 = vmax.f32 %v2397, 0.0
        %v2923 = vmax.f32 %v2847, 0.0
        %v2924 = vmax.f32 %v2849, 0.0
        %v2925 = vmax.f32 %v2401, 0.0
        %v2926 = vmax.f32 %v2403, 0.0
        %v2927 = vmax.f32 %v2853, 0.0
        %v2928 = vmax.f32 %v2855, 0.0
        %v2929 = vmax.f32 %v2405, 0.0
        %v2930 = vmax.f32 %v2407, 0.0
        %v2931 = vmax.f32 %v2857, 0.0
        %v2932 = vmax.f32 %v2859, 0.0
        %v2933 = vmax.f32 %v2411, 0.0
        %v2934 = vmax.f32 %v2413, 0.0
        %v2935 = vmax.f32 %v2863, 0.0
        %v2936 = vmax.f32 %v2865, 0.0
        %v2937 = vmax.f32 %v2415, 0.0
        %v2938 = vmax.f32 %v2417, 0.0
        %v2939 = vmax.f32 %v2867, 0.0
        %v2940 = vmax.f32 %v2869, 0.0
        %v2941 = vmax.f32 %v2421, 0.0
        %v2942 = vmax.f32 %v2423, 0.0
        %v2943 = vmax.f32 %v2873, 0.0
        %v2944 = vmax.f32 %v2875, 0.0
        %v2945 = vmax.f32 %v2425, 0.0
        %v2946 = vmax.f32 %v2427, 0.0
        %v2947 = vmax.f32 %v2877, 0.0
        %v2948 = vmax.f32 %v2879, 0.0
        %v2949 = vmax.f32 %v2431, 0.0
        %v2950 = vmax.f32 %v2433, 0.0
        %v2951 = vmax.f32 %v2883, 0.0
        %v2952 = vmax.f32 %v2885, 0.0
        %v2953 = vmax.f32 %v2435, 0.0
        %v2954 = vmax.f32 %v2437, 0.0
        %v2955 = vmax.f32 %v2887, 0.0
        %v2956 = vmax.f32 %v2889, 0.0
        %v2957 = vmax.f32 %v2441, 0.0
        %v2958 = vmax.f32 %v2443, 0.0
        %v2959 = vmax.f32 %v2893, 0.0
        %v2960 = vmax.f32 %v2895, 0.0
        %v2961 = vmax.f32 %v2445, 0.0
        %v2962 = vmax.f32 %v2447, 0.0
        %v2963 = vmax.f32 %v2897, 0.0
        %v2964 = vmax.f32 %v2899, 0.0
        %v2965 = vpack.c.bf16 %v2905, %v2901
        %v2966 = vpack.c.bf16 %v2906, %v2902
        %v2967 = vpack.c.bf16 %v2907, %v2903
        %v2968 = vpack.c.bf16 %v2908, %v2904
        %v2969 = vpack.c.bf16 %v2913, %v2909
        %v2970 = vpack.c.bf16 %v2914, %v2910
        %v2971 = vpack.c.bf16 %v2915, %v2911
        %v2972 = vpack.c.bf16 %v2916, %v2912
        %v2973 = vpack.c.bf16 %v2921, %v2917
        %v2974 = vpack.c.bf16 %v2922, %v2918
        %v2975 = vpack.c.bf16 %v2923, %v2919
        %v2976 = vpack.c.bf16 %v2924, %v2920
        %v2977 = vpack.c.bf16 %v2929, %v2925
        %v2978 = vpack.c.bf16 %v2930, %v2926
        %v2979 = vpack.c.bf16 %v2931, %v2927
        %v2980 = vpack.c.bf16 %v2932, %v2928
        %v2981 = vpack.c.bf16 %v2937, %v2933
        %v2982 = vpack.c.bf16 %v2938, %v2934
        %v2983 = vpack.c.bf16 %v2939, %v2935
        %v2984 = vpack.c.bf16 %v2940, %v2936
        %v2985 = vpack.c.bf16 %v2945, %v2941
        %v2986 = vpack.c.bf16 %v2946, %v2942
        %v2987 = vpack.c.bf16 %v2947, %v2943
        %v2988 = vpack.c.bf16 %v2948, %v2944
        %v2989 = vpack.c.bf16 %v2953, %v2949
        %v2990 = vpack.c.bf16 %v2954, %v2950
        %v2991 = vpack.c.bf16 %v2955, %v2951
        %v2992 = vpack.c.bf16 %v2956, %v2952
        %v2993 = vpack.c.bf16 %v2961, %v2957
        %v2994 = vpack.c.bf16 %v2962, %v2958
        %v2995 = vpack.c.bf16 %v2963, %v2959
        %v2996 = vpack.c.bf16 %v2964, %v2960
        %v2997 = vld [vmem:[%s4] sm:$0xff]
        %v2998 = vld [vmem:[%s4 + $0x8] sm:$0xff]
        %v2999 = vld [vmem:[%s4 + $0x10] sm:$0xff]
        %v3000 = vld [vmem:[%s4 + $0x18] sm:$0xff]
        %v3001 = vld [vmem:[%s4 + $0x20] sm:$0xff]
        %v3002 = vld [vmem:[%s4 + $0x28] sm:$0xff]
        %v3003 = vld [vmem:[%s4 + $0x30] sm:$0xff]
        %v3004 = vld [vmem:[%s4 + $0x38] sm:$0xff]
        %v3005 = vld [vmem:[%s4 + $0x40] sm:$0xff]
        %v3006 = vld [vmem:[%s4 + $0x48] sm:$0xff]
        %v3007 = vld [vmem:[%s4 + $0x50] sm:$0xff]
        %v3008 = vld [vmem:[%s4 + $0x58] sm:$0xff]
        %v3009 = vld [vmem:[%s4 + $0x60] sm:$0xff]
        %v3010 = vld [vmem:[%s4 + $0x68] sm:$0xff]
        %v3011 = vld [vmem:[%s4 + $0x70] sm:$0xff]
        %v3012 = vld [vmem:[%s4 + $0x78] sm:$0xff]
        %v3013 = vld [vmem:[%s4 + $0x80] sm:$0xff]
        %v3014 = vld [vmem:[%s4 + $0x88] sm:$0xff]
        %v3015 = vld [vmem:[%s4 + $0x90] sm:$0xff]
        %v3016 = vld [vmem:[%s4 + $0x98] sm:$0xff]
        %v3017 = vld [vmem:[%s4 + $0xa0] sm:$0xff]
        %v3018 = vld [vmem:[%s4 + $0xa8] sm:$0xff]
        %v3019 = vld [vmem:[%s4 + $0xb0] sm:$0xff]
        %v3020 = vld [vmem:[%s4 + $0xb8] sm:$0xff]
        %v3021 = vld [vmem:[%s4 + $0xc0] sm:$0xff]
        %v3022 = vld [vmem:[%s4 + $0xc8] sm:$0xff]
        %v3023 = vld [vmem:[%s4 + $0xd0] sm:$0xff]
        %v3024 = vld [vmem:[%s4 + $0xd8] sm:$0xff]
        %v3025 = vld [vmem:[%s4 + $0xe0] sm:$0xff]
        %v3026 = vld [vmem:[%s4 + $0xe8] sm:$0xff]
        %v3027 = vld [vmem:[%s4 + $0xf0] sm:$0xff]
        %v3028 = vld [vmem:[%s4 + $0xf8] sm:$0xff]
        %v3029 = vld [vmem:[%s4 + $0x100] sm:$0xff]
        %v3030 = vld [vmem:[%s4 + $0x108] sm:$0xff]
        %v3031 = vld [vmem:[%s4 + $0x110] sm:$0xff]
        %v3032 = vld [vmem:[%s4 + $0x118] sm:$0xff]
        %v3033 = vld [vmem:[%s4 + $0x120] sm:$0xff]
        %v3034 = vld [vmem:[%s4 + $0x128] sm:$0xff]
        %v3035 = vld [vmem:[%s4 + $0x130] sm:$0xff]
        %v3036 = vld [vmem:[%s4 + $0x138] sm:$0xff]
        %v3037 = vld [vmem:[%s4 + $0x140] sm:$0xff]
        %v3038 = vld [vmem:[%s4 + $0x148] sm:$0xff]
        %v3039 = vld [vmem:[%s4 + $0x150] sm:$0xff]
        %v3040 = vld [vmem:[%s4 + $0x158] sm:$0xff]
        %v3041 = vld [vmem:[%s4 + $0x160] sm:$0xff]
        %v3042 = vld [vmem:[%s4 + $0x168] sm:$0xff]
        %v3043 = vld [vmem:[%s4 + $0x170] sm:$0xff]
        %v3044 = vld [vmem:[%s4 + $0x178] sm:$0xff]
        %v3045 = vld [vmem:[%s4 + $0x180] sm:$0xff]
        %v3046 = vld [vmem:[%s4 + $0x188] sm:$0xff]
        %v3047 = vld [vmem:[%s5] sm:$0x3]
        %v3049 = vlaneseq
        %v3050 = vshrl.u32 %v3049, 7
        %v3051 = vsub.s32 0, %v3050
        %v3052 = vrot.slane %v3047, %v3051
        %v3053 = vlaneseq
        %v3054 = vshrl.u32 %v3053, 7
        %v3055 = vsub.s32 1, %v3054
        %v3056 = vrot.slane %v3047, %v3055
        %v3109 = vunpack.c.l.b16 %v2997
        %v3110 = vunpack.c.h.b16 %v2997
        %v3111 = vunpack.c.l.b16 %v2998
        %v3112 = vunpack.c.h.b16 %v2998
        %v3113 = vunpack.c.l.b16 %v2999
        %v3114 = vunpack.c.h.b16 %v2999
        %v3115 = vunpack.c.l.b16 %v3000
        %v3116 = vunpack.c.h.b16 %v3000
        %v3117 = vunpack.c.l.b16 %v3001
        %v3118 = vunpack.c.h.b16 %v3001
        %v3119 = vunpack.c.l.b16 %v3002
        %v3120 = vunpack.c.h.b16 %v3002
        %v3121 = vunpack.c.l.b16 %v3003
        %v3122 = vunpack.c.h.b16 %v3003
        %v3123 = vunpack.c.l.b16 %v3004
        %v3124 = vunpack.c.h.b16 %v3004
        %v3125 = vunpack.c.l.b16 %v3005
        %v3126 = vunpack.c.h.b16 %v3005
        %v3127 = vunpack.c.l.b16 %v3006
        %v3128 = vunpack.c.h.b16 %v3006
        %v3129 = vunpack.c.l.b16 %v3007
        %v3130 = vunpack.c.h.b16 %v3007
        %v3131 = vunpack.c.l.b16 %v3008
        %v3132 = vunpack.c.h.b16 %v3008
        %v3133 = vunpack.c.l.b16 %v3009
        %v3134 = vunpack.c.h.b16 %v3009
        %v3135 = vunpack.c.l.b16 %v3010
        %v3136 = vunpack.c.h.b16 %v3010
        %v3137 = vunpack.c.l.b16 %v3011
        %v3138 = vunpack.c.h.b16 %v3011
        %v3139 = vunpack.c.l.b16 %v3012
        %v3140 = vunpack.c.h.b16 %v3012
        %v3141 = vunpack.c.l.b16 %v3013
        %v3142 = vunpack.c.h.b16 %v3013
        %v3143 = vunpack.c.l.b16 %v3014
        %v3144 = vunpack.c.h.b16 %v3014
        %v3145 = vunpack.c.l.b16 %v3015
        %v3146 = vunpack.c.h.b16 %v3015
        %v3147 = vunpack.c.l.b16 %v3016
        %v3148 = vunpack.c.h.b16 %v3016
        %v3149 = vunpack.c.l.b16 %v3017
        %v3150 = vunpack.c.h.b16 %v3017
        %v3151 = vunpack.c.l.b16 %v3018
        %v3152 = vunpack.c.h.b16 %v3018
        %v3153 = vunpack.c.l.b16 %v3019
        %v3154 = vunpack.c.h.b16 %v3019
        %v3155 = vunpack.c.l.b16 %v3020
        %v3156 = vunpack.c.h.b16 %v3020
        %v3157 = vunpack.c.l.b16 %v3021
        %v3158 = vunpack.c.h.b16 %v3021
        %v3159 = vunpack.c.l.b16 %v3022
        %v3160 = vunpack.c.h.b16 %v3022
        %v3161 = vunpack.c.l.b16 %v3023
        %v3162 = vunpack.c.h.b16 %v3023
        %v3163 = vunpack.c.l.b16 %v3024
        %v3164 = vunpack.c.h.b16 %v3024
        %v3165 = vunpack.c.l.b16 %v3025
        %v3166 = vunpack.c.h.b16 %v3025
        %v3167 = vunpack.c.l.b16 %v3026
        %v3168 = vunpack.c.h.b16 %v3026
        %v3169 = vunpack.c.l.b16 %v3027
        %v3170 = vunpack.c.h.b16 %v3027
        %v3171 = vunpack.c.l.b16 %v3028
        %v3172 = vunpack.c.h.b16 %v3028
        %v3173 = vunpack.c.l.b16 %v3029
        %v3174 = vunpack.c.h.b16 %v3029
        %v3175 = vunpack.c.l.b16 %v3030
        %v3176 = vunpack.c.h.b16 %v3030
        %v3177 = vunpack.c.l.b16 %v3031
        %v3178 = vunpack.c.h.b16 %v3031
        %v3179 = vunpack.c.l.b16 %v3032
        %v3180 = vunpack.c.h.b16 %v3032
        %v3181 = vunpack.c.l.b16 %v3033
        %v3182 = vunpack.c.h.b16 %v3033
        %v3183 = vunpack.c.l.b16 %v3034
        %v3184 = vunpack.c.h.b16 %v3034
        %v3185 = vunpack.c.l.b16 %v3035
        %v3186 = vunpack.c.h.b16 %v3035
        %v3187 = vunpack.c.l.b16 %v3036
        %v3188 = vunpack.c.h.b16 %v3036
        %v3189 = vunpack.c.l.b16 %v3037
        %v3190 = vunpack.c.h.b16 %v3037
        %v3191 = vunpack.c.l.b16 %v3038
        %v3192 = vunpack.c.h.b16 %v3038
        %v3193 = vunpack.c.l.b16 %v3039
        %v3194 = vunpack.c.h.b16 %v3039
        %v3195 = vunpack.c.l.b16 %v3040
        %v3196 = vunpack.c.h.b16 %v3040
        %v3197 = vunpack.c.l.b16 %v3041
        %v3198 = vunpack.c.h.b16 %v3041
        %v3199 = vunpack.c.l.b16 %v3042
        %v3200 = vunpack.c.h.b16 %v3042
        %v3201 = vunpack.c.l.b16 %v3043
        %v3202 = vunpack.c.h.b16 %v3043
        %v3203 = vunpack.c.l.b16 %v3044
        %v3204 = vunpack.c.h.b16 %v3044
        %v3205 = vunpack.c.l.b16 %v3045
        %v3206 = vunpack.c.h.b16 %v3045
        %v3207 = vunpack.c.l.b16 %v3046
        %v3208 = vunpack.c.h.b16 %v3046
        %v3209 = vpack.c.b16 %v3111, %v3109
        %v3210 = vpack.c.b16 %v3112, %v3110
        %v3211 = vpack.c.b16 %v3115, %v3113
        %v3212 = vpack.c.b16 %v3116, %v3114
        %v3213 = vpack.c.b16 %v3119, %v3117
        %v3214 = vpack.c.b16 %v3120, %v3118
        %v3215 = vpack.c.b16 %v3123, %v3121
        %v3216 = vpack.c.b16 %v3124, %v3122
        %v3217 = vpack.c.b16 %v3127, %v3125
        %v3218 = vpack.c.b16 %v3128, %v3126
        %v3219 = vpack.c.b16 %v3131, %v3129
        %v3220 = vpack.c.b16 %v3132, %v3130
        %v3221 = vpack.c.b16 %v3135, %v3133
        %v3222 = vpack.c.b16 %v3136, %v3134
        %v3223 = vpack.c.b16 %v3139, %v3137
        %v3224 = vpack.c.b16 %v3140, %v3138
        %v3225 = vpack.c.b16 %v3143, %v3141
        %v3226 = vpack.c.b16 %v3144, %v3142
        %v3227 = vpack.c.b16 %v3147, %v3145
        %v3228 = vpack.c.b16 %v3148, %v3146
        %v3229 = vpack.c.b16 %v3151, %v3149
        %v3230 = vpack.c.b16 %v3152, %v3150
        %v3231 = vpack.c.b16 %v3155, %v3153
        %v3232 = vpack.c.b16 %v3156, %v3154
        %v3233 = vpack.c.b16 %v3159, %v3157
        %v3234 = vpack.c.b16 %v3160, %v3158
        %v3235 = vpack.c.b16 %v3163, %v3161
        %v3236 = vpack.c.b16 %v3164, %v3162
        %v3237 = vpack.c.b16 %v3167, %v3165
        %v3238 = vpack.c.b16 %v3168, %v3166
        %v3239 = vpack.c.b16 %v3171, %v3169
        %v3240 = vpack.c.b16 %v3172, %v3170
        %v3241 = vpack.c.b16 %v3175, %v3173
        %v3242 = vpack.c.b16 %v3176, %v3174
        %v3243 = vpack.c.b16 %v3179, %v3177
        %v3244 = vpack.c.b16 %v3180, %v3178
        %v3245 = vpack.c.b16 %v3183, %v3181
        %v3246 = vpack.c.b16 %v3184, %v3182
        %v3247 = vpack.c.b16 %v3187, %v3185
        %v3248 = vpack.c.b16 %v3188, %v3186
        %v3249 = vpack.c.b16 %v3191, %v3189
        %v3250 = vpack.c.b16 %v3192, %v3190
        %v3251 = vpack.c.b16 %v3195, %v3193
        %v3252 = vpack.c.b16 %v3196, %v3194
        %v3253 = vpack.c.b16 %v3199, %v3197
        %v3254 = vpack.c.b16 %v3200, %v3198
        %v3255 = vpack.c.b16 %v3203, %v3201
        %v3256 = vpack.c.b16 %v3204, %v3202
        %v3257 = vpack.c.b16 %v3207, %v3205
        %v3258 = vpack.c.b16 %v3208, %v3206
        %v3310 = vsel %vm1972, %v2968, 0
        %v3313 = vsel %vm1972, %v2972, 0
        %v3316 = vsel %vm1972, %v2976, 0
        %v3319 = vsel %vm1972, %v2980, 0
        %v3322 = vsel %vm1972, %v2984, 0
        %v3325 = vsel %vm1972, %v2988, 0
        %v3328 = vsel %vm1972, %v2992, 0
        %v3331 = vsel %vm1972, %v2996, 0
        %3333 = vmatprep.subr.bf16.mxu0 %v3210
        %3334 = vmatpush1.bf16.msra.mxu0 %v3209
        %3335 = vmatprep.subr.bf16.mxu0 %v3212
        %3336 = vmatpush1.bf16.msra.mxu0 %v3211
        %3337 = vmatprep.subr.bf16.mxu0 %v3214
        %3338 = vmatpush1.bf16.msra.mxu0 %v3213
        %3339 = vmatprep.subr.bf16.mxu0 %v3216
        %3340 = vmatpush1.bf16.msra.mxu0 %v3215
        %3341 = vmatprep.subr.bf16.mxu0 %v3218
        %3342 = vmatpush1.bf16.msra.mxu0 %v3217
        %3343 = vmatprep.subr.bf16.mxu0 %v3220
        %3344 = vmatpush1.bf16.msra.mxu0 %v3219
        %3345 = vmatprep.subr.bf16.mxu0 %v3222
        %3346 = vmatpush1.bf16.msra.mxu0 %v3221
        %3347 = vmatprep.subr.bf16.mxu0 %v3224
        %3348 = vmatpush1.bf16.msra.mxu0 %v3223
        %3349 = vmatprep.subr.bf16.mxu0 %v3226
        %3350 = vmatpush1.bf16.msra.mxu0 %v3225
        %3351 = vmatprep.subr.bf16.mxu0 %v3228
        %3352 = vmatpush1.bf16.msra.mxu0 %v3227
        %3353 = vmatprep.subr.bf16.mxu0 %v3230
        %3354 = vmatpush1.bf16.msra.mxu0 %v3229
        %3355 = vmatprep.subr.bf16.mxu0 %v3232
        %3356 = vmatpush1.bf16.msra.mxu0 %v3231
        %3357 = vmatprep.subr.bf16.mxu0 %v3234
        %3358 = vmatpush1.bf16.msra.mxu0 %v3233
        %3359 = vmatprep.subr.bf16.mxu0 %v3236
        %3360 = vmatpush1.bf16.msra.mxu0 %v3235
        %3361 = vmatprep.subr.bf16.mxu0 %v3238
        %3362 = vmatpush1.bf16.msra.mxu0 %v3237
        %3363 = vmatprep.subr.bf16.mxu0 %v3240
        %3364 = vmatpush1.bf16.msra.mxu0 %v3239
        %3365 = vmatprep.mubr.bf16.mxu0 %v2966
        %3366 = vmatmul.mubr.bf16.gmra.mrb[0].mxu0 %v2965
        %v3367 = vpop.f32.mrb[0].mxu0
        %v3368 = vadd.f32 %v3052, %v3367
        %v3369 = vpop.f32.mrb[0].mxu0
        %v3370 = vadd.f32 %v3056, %v3369
        %v3371 = vpop.f32.mrb[0].mxu0
        %v3372 = vadd.f32 %v3052, %v3371
        %v3373 = vpop.f32.mrb[0].mxu0
        %v3374 = vadd.f32 %v3056, %v3373
        %3375 = vmatprep.mubr.bf16.mxu0 %v2970
        %3376 = vmatmul.mubr.bf16.gmra.mrb[0].mxu0 %v2969
        %v3377 = vpop.f32.mrb[0].mxu0
        %v3378 = vadd.f32 %v3052, %v3377
        %v3379 = vpop.f32.mrb[0].mxu0
        %v3380 = vadd.f32 %v3056, %v3379
        %v3381 = vpop.f32.mrb[0].mxu0
        %v3382 = vadd.f32 %v3052, %v3381
        %v3383 = vpop.f32.mrb[0].mxu0
        %v3384 = vadd.f32 %v3056, %v3383
        %3385 = vmatprep.mubr.bf16.mxu0 %v2974
        %3386 = vmatmul.mubr.bf16.gmra.mrb[0].mxu0 %v2973
        %v3387 = vpop.f32.mrb[0].mxu0
        %v3388 = vadd.f32 %v3052, %v3387
        %v3389 = vpop.f32.mrb[0].mxu0
        %v3390 = vadd.f32 %v3056, %v3389
        %v3391 = vpop.f32.mrb[0].mxu0
        %v3392 = vadd.f32 %v3052, %v3391
        %v3393 = vpop.f32.mrb[0].mxu0
        %v3394 = vadd.f32 %v3056, %v3393
        %3395 = vmatprep.mubr.bf16.mxu0 %v2978
        %3396 = vmatmul.mubr.bf16.gmra.mrb[0].mxu0 %v2977
        %v3397 = vpop.f32.mrb[0].mxu0
        %v3398 = vadd.f32 %v3052, %v3397
        %v3399 = vpop.f32.mrb[0].mxu0
        %v3400 = vadd.f32 %v3056, %v3399
        %v3401 = vpop.f32.mrb[0].mxu0
        %v3402 = vadd.f32 %v3052, %v3401
        %v3403 = vpop.f32.mrb[0].mxu0
        %v3404 = vadd.f32 %v3056, %v3403
        %3405 = vmatprep.mubr.bf16.mxu0 %v2982
        %3406 = vmatmul.mubr.bf16.gmra.mrb[0].mxu0 %v2981
        %v3407 = vpop.f32.mrb[0].mxu0
        %v3408 = vadd.f32 %v3052, %v3407
        %v3409 = vpop.f32.mrb[0].mxu0
        %v3410 = vadd.f32 %v3056, %v3409
        %v3411 = vpop.f32.mrb[0].mxu0
        %v3412 = vadd.f32 %v3052, %v3411
        %v3413 = vpop.f32.mrb[0].mxu0
        %v3414 = vadd.f32 %v3056, %v3413
        %3415 = vmatprep.mubr.bf16.mxu0 %v2986
        %3416 = vmatmul.mubr.bf16.gmra.mrb[0].mxu0 %v2985
        %v3417 = vpop.f32.mrb[0].mxu0
        %v3418 = vadd.f32 %v3052, %v3417
        %v3419 = vpop.f32.mrb[0].mxu0
        %v3420 = vadd.f32 %v3056, %v3419
        %v3421 = vpop.f32.mrb[0].mxu0
        %v3422 = vadd.f32 %v3052, %v3421
        %v3423 = vpop.f32.mrb[0].mxu0
        %v3424 = vadd.f32 %v3056, %v3423
        %3425 = vmatprep.mubr.bf16.mxu0 %v2990
        %3426 = vmatmul.mubr.bf16.gmra.mrb[0].mxu0 %v2989
        %v3427 = vpop.f32.mrb[0].mxu0
        %v3428 = vadd.f32 %v3052, %v3427
        %v3429 = vpop.f32.mrb[0].mxu0
        %v3430 = vadd.f32 %v3056, %v3429
        %v3431 = vpop.f32.mrb[0].mxu0
        %v3432 = vadd.f32 %v3052, %v3431
        %v3433 = vpop.f32.mrb[0].mxu0
        %v3434 = vadd.f32 %v3056, %v3433
        %3435 = vmatprep.mubr.bf16.mxu0 %v2994
        %3436 = vmatmul.mubr.bf16.gmra.mrb[0].mxu0 %v2993
        %v3437 = vpop.f32.mrb[0].mxu0
        %v3438 = vadd.f32 %v3052, %v3437
        %v3439 = vpop.f32.mrb[0].mxu0
        %v3440 = vadd.f32 %v3056, %v3439
        %v3441 = vpop.f32.mrb[0].mxu0
        %v3442 = vadd.f32 %v3052, %v3441
        %v3443 = vpop.f32.mrb[0].mxu0
        %v3444 = vadd.f32 %v3056, %v3443
        %3445 = vdwg.mxu0
        %3446 = vmatprep.subr.bf16.mxu0 %v3242
        %3447 = vmatpush1.bf16.msra.mxu0 %v3241
        %3448 = vmatprep.subr.bf16.mxu0 %v3244
        %3449 = vmatpush1.bf16.msra.mxu0 %v3243
        %3450 = vmatprep.subr.bf16.mxu0 %v3246
        %3451 = vmatpush1.bf16.msra.mxu0 %v3245
        %3452 = vmatprep.subr.bf16.mxu0 %v3248
        %3453 = vmatpush1.bf16.msra.mxu0 %v3247
        %3454 = vmatprep.subr.bf16.mxu0 %v3250
        %3455 = vmatpush1.bf16.msra.mxu0 %v3249
        %3456 = vmatprep.subr.bf16.mxu0 %v3252
        %3457 = vmatpush1.bf16.msra.mxu0 %v3251
        %3458 = vmatprep.subr.bf16.mxu0 %v3254
        %3459 = vmatpush1.bf16.msra.mxu0 %v3253
        %3460 = vmatprep.subr.bf16.mxu0 %v3256
        %3461 = vmatpush1.bf16.msra.mxu0 %v3255
        %3462 = vmatprep.subr.bf16.mxu0 %v3258
        %3463 = vmatpush1.bf16.msra.mxu0 %v3257
        %3464 = vmatprep.subr.bf16.mxu0 0
        %3465 = vmatpush1.bf16.msra.mxu0 0
        %3466 = vmatprep.subr.bf16.mxu0 0
        %3467 = vmatpush1.bf16.msra.mxu0 0
        %3468 = vmatprep.subr.bf16.mxu0 0
        %3469 = vmatpush1.bf16.msra.mxu0 0
        %3470 = vmatprep.subr.bf16.mxu0 0
        %3471 = vmatpush1.bf16.msra.mxu0 0
        %3472 = vmatprep.subr.bf16.mxu0 0
        %3473 = vmatpush1.bf16.msra.mxu0 0
        %3474 = vmatprep.subr.bf16.mxu0 0
        %3475 = vmatpush1.bf16.msra.mxu0 0
        %3476 = vmatprep.subr.bf16.mxu0 0
        %3477 = vmatpush1.bf16.msra.mxu0 0
        %3478 = vmatprep.mubr.bf16.mxu0 %v3310
        %3479 = vmatmul.mubr.bf16.gmra.mrb[0].mxu0 %v2967
        %v3480 = vpop.f32.mrb[0].mxu0
        %v3481 = vadd.f32 %v3368, %v3480
        %v3482 = vpop.f32.mrb[0].mxu0
        %v3483 = vadd.f32 %v3370, %v3482
        %v3484 = vpop.f32.mrb[0].mxu0
        %v3485 = vadd.f32 %v3372, %v3484
        %v3486 = vpop.f32.mrb[0].mxu0
        %v3487 = vadd.f32 %v3374, %v3486
        %3488 = vmatprep.mubr.bf16.mxu0 %v3313
        %3489 = vmatmul.mubr.bf16.gmra.mrb[0].mxu0 %v2971
        %v3490 = vpop.f32.mrb[0].mxu0
        %v3491 = vadd.f32 %v3378, %v3490
        %v3492 = vpop.f32.mrb[0].mxu0
        %v3493 = vadd.f32 %v3380, %v3492
        %v3494 = vpop.f32.mrb[0].mxu0
        %v3495 = vadd.f32 %v3382, %v3494
        %v3496 = vpop.f32.mrb[0].mxu0
        %v3497 = vadd.f32 %v3384, %v3496
        %3498 = vmatprep.mubr.bf16.mxu0 %v3316
        %3499 = vmatmul.mubr.bf16.gmra.mrb[0].mxu0 %v2975
        %v3500 = vpop.f32.mrb[0].mxu0
        %v3501 = vadd.f32 %v3388, %v3500
        %v3502 = vpop.f32.mrb[0].mxu0
        %v3503 = vadd.f32 %v3390, %v3502
        %v3504 = vpop.f32.mrb[0].mxu0
        %v3505 = vadd.f32 %v3392, %v3504
        %v3506 = vpop.f32.mrb[0].mxu0
        %v3507 = vadd.f32 %v3394, %v3506
        %3508 = vmatprep.mubr.bf16.mxu0 %v3319
        %3509 = vmatmul.mubr.bf16.gmra.mrb[0].mxu0 %v2979
        %v3510 = vpop.f32.mrb[0].mxu0
        %v3511 = vadd.f32 %v3398, %v3510
        %v3512 = vpop.f32.mrb[0].mxu0
        %v3513 = vadd.f32 %v3400, %v3512
        %v3514 = vpop.f32.mrb[0].mxu0
        %v3515 = vadd.f32 %v3402, %v3514
        %v3516 = vpop.f32.mrb[0].mxu0
        %v3517 = vadd.f32 %v3404, %v3516
        %3518 = vmatprep.mubr.bf16.mxu0 %v3322
        %3519 = vmatmul.mubr.bf16.gmra.mrb[0].mxu0 %v2983
        %v3520 = vpop.f32.mrb[0].mxu0
        %v3521 = vadd.f32 %v3408, %v3520
        %v3522 = vpop.f32.mrb[0].mxu0
        %v3523 = vadd.f32 %v3410, %v3522
        %v3524 = vpop.f32.mrb[0].mxu0
        %v3525 = vadd.f32 %v3412, %v3524
        %v3526 = vpop.f32.mrb[0].mxu0
        %v3527 = vadd.f32 %v3414, %v3526
        %3528 = vmatprep.mubr.bf16.mxu0 %v3325
        %3529 = vmatmul.mubr.bf16.gmra.mrb[0].mxu0 %v2987
        %v3530 = vpop.f32.mrb[0].mxu0
        %v3531 = vadd.f32 %v3418, %v3530
        %v3532 = vpop.f32.mrb[0].mxu0
        %v3533 = vadd.f32 %v3420, %v3532
        %v3534 = vpop.f32.mrb[0].mxu0
        %v3535 = vadd.f32 %v3422, %v3534
        %v3536 = vpop.f32.mrb[0].mxu0
        %v3537 = vadd.f32 %v3424, %v3536
        %3538 = vmatprep.mubr.bf16.mxu0 %v3328
        %3539 = vmatmul.mubr.bf16.gmra.mrb[0].mxu0 %v2991
        %v3540 = vpop.f32.mrb[0].mxu0
        %v3541 = vadd.f32 %v3428, %v3540
        %v3542 = vpop.f32.mrb[0].mxu0
        %v3543 = vadd.f32 %v3430, %v3542
        %v3544 = vpop.f32.mrb[0].mxu0
        %v3545 = vadd.f32 %v3432, %v3544
        %v3546 = vpop.f32.mrb[0].mxu0
        %v3547 = vadd.f32 %v3434, %v3546
        %3548 = vmatprep.mubr.bf16.mxu0 %v3331
        %3549 = vmatmul.mubr.bf16.gmra.mrb[0].mxu0 %v2995
        %v3550 = vpop.f32.mrb[0].mxu0
        %v3551 = vadd.f32 %v3438, %v3550
        %v3552 = vpop.f32.mrb[0].mxu0
        %v3553 = vadd.f32 %v3440, %v3552
        %v3554 = vpop.f32.mrb[0].mxu0
        %v3555 = vadd.f32 %v3442, %v3554
        %v3556 = vpop.f32.mrb[0].mxu0
        %v3557 = vadd.f32 %v3444, %v3556
        %3558 = vdwg.mxu0
        %3559 = vst [vmem:[%s407] sm:$0xff] %v3481
        %3560 = vst [vmem:[%s407 + $0x8] sm:$0xff] %v3483
        %3561 = vst [vmem:[%s407 + $0x10] sm:$0xff] %v3485
        %3562 = vst [vmem:[%s407 + $0x18] sm:$0xff] %v3487
        %3563 = vst [vmem:[%s407 + $0x20] sm:$0xff] %v3491
        %3564 = vst [vmem:[%s407 + $0x28] sm:$0xff] %v3493
        %3565 = vst [vmem:[%s407 + $0x30] sm:$0xff] %v3495
        %3566 = vst [vmem:[%s407 + $0x38] sm:$0xff] %v3497
        %3567 = vst [vmem:[%s407 + $0x40] sm:$0xff] %v3501
        %3568 = vst [vmem:[%s407 + $0x48] sm:$0xff] %v3503
        %3569 = vst [vmem:[%s407 + $0x50] sm:$0xff] %v3505
        %3570 = vst [vmem:[%s407 + $0x58] sm:$0xff] %v3507
        %3571 = vst [vmem:[%s407 + $0x60] sm:$0xff] %v3511
        %3572 = vst [vmem:[%s407 + $0x68] sm:$0xff] %v3513
        %3573 = vst [vmem:[%s407 + $0x70] sm:$0xff] %v3515
        %3574 = vst [vmem:[%s407 + $0x78] sm:$0xff] %v3517
        %3575 = vst [vmem:[%s407 + $0x80] sm:$0xff] %v3521
        %3576 = vst [vmem:[%s407 + $0x88] sm:$0xff] %v3523
        %3577 = vst [vmem:[%s407 + $0x90] sm:$0xff] %v3525
        %3578 = vst [vmem:[%s407 + $0x98] sm:$0xff] %v3527
        %3579 = vst [vmem:[%s407 + $0xa0] sm:$0xff] %v3531
        %3580 = vst [vmem:[%s407 + $0xa8] sm:$0xff] %v3533
        %3581 = vst [vmem:[%s407 + $0xb0] sm:$0xff] %v3535
        %3582 = vst [vmem:[%s407 + $0xb8] sm:$0xff] %v3537
        %3583 = vst [vmem:[%s407 + $0xc0] sm:$0xff] %v3541
        %3584 = vst [vmem:[%s407 + $0xc8] sm:$0xff] %v3543
        %3585 = vst [vmem:[%s407 + $0xd0] sm:$0xff] %v3545
        %3586 = vst [vmem:[%s407 + $0xd8] sm:$0xff] %v3547
        %3587 = vst [vmem:[%s407 + $0xe0] sm:$0xff] %v3551
        %3588 = vst [vmem:[%s407 + $0xe8] sm:$0xff] %v3553
        %3589 = vst [vmem:[%s407 + $0xf0] sm:$0xff] %v3555
        %3590 = vst [vmem:[%s407 + $0xf8] sm:$0xff] %v3557
        %v3591 = vld [vmem:[%s419] sm:$0xff]
        %v3592 = vld [vmem:[%s419 + $0x8] sm:$0xff]
        %v3593 = vld [vmem:[%s419 + $0x10] sm:$0xff]
        %v3594 = vld [vmem:[%s419 + $0x18] sm:$0xff]
        %v3595 = vld [vmem:[%s419 + $0x20] sm:$0xff]
        %v3596 = vld [vmem:[%s419 + $0x28] sm:$0xff]
        %v3597 = vld [vmem:[%s419 + $0x30] sm:$0xff]
        %v3598 = vld [vmem:[%s419 + $0x38] sm:$0xff]
        %v3599 = vld [vmem:[%s419 + $0x40] sm:$0xff]
        %v3600 = vld [vmem:[%s419 + $0x48] sm:$0xff]
        %v3601 = vld [vmem:[%s419 + $0x50] sm:$0xff]
        %v3602 = vld [vmem:[%s419 + $0x58] sm:$0xff]
        %v3603 = vld [vmem:[%s419 + $0x60] sm:$0xff]
        %v3604 = vld [vmem:[%s419 + $0x68] sm:$0xff]
        %v3605 = vld [vmem:[%s419 + $0x70] sm:$0xff]
        %v3606 = vld [vmem:[%s419 + $0x78] sm:$0xff]
        %v3607 = vmul.f32 %v3483, 0.5
        %v3608 = vmul.f32 %v3487, 0.5
        %v3609 = vmul.f32 %v3493, 0.5
        %v3610 = vmul.f32 %v3497, 0.5
        %v3611 = vmul.f32 %v3503, 0.5
        %v3612 = vmul.f32 %v3507, 0.5
        %v3613 = vmul.f32 %v3513, 0.5
        %v3614 = vmul.f32 %v3517, 0.5
        %v3615 = vmul.f32 %v3523, 0.5
        %v3616 = vmul.f32 %v3527, 0.5
        %v3617 = vmul.f32 %v3533, 0.5
        %v3618 = vmul.f32 %v3537, 0.5
        %v3619 = vmul.f32 %v3543, 0.5
        %v3620 = vmul.f32 %v3547, 0.5
        %v3621 = vmul.f32 %v3553, 0.5
        %v3622 = vmul.f32 %v3557, 0.5
        %v3623 = vmul.f32 %v3607, 1.442695
        %v3624 = vpow.pop %v3623
        %v3625 = vmul.f32 %v3608, 1.442695
        %v3626 = vpow.pop %v3625
        %v3627 = vmul.f32 %v3609, 1.442695
        %v3628 = vpow.pop %v3627
        %v3629 = vmul.f32 %v3610, 1.442695
        %v3630 = vpow.pop %v3629
        %v3631 = vmul.f32 %v3611, 1.442695
        %v3632 = vpow.pop %v3631
        %v3633 = vmul.f32 %v3612, 1.442695
        %v3634 = vpow.pop %v3633
        %v3635 = vmul.f32 %v3613, 1.442695
        %v3636 = vpow.pop %v3635
        %v3637 = vmul.f32 %v3614, 1.442695
        %v3638 = vpow.pop %v3637
        %v3639 = vmul.f32 %v3615, 1.442695
        %v3640 = vpow.pop %v3639
        %v3641 = vmul.f32 %v3616, 1.442695
        %v3642 = vpow.pop %v3641
        %v3643 = vmul.f32 %v3617, 1.442695
        %v3644 = vpow.pop %v3643
        %v3645 = vmul.f32 %v3618, 1.442695
        %v3646 = vpow.pop %v3645
        %v3647 = vmul.f32 %v3619, 1.442695
        %v3648 = vpow.pop %v3647
        %v3649 = vmul.f32 %v3620, 1.442695
        %v3650 = vpow.pop %v3649
        %v3651 = vmul.f32 %v3621, 1.442695
        %v3652 = vpow.pop %v3651
        %v3653 = vmul.f32 %v3622, 1.442695
        %v3654 = vpow.pop %v3653
        %v3655 = vmul.f32 %v3591, %v3624
        %v3656 = vmul.f32 %v3592, %v3626
        %v3657 = vmul.f32 %v3593, %v3628
        %v3658 = vmul.f32 %v3594, %v3630
        %v3659 = vmul.f32 %v3595, %v3632
        %v3660 = vmul.f32 %v3596, %v3634
        %v3661 = vmul.f32 %v3597, %v3636
        %v3662 = vmul.f32 %v3598, %v3638
        %v3663 = vmul.f32 %v3599, %v3640
        %v3664 = vmul.f32 %v3600, %v3642
        %v3665 = vmul.f32 %v3601, %v3644
        %v3666 = vmul.f32 %v3602, %v3646
        %v3667 = vmul.f32 %v3603, %v3648
        %v3668 = vmul.f32 %v3604, %v3650
        %v3669 = vmul.f32 %v3605, %v3652
        %v3670 = vmul.f32 %v3606, %v3654
        %v3671 = vadd.f32 %v3481, %v3655
        %v3672 = vadd.f32 %v3485, %v3656
        %v3673 = vadd.f32 %v3491, %v3657
        %v3674 = vadd.f32 %v3495, %v3658
        %v3675 = vadd.f32 %v3501, %v3659
        %v3676 = vadd.f32 %v3505, %v3660
        %v3677 = vadd.f32 %v3511, %v3661
        %v3678 = vadd.f32 %v3515, %v3662
        %v3679 = vadd.f32 %v3521, %v3663
        %v3680 = vadd.f32 %v3525, %v3664
        %v3681 = vadd.f32 %v3531, %v3665
        %v3682 = vadd.f32 %v3535, %v3666
        %v3683 = vadd.f32 %v3541, %v3667
        %v3684 = vadd.f32 %v3545, %v3668
        %v3685 = vadd.f32 %v3551, %v3669
        %v3686 = vadd.f32 %v3555, %v3670
        %v3687 = vpack.c.bf16 %v3672, %v3671
        %v3688 = vpack.c.bf16 %v3674, %v3673
        %v3689 = vpack.c.bf16 %v3676, %v3675
        %v3690 = vpack.c.bf16 %v3678, %v3677
        %v3691 = vpack.c.bf16 %v3680, %v3679
        %v3692 = vpack.c.bf16 %v3682, %v3681
        %v3693 = vpack.c.bf16 %v3684, %v3683
        %v3694 = vpack.c.bf16 %v3686, %v3685
        %v3695 = vld [vmem:[%s6] sm:$0xff]
        %v3696 = vld [vmem:[%s6 + $0x8] sm:$0xff]
        %v3697 = vld [vmem:[%s6 + $0x10] sm:$0xff]
        %v3698 = vld [vmem:[%s6 + $0x18] sm:$0xff]
        %v3699 = vld [vmem:[%s6 + $0x20] sm:$0xff]
        %v3700 = vld [vmem:[%s6 + $0x28] sm:$0xff]
        %v3701 = vld [vmem:[%s6 + $0x30] sm:$0xff]
        %v3702 = vld [vmem:[%s6 + $0x38] sm:$0xff]
        %v3703 = vld [vmem:[%s6 + $0x40] sm:$0xff]
        %v3704 = vld [vmem:[%s6 + $0x48] sm:$0xff]
        %v3705 = vld [vmem:[%s6 + $0x50] sm:$0xff]
        %v3706 = vld [vmem:[%s6 + $0x58] sm:$0xff]
        %v3707 = vld [vmem:[%s6 + $0x60] sm:$0xff]
        %v3708 = vld [vmem:[%s6 + $0x68] sm:$0xff]
        %v3709 = vld [vmem:[%s6 + $0x70] sm:$0xff]
        %v3710 = vld [vmem:[%s6 + $0x78] sm:$0xff]
        %v3711 = vld [vmem:[%s6 + $0x80] sm:$0xff]
        %v3712 = vld [vmem:[%s6 + $0x88] sm:$0xff]
        %v3713 = vld [vmem:[%s6 + $0x90] sm:$0xff]
        %v3714 = vld [vmem:[%s6 + $0x98] sm:$0xff]
        %v3715 = vld [vmem:[%s6 + $0xa0] sm:$0xff]
        %v3716 = vld [vmem:[%s6 + $0xa8] sm:$0xff]
        %v3717 = vld [vmem:[%s6 + $0xb0] sm:$0xff]
        %v3718 = vld [vmem:[%s6 + $0xb8] sm:$0xff]
        %v3719 = vld [vmem:[%s6 + $0xc0] sm:$0xff]
        %v3720 = vld [vmem:[%s6 + $0xc8] sm:$0xff]
        %v3721 = vld [vmem:[%s6 + $0xd0] sm:$0xff]
        %v3722 = vld [vmem:[%s6 + $0xd8] sm:$0xff]
        %v3723 = vld [vmem:[%s6 + $0xe0] sm:$0xff]
        %v3724 = vld [vmem:[%s6 + $0xe8] sm:$0xff]
        %v3725 = vld [vmem:[%s6 + $0xf0] sm:$0xff]
        %v3726 = vld [vmem:[%s6 + $0xf8] sm:$0xff]
        %v3727 = vld [vmem:[%s7] sm:$0xf]
        %v3729 = vlaneseq
        %v3730 = vshrl.u32 %v3729, 7
        %v3731 = vsub.s32 0, %v3730
        %v3732 = vrot.slane %v3727, %v3731
        %v3733 = vlaneseq
        %v3734 = vshrl.u32 %v3733, 7
        %v3735 = vsub.s32 1, %v3734
        %v3736 = vrot.slane %v3727, %v3735
        %v3737 = vlaneseq
        %v3738 = vshrl.u32 %v3737, 7
        %v3739 = vsub.s32 2, %v3738
        %v3740 = vrot.slane %v3727, %v3739
        %v3741 = vlaneseq
        %v3742 = vshrl.u32 %v3741, 7
        %v3743 = vsub.s32 3, %v3742
        %v3744 = vrot.slane %v3727, %v3743
        %v3781 = vunpack.c.l.b16 %v3695
        %v3782 = vunpack.c.h.b16 %v3695
        %v3783 = vunpack.c.l.b16 %v3696
        %v3784 = vunpack.c.h.b16 %v3696
        %v3785 = vunpack.c.l.b16 %v3697
        %v3786 = vunpack.c.h.b16 %v3697
        %v3787 = vunpack.c.l.b16 %v3698
        %v3788 = vunpack.c.h.b16 %v3698
        %v3789 = vunpack.c.l.b16 %v3699
        %v3790 = vunpack.c.h.b16 %v3699
        %v3791 = vunpack.c.l.b16 %v3700
        %v3792 = vunpack.c.h.b16 %v3700
        %v3793 = vunpack.c.l.b16 %v3701
        %v3794 = vunpack.c.h.b16 %v3701
        %v3795 = vunpack.c.l.b16 %v3702
        %v3796 = vunpack.c.h.b16 %v3702
        %v3797 = vunpack.c.l.b16 %v3703
        %v3798 = vunpack.c.h.b16 %v3703
        %v3799 = vunpack.c.l.b16 %v3704
        %v3800 = vunpack.c.h.b16 %v3704
        %v3801 = vunpack.c.l.b16 %v3705
        %v3802 = vunpack.c.h.b16 %v3705
        %v3803 = vunpack.c.l.b16 %v3706
        %v3804 = vunpack.c.h.b16 %v3706
        %v3805 = vunpack.c.l.b16 %v3707
        %v3806 = vunpack.c.h.b16 %v3707
        %v3807 = vunpack.c.l.b16 %v3708
        %v3808 = vunpack.c.h.b16 %v3708
        %v3809 = vunpack.c.l.b16 %v3709
        %v3810 = vunpack.c.h.b16 %v3709
        %v3811 = vunpack.c.l.b16 %v3710
        %v3812 = vunpack.c.h.b16 %v3710
        %v3813 = vunpack.c.l.b16 %v3711
        %v3814 = vunpack.c.h.b16 %v3711
        %v3815 = vunpack.c.l.b16 %v3712
        %v3816 = vunpack.c.h.b16 %v3712
        %v3817 = vunpack.c.l.b16 %v3713
        %v3818 = vunpack.c.h.b16 %v3713
        %v3819 = vunpack.c.l.b16 %v3714
        %v3820 = vunpack.c.h.b16 %v3714
        %v3821 = vunpack.c.l.b16 %v3715
        %v3822 = vunpack.c.h.b16 %v3715
        %v3823 = vunpack.c.l.b16 %v3716
        %v3824 = vunpack.c.h.b16 %v3716
        %v3825 = vunpack.c.l.b16 %v3717
        %v3826 = vunpack.c.h.b16 %v3717
        %v3827 = vunpack.c.l.b16 %v3718
        %v3828 = vunpack.c.h.b16 %v3718
        %v3829 = vunpack.c.l.b16 %v3719
        %v3830 = vunpack.c.h.b16 %v3719
        %v3831 = vunpack.c.l.b16 %v3720
        %v3832 = vunpack.c.h.b16 %v3720
        %v3833 = vunpack.c.l.b16 %v3721
        %v3834 = vunpack.c.h.b16 %v3721
        %v3835 = vunpack.c.l.b16 %v3722
        %v3836 = vunpack.c.h.b16 %v3722
        %v3837 = vunpack.c.l.b16 %v3723
        %v3838 = vunpack.c.h.b16 %v3723
        %v3839 = vunpack.c.l.b16 %v3724
        %v3840 = vunpack.c.h.b16 %v3724
        %v3841 = vunpack.c.l.b16 %v3725
        %v3842 = vunpack.c.h.b16 %v3725
        %v3843 = vunpack.c.l.b16 %v3726
        %v3844 = vunpack.c.h.b16 %v3726
        %v3845 = vpack.c.b16 %v3785, %v3781
        %v3846 = vpack.c.b16 %v3786, %v3782
        %v3847 = vpack.c.b16 %v3787, %v3783
        %v3848 = vpack.c.b16 %v3788, %v3784
        %v3849 = vpack.c.b16 %v3793, %v3789
        %v3850 = vpack.c.b16 %v3794, %v3790
        %v3851 = vpack.c.b16 %v3795, %v3791
        %v3852 = vpack.c.b16 %v3796, %v3792
        %v3853 = vpack.c.b16 %v3801, %v3797
        %v3854 = vpack.c.b16 %v3802, %v3798
        %v3855 = vpack.c.b16 %v3803, %v3799
        %v3856 = vpack.c.b16 %v3804, %v3800
        %v3857 = vpack.c.b16 %v3809, %v3805
        %v3858 = vpack.c.b16 %v3810, %v3806
        %v3859 = vpack.c.b16 %v3811, %v3807
        %v3860 = vpack.c.b16 %v3812, %v3808
        %v3861 = vpack.c.b16 %v3817, %v3813
        %v3862 = vpack.c.b16 %v3818, %v3814
        %v3863 = vpack.c.b16 %v3819, %v3815
        %v3864 = vpack.c.b16 %v3820, %v3816
        %v3865 = vpack.c.b16 %v3825, %v3821
        %v3866 = vpack.c.b16 %v3826, %v3822
        %v3867 = vpack.c.b16 %v3827, %v3823
        %v3868 = vpack.c.b16 %v3828, %v3824
        %v3869 = vpack.c.b16 %v3833, %v3829
        %v3870 = vpack.c.b16 %v3834, %v3830
        %v3871 = vpack.c.b16 %v3835, %v3831
        %v3872 = vpack.c.b16 %v3836, %v3832
        %v3873 = vpack.c.b16 %v3841, %v3837
        %v3874 = vpack.c.b16 %v3842, %v3838
        %v3875 = vpack.c.b16 %v3843, %v3839
        %v3876 = vpack.c.b16 %v3844, %v3840
        %3909 = vmatprep.subr.bf16.mxu0 %v3846
        %3910 = vmatpush1.bf16.msra.mxu0 %v3845
        %3911 = vmatprep.subr.bf16.mxu0 %v3850
        %3912 = vmatpush1.bf16.msra.mxu0 %v3849
        %3913 = vmatprep.subr.bf16.mxu0 %v3854
        %3914 = vmatpush1.bf16.msra.mxu0 %v3853
        %3915 = vmatprep.subr.bf16.mxu0 %v3858
        %3916 = vmatpush1.bf16.msra.mxu0 %v3857
        %3917 = vmatprep.subr.bf16.mxu0 %v3862
        %3918 = vmatpush1.bf16.msra.mxu0 %v3861
        %3919 = vmatprep.subr.bf16.mxu0 %v3866
        %3920 = vmatpush1.bf16.msra.mxu0 %v3865
        %3921 = vmatprep.subr.bf16.mxu0 %v3870
        %3922 = vmatpush1.bf16.msra.mxu0 %v3869
        %3923 = vmatprep.subr.bf16.mxu0 %v3874
        %3924 = vmatpush1.bf16.msra.mxu0 %v3873
        %3925 = vmatprep.subr.bf16.mxu0 0
        %3926 = vmatpush1.bf16.msra.mxu0 0
        %3927 = vmatprep.subr.bf16.mxu0 0
        %3928 = vmatpush1.bf16.msra.mxu0 0
        %3929 = vmatprep.subr.bf16.mxu0 0
        %3930 = vmatpush1.bf16.msra.mxu0 0
        %3931 = vmatprep.subr.bf16.mxu0 0
        %3932 = vmatpush1.bf16.msra.mxu0 0
        %3933 = vmatprep.subr.bf16.mxu0 0
        %3934 = vmatpush1.bf16.msra.mxu0 0
        %3935 = vmatprep.subr.bf16.mxu0 0
        %3936 = vmatpush1.bf16.msra.mxu0 0
        %3937 = vmatprep.subr.bf16.mxu0 0
        %3938 = vmatpush1.bf16.msra.mxu0 0
        %3939 = vmatprep.subr.bf16.mxu0 0
        %3940 = vmatpush1.bf16.msra.mxu0 0
        %3941 = vmatprep.mubr.bf16.mxu0 0
        %3942 = vmatmul.mubr.bf16.gmra.mrb[0].mxu0 %v3687
        %v3943 = vpop.f32.mrb[0].mxu0
        %v3944 = vadd.f32 %v3732, %v3943
        %v3945 = vpop.f32.mrb[0].mxu0
        %v3946 = vadd.f32 %v3736, %v3945
        %v3947 = vpop.f32.mrb[0].mxu0
        %v3948 = vadd.f32 %v3732, %v3947
        %v3949 = vpop.f32.mrb[0].mxu0
        %v3950 = vadd.f32 %v3736, %v3949
        %3951 = vmatprep.mubr.bf16.mxu0 0
        %3952 = vmatmul.mubr.bf16.gmra.mrb[0].mxu0 %v3688
        %v3953 = vpop.f32.mrb[0].mxu0
        %v3954 = vadd.f32 %v3732, %v3953
        %v3955 = vpop.f32.mrb[0].mxu0
        %v3956 = vadd.f32 %v3736, %v3955
        %v3957 = vpop.f32.mrb[0].mxu0
        %v3958 = vadd.f32 %v3732, %v3957
        %v3959 = vpop.f32.mrb[0].mxu0
        %v3960 = vadd.f32 %v3736, %v3959
        %3961 = vmatprep.mubr.bf16.mxu0 0
        %3962 = vmatmul.mubr.bf16.gmra.mrb[0].mxu0 %v3689
        %v3963 = vpop.f32.mrb[0].mxu0
        %v3964 = vadd.f32 %v3732, %v3963
        %v3965 = vpop.f32.mrb[0].mxu0
        %v3966 = vadd.f32 %v3736, %v3965
        %v3967 = vpop.f32.mrb[0].mxu0
        %v3968 = vadd.f32 %v3732, %v3967
        %v3969 = vpop.f32.mrb[0].mxu0
        %v3970 = vadd.f32 %v3736, %v3969
        %3971 = vmatprep.mubr.bf16.mxu0 0
        %3972 = vmatmul.mubr.bf16.gmra.mrb[0].mxu0 %v3690
        %v3973 = vpop.f32.mrb[0].mxu0
        %v3974 = vadd.f32 %v3732, %v3973
        %v3975 = vpop.f32.mrb[0].mxu0
        %v3976 = vadd.f32 %v3736, %v3975
        %v3977 = vpop.f32.mrb[0].mxu0
        %v3978 = vadd.f32 %v3732, %v3977
        %v3979 = vpop.f32.mrb[0].mxu0
        %v3980 = vadd.f32 %v3736, %v3979
        %3981 = vmatprep.mubr.bf16.mxu0 0
        %3982 = vmatmul.mubr.bf16.gmra.mrb[0].mxu0 %v3691
        %v3983 = vpop.f32.mrb[0].mxu0
        %v3984 = vadd.f32 %v3732, %v3983
        %v3985 = vpop.f32.mrb[0].mxu0
        %v3986 = vadd.f32 %v3736, %v3985
        %v3987 = vpop.f32.mrb[0].mxu0
        %v3988 = vadd.f32 %v3732, %v3987
        %v3989 = vpop.f32.mrb[0].mxu0
        %v3990 = vadd.f32 %v3736, %v3989
        %3991 = vmatprep.mubr.bf16.mxu0 0
        %3992 = vmatmul.mubr.bf16.gmra.mrb[0].mxu0 %v3692
        %v3993 = vpop.f32.mrb[0].mxu0
        %v3994 = vadd.f32 %v3732, %v3993
        %v3995 = vpop.f32.mrb[0].mxu0
        %v3996 = vadd.f32 %v3736, %v3995
        %v3997 = vpop.f32.mrb[0].mxu0
        %v3998 = vadd.f32 %v3732, %v3997
        %v3999 = vpop.f32.mrb[0].mxu0
        %v4000 = vadd.f32 %v3736, %v3999
        %4001 = vmatprep.mubr.bf16.mxu0 0
        %4002 = vmatmul.mubr.bf16.gmra.mrb[0].mxu0 %v3693
        %v4003 = vpop.f32.mrb[0].mxu0
        %v4004 = vadd.f32 %v3732, %v4003
        %v4005 = vpop.f32.mrb[0].mxu0
        %v4006 = vadd.f32 %v3736, %v4005
        %v4007 = vpop.f32.mrb[0].mxu0
        %v4008 = vadd.f32 %v3732, %v4007
        %v4009 = vpop.f32.mrb[0].mxu0
        %v4010 = vadd.f32 %v3736, %v4009
        %4011 = vmatprep.mubr.bf16.mxu0 0
        %4012 = vmatmul.mubr.bf16.gmra.mrb[0].mxu0 %v3694
        %v4013 = vpop.f32.mrb[0].mxu0
        %v4014 = vadd.f32 %v3732, %v4013
        %v4015 = vpop.f32.mrb[0].mxu0
        %v4016 = vadd.f32 %v3736, %v4015
        %v4017 = vpop.f32.mrb[0].mxu0
        %v4018 = vadd.f32 %v3732, %v4017
        %v4019 = vpop.f32.mrb[0].mxu0
        %v4020 = vadd.f32 %v3736, %v4019
        %4021 = vdwg.mxu0
        %4022 = vmatprep.subr.bf16.mxu0 %v3848
        %4023 = vmatpush1.bf16.msra.mxu0 %v3847
        %4024 = vmatprep.subr.bf16.mxu0 %v3852
        %4025 = vmatpush1.bf16.msra.mxu0 %v3851
        %4026 = vmatprep.subr.bf16.mxu0 %v3856
        %4027 = vmatpush1.bf16.msra.mxu0 %v3855
        %4028 = vmatprep.subr.bf16.mxu0 %v3860
        %4029 = vmatpush1.bf16.msra.mxu0 %v3859
        %4030 = vmatprep.subr.bf16.mxu0 %v3864
        %4031 = vmatpush1.bf16.msra.mxu0 %v3863
        %4032 = vmatprep.subr.bf16.mxu0 %v3868
        %4033 = vmatpush1.bf16.msra.mxu0 %v3867
        %4034 = vmatprep.subr.bf16.mxu0 %v3872
        %4035 = vmatpush1.bf16.msra.mxu0 %v3871
        %4036 = vmatprep.subr.bf16.mxu0 %v3876
        %4037 = vmatpush1.bf16.msra.mxu0 %v3875
        %4038 = vmatprep.subr.bf16.mxu0 0
        %4039 = vmatpush1.bf16.msra.mxu0 0
        %4040 = vmatprep.subr.bf16.mxu0 0
        %4041 = vmatpush1.bf16.msra.mxu0 0
        %4042 = vmatprep.subr.bf16.mxu0 0
        %4043 = vmatpush1.bf16.msra.mxu0 0
        %4044 = vmatprep.subr.bf16.mxu0 0
        %4045 = vmatpush1.bf16.msra.mxu0 0
        %4046 = vmatprep.subr.bf16.mxu0 0
        %4047 = vmatpush1.bf16.msra.mxu0 0
        %4048 = vmatprep.subr.bf16.mxu0 0
        %4049 = vmatpush1.bf16.msra.mxu0 0
        %4050 = vmatprep.subr.bf16.mxu0 0
        %4051 = vmatpush1.bf16.msra.mxu0 0
        %4052 = vmatprep.subr.bf16.mxu0 0
        %4053 = vmatpush1.bf16.msra.mxu0 0
        %4054 = vmatprep.mubr.bf16.mxu0 0
        %4055 = vmatmul.mubr.bf16.gmra.mrb[0].mxu0 %v3687
        %v4056 = vpop.f32.mrb[0].mxu0
        %v4057 = vadd.f32 %v3740, %v4056
        %v4058 = vpop.f32.mrb[0].mxu0
        %v4059 = vadd.f32 %v3744, %v4058
        %v4060 = vpop.f32.mrb[0].mxu0
        %v4061 = vadd.f32 %v3740, %v4060
        %v4062 = vpop.f32.mrb[0].mxu0
        %v4063 = vadd.f32 %v3744, %v4062
        %4064 = vmatprep.mubr.bf16.mxu0 0
        %4065 = vmatmul.mubr.bf16.gmra.mrb[0].mxu0 %v3688
        %v4066 = vpop.f32.mrb[0].mxu0
        %v4067 = vadd.f32 %v3740, %v4066
        %v4068 = vpop.f32.mrb[0].mxu0
        %v4069 = vadd.f32 %v3744, %v4068
        %v4070 = vpop.f32.mrb[0].mxu0
        %v4071 = vadd.f32 %v3740, %v4070
        %v4072 = vpop.f32.mrb[0].mxu0
        %v4073 = vadd.f32 %v3744, %v4072
        %4074 = vmatprep.mubr.bf16.mxu0 0
        %4075 = vmatmul.mubr.bf16.gmra.mrb[0].mxu0 %v3689
        %v4076 = vpop.f32.mrb[0].mxu0
        %v4077 = vadd.f32 %v3740, %v4076
        %v4078 = vpop.f32.mrb[0].mxu0
        %v4079 = vadd.f32 %v3744, %v4078
        %v4080 = vpop.f32.mrb[0].mxu0
        %v4081 = vadd.f32 %v3740, %v4080
        %v4082 = vpop.f32.mrb[0].mxu0
        %v4083 = vadd.f32 %v3744, %v4082
        %4084 = vmatprep.mubr.bf16.mxu0 0
        %4085 = vmatmul.mubr.bf16.gmra.mrb[0].mxu0 %v3690
        %v4086 = vpop.f32.mrb[0].mxu0
        %v4087 = vadd.f32 %v3740, %v4086
        %v4088 = vpop.f32.mrb[0].mxu0
        %v4089 = vadd.f32 %v3744, %v4088
        %v4090 = vpop.f32.mrb[0].mxu0
        %v4091 = vadd.f32 %v3740, %v4090
        %v4092 = vpop.f32.mrb[0].mxu0
        %v4093 = vadd.f32 %v3744, %v4092
        %4094 = vmatprep.mubr.bf16.mxu0 0
        %4095 = vmatmul.mubr.bf16.gmra.mrb[0].mxu0 %v3691
        %v4096 = vpop.f32.mrb[0].mxu0
        %v4097 = vadd.f32 %v3740, %v4096
        %v4098 = vpop.f32.mrb[0].mxu0
        %v4099 = vadd.f32 %v3744, %v4098
        %v4100 = vpop.f32.mrb[0].mxu0
        %v4101 = vadd.f32 %v3740, %v4100
        %v4102 = vpop.f32.mrb[0].mxu0
        %v4103 = vadd.f32 %v3744, %v4102
        %4104 = vmatprep.mubr.bf16.mxu0 0
        %4105 = vmatmul.mubr.bf16.gmra.mrb[0].mxu0 %v3692
        %v4106 = vpop.f32.mrb[0].mxu0
        %v4107 = vadd.f32 %v3740, %v4106
        %v4108 = vpop.f32.mrb[0].mxu0
        %v4109 = vadd.f32 %v3744, %v4108
        %v4110 = vpop.f32.mrb[0].mxu0
        %v4111 = vadd.f32 %v3740, %v4110
        %v4112 = vpop.f32.mrb[0].mxu0
        %v4113 = vadd.f32 %v3744, %v4112
        %4114 = vmatprep.mubr.bf16.mxu0 0
        %4115 = vmatmul.mubr.bf16.gmra.mrb[0].mxu0 %v3693
        %v4116 = vpop.f32.mrb[0].mxu0
        %v4117 = vadd.f32 %v3740, %v4116
        %v4118 = vpop.f32.mrb[0].mxu0
        %v4119 = vadd.f32 %v3744, %v4118
        %v4120 = vpop.f32.mrb[0].mxu0
        %v4121 = vadd.f32 %v3740, %v4120
        %v4122 = vpop.f32.mrb[0].mxu0
        %v4123 = vadd.f32 %v3744, %v4122
        %4124 = vmatprep.mubr.bf16.mxu0 0
        %4125 = vmatmul.mubr.bf16.gmra.mrb[0].mxu0 %v3694
        %v4126 = vpop.f32.mrb[0].mxu0
        %v4127 = vadd.f32 %v3740, %v4126
        %v4128 = vpop.f32.mrb[0].mxu0
        %v4129 = vadd.f32 %v3744, %v4128
        %v4130 = vpop.f32.mrb[0].mxu0
        %v4131 = vadd.f32 %v3740, %v4130
        %v4132 = vpop.f32.mrb[0].mxu0
        %v4133 = vadd.f32 %v3744, %v4132
        %4134 = vdwg.mxu0
        %v4135 = vmax.f32 %v3944, 0.0
        %v4136 = vmax.f32 %v3946, 0.0
        %v4137 = vmax.f32 %v4057, 0.0
        %v4138 = vmax.f32 %v4059, 0.0
        %v4139 = vmax.f32 %v3948, 0.0
        %v4140 = vmax.f32 %v3950, 0.0
        %v4141 = vmax.f32 %v4061, 0.0
        %v4142 = vmax.f32 %v4063, 0.0
        %v4143 = vmax.f32 %v3954, 0.0
        %v4144 = vmax.f32 %v3956, 0.0
        %v4145 = vmax.f32 %v4067, 0.0
        %v4146 = vmax.f32 %v4069, 0.0
        %v4147 = vmax.f32 %v3958, 0.0
        %v4148 = vmax.f32 %v3960, 0.0
        %v4149 = vmax.f32 %v4071, 0.0
        %v4150 = vmax.f32 %v4073, 0.0
        %v4151 = vmax.f32 %v3964, 0.0
        %v4152 = vmax.f32 %v3966, 0.0
        %v4153 = vmax.f32 %v4077, 0.0
        %v4154 = vmax.f32 %v4079, 0.0
        %v4155 = vmax.f32 %v3968, 0.0
        %v4156 = vmax.f32 %v3970, 0.0
        %v4157 = vmax.f32 %v4081, 0.0
        %v4158 = vmax.f32 %v4083, 0.0
        %v4159 = vmax.f32 %v3974, 0.0
        %v4160 = vmax.f32 %v3976, 0.0
        %v4161 = vmax.f32 %v4087, 0.0
        %v4162 = vmax.f32 %v4089, 0.0
        %v4163 = vmax.f32 %v3978, 0.0
        %v4164 = vmax.f32 %v3980, 0.0
        %v4165 = vmax.f32 %v4091, 0.0
        %v4166 = vmax.f32 %v4093, 0.0
        %v4167 = vmax.f32 %v3984, 0.0
        %v4168 = vmax.f32 %v3986, 0.0
        %v4169 = vmax.f32 %v4097, 0.0
        %v4170 = vmax.f32 %v4099, 0.0
        %v4171 = vmax.f32 %v3988, 0.0
        %v4172 = vmax.f32 %v3990, 0.0
        %v4173 = vmax.f32 %v4101, 0.0
        %v4174 = vmax.f32 %v4103, 0.0
        %v4175 = vmax.f32 %v3994, 0.0
        %v4176 = vmax.f32 %v3996, 0.0
        %v4177 = vmax.f32 %v4107, 0.0
        %v4178 = vmax.f32 %v4109, 0.0
        %v4179 = vmax.f32 %v3998, 0.0
        %v4180 = vmax.f32 %v4000, 0.0
        %v4181 = vmax.f32 %v4111, 0.0
        %v4182 = vmax.f32 %v4113, 0.0
        %v4183 = vmax.f32 %v4004, 0.0
        %v4184 = vmax.f32 %v4006, 0.0
        %v4185 = vmax.f32 %v4117, 0.0
        %v4186 = vmax.f32 %v4119, 0.0
        %v4187 = vmax.f32 %v4008, 0.0
        %v4188 = vmax.f32 %v4010, 0.0
        %v4189 = vmax.f32 %v4121, 0.0
        %v4190 = vmax.f32 %v4123, 0.0
        %v4191 = vmax.f32 %v4014, 0.0
        %v4192 = vmax.f32 %v4016, 0.0
        %v4193 = vmax.f32 %v4127, 0.0
        %v4194 = vmax.f32 %v4129, 0.0
        %v4195 = vmax.f32 %v4018, 0.0
        %v4196 = vmax.f32 %v4020, 0.0
        %v4197 = vmax.f32 %v4131, 0.0
        %v4198 = vmax.f32 %v4133, 0.0
        %v4199 = vpack.c.bf16 %v4139, %v4135
        %v4200 = vpack.c.bf16 %v4140, %v4136
        %v4201 = vpack.c.bf16 %v4141, %v4137
        %v4202 = vpack.c.bf16 %v4142, %v4138
        %v4203 = vpack.c.bf16 %v4147, %v4143
        %v4204 = vpack.c.bf16 %v4148, %v4144
        %v4205 = vpack.c.bf16 %v4149, %v4145
        %v4206 = vpack.c.bf16 %v4150, %v4146
        %v4207 = vpack.c.bf16 %v4155, %v4151
        %v4208 = vpack.c.bf16 %v4156, %v4152
        %v4209 = vpack.c.bf16 %v4157, %v4153
        %v4210 = vpack.c.bf16 %v4158, %v4154
        %v4211 = vpack.c.bf16 %v4163, %v4159
        %v4212 = vpack.c.bf16 %v4164, %v4160
        %v4213 = vpack.c.bf16 %v4165, %v4161
        %v4214 = vpack.c.bf16 %v4166, %v4162
        %v4215 = vpack.c.bf16 %v4171, %v4167
        %v4216 = vpack.c.bf16 %v4172, %v4168
        %v4217 = vpack.c.bf16 %v4173, %v4169
        %v4218 = vpack.c.bf16 %v4174, %v4170
        %v4219 = vpack.c.bf16 %v4179, %v4175
        %v4220 = vpack.c.bf16 %v4180, %v4176
        %v4221 = vpack.c.bf16 %v4181, %v4177
        %v4222 = vpack.c.bf16 %v4182, %v4178
        %v4223 = vpack.c.bf16 %v4187, %v4183
        %v4224 = vpack.c.bf16 %v4188, %v4184
        %v4225 = vpack.c.bf16 %v4189, %v4185
        %v4226 = vpack.c.bf16 %v4190, %v4186
        %v4227 = vpack.c.bf16 %v4195, %v4191
        %v4228 = vpack.c.bf16 %v4196, %v4192
        %v4229 = vpack.c.bf16 %v4197, %v4193
        %v4230 = vpack.c.bf16 %v4198, %v4194
        %v4231 = vld [vmem:[%s8] sm:$0xff]
        %v4232 = vld [vmem:[%s8 + $0x8] sm:$0xff]
        %v4233 = vld [vmem:[%s8 + $0x10] sm:$0xff]
        %v4234 = vld [vmem:[%s8 + $0x18] sm:$0xf]
        %v4235 = vld [vmem:[%s8 + $0x1c] sm:$0xff]
        %v4236 = vld [vmem:[%s8 + $0x24] sm:$0xff]
        %v4237 = vld [vmem:[%s8 + $0x2c] sm:$0xff]
        %v4238 = vld [vmem:[%s8 + $0x34] sm:$0xf]
        %v4239 = vld [vmem:[%s8 + $0x38] sm:$0xff]
        %v4240 = vld [vmem:[%s8 + $0x40] sm:$0xff]
        %v4241 = vld [vmem:[%s8 + $0x48] sm:$0xff]
        %v4242 = vld [vmem:[%s8 + $0x50] sm:$0xf]
        %v4243 = vld [vmem:[%s8 + $0x54] sm:$0xff]
        %v4244 = vld [vmem:[%s8 + $0x5c] sm:$0xff]
        %v4245 = vld [vmem:[%s8 + $0x64] sm:$0xff]
        %v4246 = vld [vmem:[%s8 + $0x6c] sm:$0xf]
        %v4247 = vld [vmem:[%s8 + $0x70] sm:$0xff]
        %v4248 = vld [vmem:[%s8 + $0x78] sm:$0xff]
        %v4249 = vld [vmem:[%s8 + $0x80] sm:$0xff]
        %v4250 = vld [vmem:[%s8 + $0x88] sm:$0xf]
        %v4251 = vld [vmem:[%s8 + $0x8c] sm:$0xff]
        %v4252 = vld [vmem:[%s8 + $0x94] sm:$0xff]
        %v4253 = vld [vmem:[%s8 + $0x9c] sm:$0xff]
        %v4254 = vld [vmem:[%s8 + $0xa4] sm:$0xf]
        %v4255 = vld [vmem:[%s8 + $0xa8] sm:$0xff]
        %v4256 = vld [vmem:[%s8 + $0xb0] sm:$0xff]
        %v4257 = vld [vmem:[%s8 + $0xb8] sm:$0xff]
        %v4258 = vld [vmem:[%s8 + $0xc0] sm:$0xf]
        %v4259 = vld [vmem:[%s8 + $0xc4] sm:$0xff]
        %v4260 = vld [vmem:[%s8 + $0xcc] sm:$0xff]
        %v4261 = vld [vmem:[%s8 + $0xd4] sm:$0xff]
        %v4262 = vld [vmem:[%s8 + $0xdc] sm:$0xf]
        %v4263 = vld [vmem:[%s8 + $0xe0] sm:$0xff]
        %v4264 = vld [vmem:[%s8 + $0xe8] sm:$0xff]
        %v4265 = vld [vmem:[%s8 + $0xf0] sm:$0xff]
        %v4266 = vld [vmem:[%s8 + $0xf8] sm:$0xf]
        %v4267 = vld [vmem:[%s8 + $0xfc] sm:$0xff]
        %v4268 = vld [vmem:[%s8 + $0x104] sm:$0xff]
        %v4269 = vld [vmem:[%s8 + $0x10c] sm:$0xff]
        %v4270 = vld [vmem:[%s8 + $0x114] sm:$0xf]
        %v4271 = vld [vmem:[%s8 + $0x118] sm:$0xff]
        %v4272 = vld [vmem:[%s8 + $0x120] sm:$0xff]
        %v4273 = vld [vmem:[%s8 + $0x128] sm:$0xff]
        %v4274 = vld [vmem:[%s8 + $0x130] sm:$0xf]
        %v4275 = vld [vmem:[%s8 + $0x134] sm:$0xff]
        %v4276 = vld [vmem:[%s8 + $0x13c] sm:$0xff]
        %v4277 = vld [vmem:[%s8 + $0x144] sm:$0xff]
        %v4278 = vld [vmem:[%s8 + $0x14c] sm:$0xf]
        %v4279 = vld [vmem:[%s8 + $0x150] sm:$0xff]
        %v4280 = vld [vmem:[%s8 + $0x158] sm:$0xff]
        %v4281 = vld [vmem:[%s8 + $0x160] sm:$0xff]
        %v4282 = vld [vmem:[%s8 + $0x168] sm:$0xf]
        %v4283 = vld [vmem:[%s8 + $0x16c] sm:$0xff]
        %v4284 = vld [vmem:[%s8 + $0x174] sm:$0xff]
        %v4285 = vld [vmem:[%s8 + $0x17c] sm:$0xff]
        %v4286 = vld [vmem:[%s8 + $0x184] sm:$0xf]
        %v4287 = vld [vmem:[%s8 + $0x188] sm:$0xff]
        %v4288 = vld [vmem:[%s8 + $0x190] sm:$0xff]
        %v4289 = vld [vmem:[%s8 + $0x198] sm:$0xff]
        %v4290 = vld [vmem:[%s8 + $0x1a0] sm:$0xf]
        %v4291 = vld [vmem:[%s8 + $0x1a4] sm:$0xff]
        %v4292 = vld [vmem:[%s8 + $0x1ac] sm:$0xff]
        %v4293 = vld [vmem:[%s8 + $0x1b4] sm:$0xff]
        %v4294 = vld [vmem:[%s8 + $0x1bc] sm:$0xf]
        %v4295 = vld [vmem:[%s8 + $0x1c0] sm:$0xff]
        %v4296 = vld [vmem:[%s8 + $0x1c8] sm:$0xff]
        %v4297 = vld [vmem:[%s8 + $0x1d0] sm:$0xff]
        %v4298 = vld [vmem:[%s8 + $0x1d8] sm:$0xf]
        %v4299 = vld [vmem:[%s8 + $0x1dc] sm:$0xff]
        %v4300 = vld [vmem:[%s8 + $0x1e4] sm:$0xff]
        %v4301 = vld [vmem:[%s8 + $0x1ec] sm:$0xff]
        %v4302 = vld [vmem:[%s8 + $0x1f4] sm:$0xf]
        %v4303 = vld [vmem:[%s8 + $0x1f8] sm:$0xff]
        %v4304 = vld [vmem:[%s8 + $0x200] sm:$0xff]
        %v4305 = vld [vmem:[%s8 + $0x208] sm:$0xff]
        %v4306 = vld [vmem:[%s8 + $0x210] sm:$0xf]
        %v4307 = vld [vmem:[%s8 + $0x214] sm:$0xff]
        %v4308 = vld [vmem:[%s8 + $0x21c] sm:$0xff]
        %v4309 = vld [vmem:[%s8 + $0x224] sm:$0xff]
        %v4310 = vld [vmem:[%s8 + $0x22c] sm:$0xf]
        %v4311 = vld [vmem:[%s8 + $0x230] sm:$0xff]
        %v4312 = vld [vmem:[%s8 + $0x238] sm:$0xff]
        %v4313 = vld [vmem:[%s8 + $0x240] sm:$0xff]
        %v4314 = vld [vmem:[%s8 + $0x248] sm:$0xf]
        %v4315 = vld [vmem:[%s8 + $0x24c] sm:$0xff]
        %v4316 = vld [vmem:[%s8 + $0x254] sm:$0xff]
        %v4317 = vld [vmem:[%s8 + $0x25c] sm:$0xff]
        %v4318 = vld [vmem:[%s8 + $0x264] sm:$0xf]
        %v4319 = vld [vmem:[%s8 + $0x268] sm:$0xff]
        %v4320 = vld [vmem:[%s8 + $0x270] sm:$0xff]
        %v4321 = vld [vmem:[%s8 + $0x278] sm:$0xff]
        %v4322 = vld [vmem:[%s8 + $0x280] sm:$0xf]
        %v4323 = vld [vmem:[%s8 + $0x284] sm:$0xff]
        %v4324 = vld [vmem:[%s8 + $0x28c] sm:$0xff]
        %v4325 = vld [vmem:[%s8 + $0x294] sm:$0xff]
        %v4326 = vld [vmem:[%s8 + $0x29c] sm:$0xf]
        %v4327 = vld [vmem:[%s8 + $0x2a0] sm:$0xff]
        %v4328 = vld [vmem:[%s8 + $0x2a8] sm:$0xff]
        %v4329 = vld [vmem:[%s8 + $0x2b0] sm:$0xff]
        %v4330 = vld [vmem:[%s8 + $0x2b8] sm:$0xf]
        %v4331 = vld [vmem:[%s8 + $0x2bc] sm:$0xff]
        %v4332 = vld [vmem:[%s8 + $0x2c4] sm:$0xff]
        %v4333 = vld [vmem:[%s8 + $0x2cc] sm:$0xff]
        %v4334 = vld [vmem:[%s8 + $0x2d4] sm:$0xf]
        %v4335 = vld [vmem:[%s8 + $0x2d8] sm:$0xff]
        %v4336 = vld [vmem:[%s8 + $0x2e0] sm:$0xff]
        %v4337 = vld [vmem:[%s8 + $0x2e8] sm:$0xff]
        %v4338 = vld [vmem:[%s8 + $0x2f0] sm:$0xf]
        %v4339 = vld [vmem:[%s8 + $0x2f4] sm:$0xff]
        %v4340 = vld [vmem:[%s8 + $0x2fc] sm:$0xff]
        %v4341 = vld [vmem:[%s8 + $0x304] sm:$0xff]
        %v4342 = vld [vmem:[%s8 + $0x30c] sm:$0xf]
        %v4343 = vld [vmem:[%s8 + $0x310] sm:$0xff]
        %v4344 = vld [vmem:[%s8 + $0x318] sm:$0xff]
        %v4345 = vld [vmem:[%s8 + $0x320] sm:$0xff]
        %v4346 = vld [vmem:[%s8 + $0x328] sm:$0xf]
        %v4347 = vld [vmem:[%s8 + $0x32c] sm:$0xff]
        %v4348 = vld [vmem:[%s8 + $0x334] sm:$0xff]
        %v4349 = vld [vmem:[%s8 + $0x33c] sm:$0xff]
        %v4350 = vld [vmem:[%s8 + $0x344] sm:$0xf]
        %v4351 = vld [vmem:[%s8 + $0x348] sm:$0xff]
        %v4352 = vld [vmem:[%s8 + $0x350] sm:$0xff]
        %v4353 = vld [vmem:[%s8 + $0x358] sm:$0xff]
        %v4354 = vld [vmem:[%s8 + $0x360] sm:$0xf]
        %v4355 = vld [vmem:[%s8 + $0x364] sm:$0xff]
        %v4356 = vld [vmem:[%s8 + $0x36c] sm:$0xff]
        %v4357 = vld [vmem:[%s8 + $0x374] sm:$0xff]
        %v4358 = vld [vmem:[%s8 + $0x37c] sm:$0xf]
        %v4359 = vld [vmem:[%s8 + $0x380] sm:$0xff]
        %v4360 = vld [vmem:[%s8 + $0x388] sm:$0xff]
        %v4361 = vld [vmem:[%s8 + $0x390] sm:$0xff]
        %v4362 = vld [vmem:[%s8 + $0x398] sm:$0xf]
        %v4363 = vld [vmem:[%s8 + $0x39c] sm:$0xff]
        %v4364 = vld [vmem:[%s8 + $0x3a4] sm:$0xff]
        %v4365 = vld [vmem:[%s8 + $0x3ac] sm:$0xff]
        %v4366 = vld [vmem:[%s8 + $0x3b4] sm:$0xf]
        %v4367 = vld [vmem:[%s8 + $0x3b8] sm:$0xff]
        %v4368 = vld [vmem:[%s8 + $0x3c0] sm:$0xff]
        %v4369 = vld [vmem:[%s8 + $0x3c8] sm:$0xff]
        %v4370 = vld [vmem:[%s8 + $0x3d0] sm:$0xf]
        %v4371 = vld [vmem:[%s8 + $0x3d4] sm:$0xff]
        %v4372 = vld [vmem:[%s8 + $0x3dc] sm:$0xff]
        %v4373 = vld [vmem:[%s8 + $0x3e4] sm:$0xff]
        %v4374 = vld [vmem:[%s8 + $0x3ec] sm:$0xf]
        %v4375 = vld [vmem:[%s8 + $0x3f0] sm:$0xff]
        %v4376 = vld [vmem:[%s8 + $0x3f8] sm:$0xff]
        %v4377 = vld [vmem:[%s8 + $0x400] sm:$0xff]
        %v4378 = vld [vmem:[%s8 + $0x408] sm:$0xf]
        %v4379 = vld [vmem:[%s8 + $0x40c] sm:$0xff]
        %v4380 = vld [vmem:[%s8 + $0x414] sm:$0xff]
        %v4381 = vld [vmem:[%s8 + $0x41c] sm:$0xff]
        %v4382 = vld [vmem:[%s8 + $0x424] sm:$0xf]
        %v4383 = vld [vmem:[%s8 + $0x428] sm:$0xff]
        %v4384 = vld [vmem:[%s8 + $0x430] sm:$0xff]
        %v4385 = vld [vmem:[%s8 + $0x438] sm:$0xff]
        %v4386 = vld [vmem:[%s8 + $0x440] sm:$0xf]
        %v4387 = vld [vmem:[%s8 + $0x444] sm:$0xff]
        %v4388 = vld [vmem:[%s8 + $0x44c] sm:$0xff]
        %v4389 = vld [vmem:[%s8 + $0x454] sm:$0xff]
        %v4390 = vld [vmem:[%s8 + $0x45c] sm:$0xf]
        %v4391 = vld [vmem:[%s8 + $0x460] sm:$0xff]
        %v4392 = vld [vmem:[%s8 + $0x468] sm:$0xff]
        %v4393 = vld [vmem:[%s8 + $0x470] sm:$0xff]
        %v4394 = vld [vmem:[%s8 + $0x478] sm:$0xf]
        %v4395 = vld [vmem:[%s8 + $0x47c] sm:$0xff]
        %v4396 = vld [vmem:[%s8 + $0x484] sm:$0xff]
        %v4397 = vld [vmem:[%s8 + $0x48c] sm:$0xff]
        %v4398 = vld [vmem:[%s8 + $0x494] sm:$0xf]
        %v4399 = vld [vmem:[%s8 + $0x498] sm:$0xff]
        %v4400 = vld [vmem:[%s8 + $0x4a0] sm:$0xff]
        %v4401 = vld [vmem:[%s8 + $0x4a8] sm:$0xff]
        %v4402 = vld [vmem:[%s8 + $0x4b0] sm:$0xf]
        %v4403 = vld [vmem:[%s8 + $0x4b4] sm:$0xff]
        %v4404 = vld [vmem:[%s8 + $0x4bc] sm:$0xff]
        %v4405 = vld [vmem:[%s8 + $0x4c4] sm:$0xff]
        %v4406 = vld [vmem:[%s8 + $0x4cc] sm:$0xf]
        %v4407 = vld [vmem:[%s8 + $0x4d0] sm:$0xff]
        %v4408 = vld [vmem:[%s8 + $0x4d8] sm:$0xff]
        %v4409 = vld [vmem:[%s8 + $0x4e0] sm:$0xff]
        %v4410 = vld [vmem:[%s8 + $0x4e8] sm:$0xf]
        %v4411 = vld [vmem:[%s8 + $0x4ec] sm:$0xff]
        %v4412 = vld [vmem:[%s8 + $0x4f4] sm:$0xff]
        %v4413 = vld [vmem:[%s8 + $0x4fc] sm:$0xff]
        %v4414 = vld [vmem:[%s8 + $0x504] sm:$0xf]
        %v4415 = vld [vmem:[%s8 + $0x508] sm:$0xff]
        %v4416 = vld [vmem:[%s8 + $0x510] sm:$0xff]
        %v4417 = vld [vmem:[%s8 + $0x518] sm:$0xff]
        %v4418 = vld [vmem:[%s8 + $0x520] sm:$0xf]
        %v4419 = vld [vmem:[%s8 + $0x524] sm:$0xff]
        %v4420 = vld [vmem:[%s8 + $0x52c] sm:$0xff]
        %v4421 = vld [vmem:[%s8 + $0x534] sm:$0xff]
        %v4422 = vld [vmem:[%s8 + $0x53c] sm:$0xf]
        %v4423 = vld [vmem:[%s8 + $0x540] sm:$0xff]
        %v4424 = vld [vmem:[%s8 + $0x548] sm:$0xff]
        %v4425 = vld [vmem:[%s8 + $0x550] sm:$0xff]
        %v4426 = vld [vmem:[%s8 + $0x558] sm:$0xf]
        %v4427 = vld [vmem:[%s8 + $0x55c] sm:$0xff]
        %v4428 = vld [vmem:[%s8 + $0x564] sm:$0xff]
        %v4429 = vld [vmem:[%s8 + $0x56c] sm:$0xff]
        %v4430 = vld [vmem:[%s8 + $0x574] sm:$0xf]
        %v4431 = vld [vmem:[%s9] sm:$0x7f]
        %v4433 = vlaneseq
        %v4434 = vshrl.u32 %v4433, 7
        %v4435 = vsub.s32 0, %v4434
        %v4436 = vrot.slane %v4431, %v4435
        %v4437 = vlaneseq
        %v4438 = vshrl.u32 %v4437, 7
        %v4439 = vsub.s32 1, %v4438
        %v4440 = vrot.slane %v4431, %v4439
        %v4441 = vlaneseq
        %v4442 = vshrl.u32 %v4441, 7
        %v4443 = vsub.s32 2, %v4442
        %v4444 = vrot.slane %v4431, %v4443
        %v4445 = vlaneseq
        %v4446 = vshrl.u32 %v4445, 7
        %v4447 = vsub.s32 3, %v4446
        %v4448 = vrot.slane %v4431, %v4447
        %v4449 = vlaneseq
        %v4450 = vshrl.u32 %v4449, 7
        %v4451 = vsub.s32 4, %v4450
        %v4452 = vrot.slane %v4431, %v4451
        %v4453 = vlaneseq
        %v4454 = vshrl.u32 %v4453, 7
        %v4455 = vsub.s32 5, %v4454
        %v4456 = vrot.slane %v4431, %v4455
        %v4457 = vlaneseq
        %v4458 = vshrl.u32 %v4457, 7
        %v4459 = vsub.s32 6, %v4458
        %v4460 = vrot.slane %v4431, %v4459
        %v4668 = vunpack.c.l.b16 %v4231
        %v4669 = vunpack.c.h.b16 %v4231
        %v4670 = vunpack.c.l.b16 %v4232
        %v4671 = vunpack.c.h.b16 %v4232
        %v4672 = vunpack.c.l.b16 %v4233
        %v4673 = vunpack.c.h.b16 %v4233
        %v4674 = vunpack.c.l.b16 %v4234
        %v4675 = vunpack.c.l.b16 %v4235
        %v4676 = vunpack.c.h.b16 %v4235
        %v4677 = vunpack.c.l.b16 %v4236
        %v4678 = vunpack.c.h.b16 %v4236
        %v4679 = vunpack.c.l.b16 %v4237
        %v4680 = vunpack.c.h.b16 %v4237
        %v4681 = vunpack.c.l.b16 %v4238
        %v4682 = vunpack.c.l.b16 %v4239
        %v4683 = vunpack.c.h.b16 %v4239
        %v4684 = vunpack.c.l.b16 %v4240
        %v4685 = vunpack.c.h.b16 %v4240
        %v4686 = vunpack.c.l.b16 %v4241
        %v4687 = vunpack.c.h.b16 %v4241
        %v4688 = vunpack.c.l.b16 %v4242
        %v4689 = vunpack.c.l.b16 %v4243
        %v4690 = vunpack.c.h.b16 %v4243
        %v4691 = vunpack.c.l.b16 %v4244
        %v4692 = vunpack.c.h.b16 %v4244
        %v4693 = vunpack.c.l.b16 %v4245
        %v4694 = vunpack.c.h.b16 %v4245
        %v4695 = vunpack.c.l.b16 %v4246
        %v4696 = vunpack.c.l.b16 %v4247
        %v4697 = vunpack.c.h.b16 %v4247
        %v4698 = vunpack.c.l.b16 %v4248
        %v4699 = vunpack.c.h.b16 %v4248
        %v4700 = vunpack.c.l.b16 %v4249
        %v4701 = vunpack.c.h.b16 %v4249
        %v4702 = vunpack.c.l.b16 %v4250
        %v4703 = vunpack.c.l.b16 %v4251
        %v4704 = vunpack.c.h.b16 %v4251
        %v4705 = vunpack.c.l.b16 %v4252
        %v4706 = vunpack.c.h.b16 %v4252
        %v4707 = vunpack.c.l.b16 %v4253
        %v4708 = vunpack.c.h.b16 %v4253
        %v4709 = vunpack.c.l.b16 %v4254
        %v4710 = vunpack.c.l.b16 %v4255
        %v4711 = vunpack.c.h.b16 %v4255
        %v4712 = vunpack.c.l.b16 %v4256
        %v4713 = vunpack.c.h.b16 %v4256
        %v4714 = vunpack.c.l.b16 %v4257
        %v4715 = vunpack.c.h.b16 %v4257
        %v4716 = vunpack.c.l.b16 %v4258
        %v4717 = vunpack.c.l.b16 %v4259
        %v4718 = vunpack.c.h.b16 %v4259
        %v4719 = vunpack.c.l.b16 %v4260
        %v4720 = vunpack.c.h.b16 %v4260
        %v4721 = vunpack.c.l.b16 %v4261
        %v4722 = vunpack.c.h.b16 %v4261
        %v4723 = vunpack.c.l.b16 %v4262
        %v4724 = vunpack.c.l.b16 %v4263
        %v4725 = vunpack.c.h.b16 %v4263
        %v4726 = vunpack.c.l.b16 %v4264
        %v4727 = vunpack.c.h.b16 %v4264
        %v4728 = vunpack.c.l.b16 %v4265
        %v4729 = vunpack.c.h.b16 %v4265
        %v4730 = vunpack.c.l.b16 %v4266
        %v4731 = vunpack.c.l.b16 %v4267
        %v4732 = vunpack.c.h.b16 %v4267
        %v4733 = vunpack.c.l.b16 %v4268
        %v4734 = vunpack.c.h.b16 %v4268
        %v4735 = vunpack.c.l.b16 %v4269
        %v4736 = vunpack.c.h.b16 %v4269
        %v4737 = vunpack.c.l.b16 %v4270
        %v4738 = vunpack.c.l.b16 %v4271
        %v4739 = vunpack.c.h.b16 %v4271
        %v4740 = vunpack.c.l.b16 %v4272
        %v4741 = vunpack.c.h.b16 %v4272
        %v4742 = vunpack.c.l.b16 %v4273
        %v4743 = vunpack.c.h.b16 %v4273
        %v4744 = vunpack.c.l.b16 %v4274
        %v4745 = vunpack.c.l.b16 %v4275
        %v4746 = vunpack.c.h.b16 %v4275
        %v4747 = vunpack.c.l.b16 %v4276
        %v4748 = vunpack.c.h.b16 %v4276
        %v4749 = vunpack.c.l.b16 %v4277
        %v4750 = vunpack.c.h.b16 %v4277
        %v4751 = vunpack.c.l.b16 %v4278
        %v4752 = vunpack.c.l.b16 %v4279
        %v4753 = vunpack.c.h.b16 %v4279
        %v4754 = vunpack.c.l.b16 %v4280
        %v4755 = vunpack.c.h.b16 %v4280
        %v4756 = vunpack.c.l.b16 %v4281
        %v4757 = vunpack.c.h.b16 %v4281
        %v4758 = vunpack.c.l.b16 %v4282
        %v4759 = vunpack.c.l.b16 %v4283
        %v4760 = vunpack.c.h.b16 %v4283
        %v4761 = vunpack.c.l.b16 %v4284
        %v4762 = vunpack.c.h.b16 %v4284
        %v4763 = vunpack.c.l.b16 %v4285
        %v4764 = vunpack.c.h.b16 %v4285
        %v4765 = vunpack.c.l.b16 %v4286
        %v4766 = vunpack.c.l.b16 %v4287
        %v4767 = vunpack.c.h.b16 %v4287
        %v4768 = vunpack.c.l.b16 %v4288
        %v4769 = vunpack.c.h.b16 %v4288
        %v4770 = vunpack.c.l.b16 %v4289
        %v4771 = vunpack.c.h.b16 %v4289
        %v4772 = vunpack.c.l.b16 %v4290
        %v4773 = vunpack.c.l.b16 %v4291
        %v4774 = vunpack.c.h.b16 %v4291
        %v4775 = vunpack.c.l.b16 %v4292
        %v4776 = vunpack.c.h.b16 %v4292
        %v4777 = vunpack.c.l.b16 %v4293
        %v4778 = vunpack.c.h.b16 %v4293
        %v4779 = vunpack.c.l.b16 %v4294
        %v4780 = vunpack.c.l.b16 %v4295
        %v4781 = vunpack.c.h.b16 %v4295
        %v4782 = vunpack.c.l.b16 %v4296
        %v4783 = vunpack.c.h.b16 %v4296
        %v4784 = vunpack.c.l.b16 %v4297
        %v4785 = vunpack.c.h.b16 %v4297
        %v4786 = vunpack.c.l.b16 %v4298
        %v4787 = vunpack.c.l.b16 %v4299
        %v4788 = vunpack.c.h.b16 %v4299
        %v4789 = vunpack.c.l.b16 %v4300
        %v4790 = vunpack.c.h.b16 %v4300
        %v4791 = vunpack.c.l.b16 %v4301
        %v4792 = vunpack.c.h.b16 %v4301
        %v4793 = vunpack.c.l.b16 %v4302
        %v4794 = vunpack.c.l.b16 %v4303
        %v4795 = vunpack.c.h.b16 %v4303
        %v4796 = vunpack.c.l.b16 %v4304
        %v4797 = vunpack.c.h.b16 %v4304
        %v4798 = vunpack.c.l.b16 %v4305
        %v4799 = vunpack.c.h.b16 %v4305
        %v4800 = vunpack.c.l.b16 %v4306
        %v4801 = vunpack.c.l.b16 %v4307
        %v4802 = vunpack.c.h.b16 %v4307
        %v4803 = vunpack.c.l.b16 %v4308
        %v4804 = vunpack.c.h.b16 %v4308
        %v4805 = vunpack.c.l.b16 %v4309
        %v4806 = vunpack.c.h.b16 %v4309
        %v4807 = vunpack.c.l.b16 %v4310
        %v4808 = vunpack.c.l.b16 %v4311
        %v4809 = vunpack.c.h.b16 %v4311
        %v4810 = vunpack.c.l.b16 %v4312
        %v4811 = vunpack.c.h.b16 %v4312
        %v4812 = vunpack.c.l.b16 %v4313
        %v4813 = vunpack.c.h.b16 %v4313
        %v4814 = vunpack.c.l.b16 %v4314
        %v4815 = vunpack.c.l.b16 %v4315
        %v4816 = vunpack.c.h.b16 %v4315
        %v4817 = vunpack.c.l.b16 %v4316
        %v4818 = vunpack.c.h.b16 %v4316
        %v4819 = vunpack.c.l.b16 %v4317
        %v4820 = vunpack.c.h.b16 %v4317
        %v4821 = vunpack.c.l.b16 %v4318
        %v4822 = vunpack.c.l.b16 %v4319
        %v4823 = vunpack.c.h.b16 %v4319
        %v4824 = vunpack.c.l.b16 %v4320
        %v4825 = vunpack.c.h.b16 %v4320
        %v4826 = vunpack.c.l.b16 %v4321
        %v4827 = vunpack.c.h.b16 %v4321
        %v4828 = vunpack.c.l.b16 %v4322
        %v4829 = vunpack.c.l.b16 %v4323
        %v4830 = vunpack.c.h.b16 %v4323
        %v4831 = vunpack.c.l.b16 %v4324
        %v4832 = vunpack.c.h.b16 %v4324
        %v4833 = vunpack.c.l.b16 %v4325
        %v4834 = vunpack.c.h.b16 %v4325
        %v4835 = vunpack.c.l.b16 %v4326
        %v4836 = vunpack.c.l.b16 %v4327
        %v4837 = vunpack.c.h.b16 %v4327
        %v4838 = vunpack.c.l.b16 %v4328
        %v4839 = vunpack.c.h.b16 %v4328
        %v4840 = vunpack.c.l.b16 %v4329
        %v4841 = vunpack.c.h.b16 %v4329
        %v4842 = vunpack.c.l.b16 %v4330
        %v4843 = vunpack.c.l.b16 %v4331
        %v4844 = vunpack.c.h.b16 %v4331
        %v4845 = vunpack.c.l.b16 %v4332
        %v4846 = vunpack.c.h.b16 %v4332
        %v4847 = vunpack.c.l.b16 %v4333
        %v4848 = vunpack.c.h.b16 %v4333
        %v4849 = vunpack.c.l.b16 %v4334
        %v4850 = vunpack.c.l.b16 %v4335
        %v4851 = vunpack.c.h.b16 %v4335
        %v4852 = vunpack.c.l.b16 %v4336
        %v4853 = vunpack.c.h.b16 %v4336
        %v4854 = vunpack.c.l.b16 %v4337
        %v4855 = vunpack.c.h.b16 %v4337
        %v4856 = vunpack.c.l.b16 %v4338
        %v4857 = vunpack.c.l.b16 %v4339
        %v4858 = vunpack.c.h.b16 %v4339
        %v4859 = vunpack.c.l.b16 %v4340
        %v4860 = vunpack.c.h.b16 %v4340
        %v4861 = vunpack.c.l.b16 %v4341
        %v4862 = vunpack.c.h.b16 %v4341
        %v4863 = vunpack.c.l.b16 %v4342
        %v4864 = vunpack.c.l.b16 %v4343
        %v4865 = vunpack.c.h.b16 %v4343
        %v4866 = vunpack.c.l.b16 %v4344
        %v4867 = vunpack.c.h.b16 %v4344
        %v4868 = vunpack.c.l.b16 %v4345
        %v4869 = vunpack.c.h.b16 %v4345
        %v4870 = vunpack.c.l.b16 %v4346
        %v4871 = vunpack.c.l.b16 %v4347
        %v4872 = vunpack.c.h.b16 %v4347
        %v4873 = vunpack.c.l.b16 %v4348
        %v4874 = vunpack.c.h.b16 %v4348
        %v4875 = vunpack.c.l.b16 %v4349
        %v4876 = vunpack.c.h.b16 %v4349
        %v4877 = vunpack.c.l.b16 %v4350
        %v4878 = vunpack.c.l.b16 %v4351
        %v4879 = vunpack.c.h.b16 %v4351
        %v4880 = vunpack.c.l.b16 %v4352
        %v4881 = vunpack.c.h.b16 %v4352
        %v4882 = vunpack.c.l.b16 %v4353
        %v4883 = vunpack.c.h.b16 %v4353
        %v4884 = vunpack.c.l.b16 %v4354
        %v4885 = vunpack.c.l.b16 %v4355
        %v4886 = vunpack.c.h.b16 %v4355
        %v4887 = vunpack.c.l.b16 %v4356
        %v4888 = vunpack.c.h.b16 %v4356
        %v4889 = vunpack.c.l.b16 %v4357
        %v4890 = vunpack.c.h.b16 %v4357
        %v4891 = vunpack.c.l.b16 %v4358
        %v4892 = vunpack.c.l.b16 %v4359
        %v4893 = vunpack.c.h.b16 %v4359
        %v4894 = vunpack.c.l.b16 %v4360
        %v4895 = vunpack.c.h.b16 %v4360
        %v4896 = vunpack.c.l.b16 %v4361
        %v4897 = vunpack.c.h.b16 %v4361
        %v4898 = vunpack.c.l.b16 %v4362
        %v4899 = vunpack.c.l.b16 %v4363
        %v4900 = vunpack.c.h.b16 %v4363
        %v4901 = vunpack.c.l.b16 %v4364
        %v4902 = vunpack.c.h.b16 %v4364
        %v4903 = vunpack.c.l.b16 %v4365
        %v4904 = vunpack.c.h.b16 %v4365
        %v4905 = vunpack.c.l.b16 %v4366
        %v4906 = vunpack.c.l.b16 %v4367
        %v4907 = vunpack.c.h.b16 %v4367
        %v4908 = vunpack.c.l.b16 %v4368
        %v4909 = vunpack.c.h.b16 %v4368
        %v4910 = vunpack.c.l.b16 %v4369
        %v4911 = vunpack.c.h.b16 %v4369
        %v4912 = vunpack.c.l.b16 %v4370
        %v4913 = vunpack.c.l.b16 %v4371
        %v4914 = vunpack.c.h.b16 %v4371
        %v4915 = vunpack.c.l.b16 %v4372
        %v4916 = vunpack.c.h.b16 %v4372
        %v4917 = vunpack.c.l.b16 %v4373
        %v4918 = vunpack.c.h.b16 %v4373
        %v4919 = vunpack.c.l.b16 %v4374
        %v4920 = vunpack.c.l.b16 %v4375
        %v4921 = vunpack.c.h.b16 %v4375
        %v4922 = vunpack.c.l.b16 %v4376
        %v4923 = vunpack.c.h.b16 %v4376
        %v4924 = vunpack.c.l.b16 %v4377
        %v4925 = vunpack.c.h.b16 %v4377
        %v4926 = vunpack.c.l.b16 %v4378
        %v4927 = vunpack.c.l.b16 %v4379
        %v4928 = vunpack.c.h.b16 %v4379
        %v4929 = vunpack.c.l.b16 %v4380
        %v4930 = vunpack.c.h.b16 %v4380
        %v4931 = vunpack.c.l.b16 %v4381
        %v4932 = vunpack.c.h.b16 %v4381
        %v4933 = vunpack.c.l.b16 %v4382
        %v4934 = vunpack.c.l.b16 %v4383
        %v4935 = vunpack.c.h.b16 %v4383
        %v4936 = vunpack.c.l.b16 %v4384
        %v4937 = vunpack.c.h.b16 %v4384
        %v4938 = vunpack.c.l.b16 %v4385
        %v4939 = vunpack.c.h.b16 %v4385
        %v4940 = vunpack.c.l.b16 %v4386
        %v4941 = vunpack.c.l.b16 %v4387
        %v4942 = vunpack.c.h.b16 %v4387
        %v4943 = vunpack.c.l.b16 %v4388
        %v4944 = vunpack.c.h.b16 %v4388
        %v4945 = vunpack.c.l.b16 %v4389
        %v4946 = vunpack.c.h.b16 %v4389
        %v4947 = vunpack.c.l.b16 %v4390
        %v4948 = vunpack.c.l.b16 %v4391
        %v4949 = vunpack.c.h.b16 %v4391
        %v4950 = vunpack.c.l.b16 %v4392
        %v4951 = vunpack.c.h.b16 %v4392
        %v4952 = vunpack.c.l.b16 %v4393
        %v4953 = vunpack.c.h.b16 %v4393
        %v4954 = vunpack.c.l.b16 %v4394
        %v4955 = vunpack.c.l.b16 %v4395
        %v4956 = vunpack.c.h.b16 %v4395
        %v4957 = vunpack.c.l.b16 %v4396
        %v4958 = vunpack.c.h.b16 %v4396
        %v4959 = vunpack.c.l.b16 %v4397
        %v4960 = vunpack.c.h.b16 %v4397
        %v4961 = vunpack.c.l.b16 %v4398
        %v4962 = vunpack.c.l.b16 %v4399
        %v4963 = vunpack.c.h.b16 %v4399
        %v4964 = vunpack.c.l.b16 %v4400
        %v4965 = vunpack.c.h.b16 %v4400
        %v4966 = vunpack.c.l.b16 %v4401
        %v4967 = vunpack.c.h.b16 %v4401
        %v4968 = vunpack.c.l.b16 %v4402
        %v4969 = vunpack.c.l.b16 %v4403
        %v4970 = vunpack.c.h.b16 %v4403
        %v4971 = vunpack.c.l.b16 %v4404
        %v4972 = vunpack.c.h.b16 %v4404
        %v4973 = vunpack.c.l.b16 %v4405
        %v4974 = vunpack.c.h.b16 %v4405
        %v4975 = vunpack.c.l.b16 %v4406
        %v4976 = vunpack.c.l.b16 %v4407
        %v4977 = vunpack.c.h.b16 %v4407
        %v4978 = vunpack.c.l.b16 %v4408
        %v4979 = vunpack.c.h.b16 %v4408
        %v4980 = vunpack.c.l.b16 %v4409
        %v4981 = vunpack.c.h.b16 %v4409
        %v4982 = vunpack.c.l.b16 %v4410
        %v4983 = vunpack.c.l.b16 %v4411
        %v4984 = vunpack.c.h.b16 %v4411
        %v4985 = vunpack.c.l.b16 %v4412
        %v4986 = vunpack.c.h.b16 %v4412
        %v4987 = vunpack.c.l.b16 %v4413
        %v4988 = vunpack.c.h.b16 %v4413
        %v4989 = vunpack.c.l.b16 %v4414
        %v4990 = vunpack.c.l.b16 %v4415
        %v4991 = vunpack.c.h.b16 %v4415
        %v4992 = vunpack.c.l.b16 %v4416
        %v4993 = vunpack.c.h.b16 %v4416
        %v4994 = vunpack.c.l.b16 %v4417
        %v4995 = vunpack.c.h.b16 %v4417
        %v4996 = vunpack.c.l.b16 %v4418
        %v4997 = vunpack.c.l.b16 %v4419
        %v4998 = vunpack.c.h.b16 %v4419
        %v4999 = vunpack.c.l.b16 %v4420
        %v5000 = vunpack.c.h.b16 %v4420
        %v5001 = vunpack.c.l.b16 %v4421
        %v5002 = vunpack.c.h.b16 %v4421
        %v5003 = vunpack.c.l.b16 %v4422
        %v5004 = vunpack.c.l.b16 %v4423
        %v5005 = vunpack.c.h.b16 %v4423
        %v5006 = vunpack.c.l.b16 %v4424
        %v5007 = vunpack.c.h.b16 %v4424
        %v5008 = vunpack.c.l.b16 %v4425
        %v5009 = vunpack.c.h.b16 %v4425
        %v5010 = vunpack.c.l.b16 %v4426
        %v5011 = vunpack.c.l.b16 %v4427
        %v5012 = vunpack.c.h.b16 %v4427
        %v5013 = vunpack.c.l.b16 %v4428
        %v5014 = vunpack.c.h.b16 %v4428
        %v5015 = vunpack.c.l.b16 %v4429
        %v5016 = vunpack.c.h.b16 %v4429
        %v5017 = vunpack.c.l.b16 %v4430
        %v5018 = vpack.c.b16 %v4675, %v4668
        %v5019 = vpack.c.b16 %v4676, %v4669
        %v5020 = vpack.c.b16 %v4677, %v4670
        %v5021 = vpack.c.b16 %v4678, %v4671
        %v5022 = vpack.c.b16 %v4679, %v4672
        %v5023 = vpack.c.b16 %v4680, %v4673
        %v5024 = vpack.c.b16 %v4681, %v4674
        %v5025 = vpack.c.b16 %v4689, %v4682
        %v5026 = vpack.c.b16 %v4690, %v4683
        %v5027 = vpack.c.b16 %v4691, %v4684
        %v5028 = vpack.c.b16 %v4692, %v4685
        %v5029 = vpack.c.b16 %v4693, %v4686
        %v5030 = vpack.c.b16 %v4694, %v4687
        %v5031 = vpack.c.b16 %v4695, %v4688
        %v5032 = vpack.c.b16 %v4703, %v4696
        %v5033 = vpack.c.b16 %v4704, %v4697
        %v5034 = vpack.c.b16 %v4705, %v4698
        %v5035 = vpack.c.b16 %v4706, %v4699
        %v5036 = vpack.c.b16 %v4707, %v4700
        %v5037 = vpack.c.b16 %v4708, %v4701
        %v5038 = vpack.c.b16 %v4709, %v4702
        %v5039 = vpack.c.b16 %v4717, %v4710
        %v5040 = vpack.c.b16 %v4718, %v4711
        %v5041 = vpack.c.b16 %v4719, %v4712
        %v5042 = vpack.c.b16 %v4720, %v4713
        %v5043 = vpack.c.b16 %v4721, %v4714
        %v5044 = vpack.c.b16 %v4722, %v4715
        %v5045 = vpack.c.b16 %v4723, %v4716
        %v5046 = vpack.c.b16 %v4731, %v4724
        %v5047 = vpack.c.b16 %v4732, %v4725
        %v5048 = vpack.c.b16 %v4733, %v4726
        %v5049 = vpack.c.b16 %v4734, %v4727
        %v5050 = vpack.c.b16 %v4735, %v4728
        %v5051 = vpack.c.b16 %v4736, %v4729
        %v5052 = vpack.c.b16 %v4737, %v4730
        %v5053 = vpack.c.b16 %v4745, %v4738
        %v5054 = vpack.c.b16 %v4746, %v4739
        %v5055 = vpack.c.b16 %v4747, %v4740
        %v5056 = vpack.c.b16 %v4748, %v4741
        %v5057 = vpack.c.b16 %v4749, %v4742
        %v5058 = vpack.c.b16 %v4750, %v4743
        %v5059 = vpack.c.b16 %v4751, %v4744
        %v5060 = vpack.c.b16 %v4759, %v4752
        %v5061 = vpack.c.b16 %v4760, %v4753
        %v5062 = vpack.c.b16 %v4761, %v4754
        %v5063 = vpack.c.b16 %v4762, %v4755
        %v5064 = vpack.c.b16 %v4763, %v4756
        %v5065 = vpack.c.b16 %v4764, %v4757
        %v5066 = vpack.c.b16 %v4765, %v4758
        %v5067 = vpack.c.b16 %v4773, %v4766
        %v5068 = vpack.c.b16 %v4774, %v4767
        %v5069 = vpack.c.b16 %v4775, %v4768
        %v5070 = vpack.c.b16 %v4776, %v4769
        %v5071 = vpack.c.b16 %v4777, %v4770
        %v5072 = vpack.c.b16 %v4778, %v4771
        %v5073 = vpack.c.b16 %v4779, %v4772
        %v5074 = vpack.c.b16 %v4787, %v4780
        %v5075 = vpack.c.b16 %v4788, %v4781
        %v5076 = vpack.c.b16 %v4789, %v4782
        %v5077 = vpack.c.b16 %v4790, %v4783
        %v5078 = vpack.c.b16 %v4791, %v4784
        %v5079 = vpack.c.b16 %v4792, %v4785
        %v5080 = vpack.c.b16 %v4793, %v4786
        %v5081 = vpack.c.b16 %v4801, %v4794
        %v5082 = vpack.c.b16 %v4802, %v4795
        %v5083 = vpack.c.b16 %v4803, %v4796
        %v5084 = vpack.c.b16 %v4804, %v4797
        %v5085 = vpack.c.b16 %v4805, %v4798
        %v5086 = vpack.c.b16 %v4806, %v4799
        %v5087 = vpack.c.b16 %v4807, %v4800
        %v5088 = vpack.c.b16 %v4815, %v4808
        %v5089 = vpack.c.b16 %v4816, %v4809
        %v5090 = vpack.c.b16 %v4817, %v4810
        %v5091 = vpack.c.b16 %v4818, %v4811
        %v5092 = vpack.c.b16 %v4819, %v4812
        %v5093 = vpack.c.b16 %v4820, %v4813
        %v5094 = vpack.c.b16 %v4821, %v4814
        %v5095 = vpack.c.b16 %v4829, %v4822
        %v5096 = vpack.c.b16 %v4830, %v4823
        %v5097 = vpack.c.b16 %v4831, %v4824
        %v5098 = vpack.c.b16 %v4832, %v4825
        %v5099 = vpack.c.b16 %v4833, %v4826
        %v5100 = vpack.c.b16 %v4834, %v4827
        %v5101 = vpack.c.b16 %v4835, %v4828
        %v5102 = vpack.c.b16 %v4843, %v4836
        %v5103 = vpack.c.b16 %v4844, %v4837
        %v5104 = vpack.c.b16 %v4845, %v4838
        %v5105 = vpack.c.b16 %v4846, %v4839
        %v5106 = vpack.c.b16 %v4847, %v4840
        %v5107 = vpack.c.b16 %v4848, %v4841
        %v5108 = vpack.c.b16 %v4849, %v4842
        %v5109 = vpack.c.b16 %v4857, %v4850
        %v5110 = vpack.c.b16 %v4858, %v4851
        %v5111 = vpack.c.b16 %v4859, %v4852
        %v5112 = vpack.c.b16 %v4860, %v4853
        %v5113 = vpack.c.b16 %v4861, %v4854
        %v5114 = vpack.c.b16 %v4862, %v4855
        %v5115 = vpack.c.b16 %v4863, %v4856
        %v5116 = vpack.c.b16 %v4871, %v4864
        %v5117 = vpack.c.b16 %v4872, %v4865
        %v5118 = vpack.c.b16 %v4873, %v4866
        %v5119 = vpack.c.b16 %v4874, %v4867
        %v5120 = vpack.c.b16 %v4875, %v4868
        %v5121 = vpack.c.b16 %v4876, %v4869
        %v5122 = vpack.c.b16 %v4877, %v4870
        %v5123 = vpack.c.b16 %v4885, %v4878
        %v5124 = vpack.c.b16 %v4886, %v4879
        %v5125 = vpack.c.b16 %v4887, %v4880
        %v5126 = vpack.c.b16 %v4888, %v4881
        %v5127 = vpack.c.b16 %v4889, %v4882
        %v5128 = vpack.c.b16 %v4890, %v4883
        %v5129 = vpack.c.b16 %v4891, %v4884
        %v5130 = vpack.c.b16 %v4899, %v4892
        %v5131 = vpack.c.b16 %v4900, %v4893
        %v5132 = vpack.c.b16 %v4901, %v4894
        %v5133 = vpack.c.b16 %v4902, %v4895
        %v5134 = vpack.c.b16 %v4903, %v4896
        %v5135 = vpack.c.b16 %v4904, %v4897
        %v5136 = vpack.c.b16 %v4905, %v4898
        %v5137 = vpack.c.b16 %v4913, %v4906
        %v5138 = vpack.c.b16 %v4914, %v4907
        %v5139 = vpack.c.b16 %v4915, %v4908
        %v5140 = vpack.c.b16 %v4916, %v4909
        %v5141 = vpack.c.b16 %v4917, %v4910
        %v5142 = vpack.c.b16 %v4918, %v4911
        %v5143 = vpack.c.b16 %v4919, %v4912
        %v5144 = vpack.c.b16 %v4927, %v4920
        %v5145 = vpack.c.b16 %v4928, %v4921
        %v5146 = vpack.c.b16 %v4929, %v4922
        %v5147 = vpack.c.b16 %v4930, %v4923
        %v5148 = vpack.c.b16 %v4931, %v4924
        %v5149 = vpack.c.b16 %v4932, %v4925
        %v5150 = vpack.c.b16 %v4933, %v4926
        %v5151 = vpack.c.b16 %v4941, %v4934
        %v5152 = vpack.c.b16 %v4942, %v4935
        %v5153 = vpack.c.b16 %v4943, %v4936
        %v5154 = vpack.c.b16 %v4944, %v4937
        %v5155 = vpack.c.b16 %v4945, %v4938
        %v5156 = vpack.c.b16 %v4946, %v4939
        %v5157 = vpack.c.b16 %v4947, %v4940
        %v5158 = vpack.c.b16 %v4955, %v4948
        %v5159 = vpack.c.b16 %v4956, %v4949
        %v5160 = vpack.c.b16 %v4957, %v4950
        %v5161 = vpack.c.b16 %v4958, %v4951
        %v5162 = vpack.c.b16 %v4959, %v4952
        %v5163 = vpack.c.b16 %v4960, %v4953
        %v5164 = vpack.c.b16 %v4961, %v4954
        %v5165 = vpack.c.b16 %v4969, %v4962
        %v5166 = vpack.c.b16 %v4970, %v4963
        %v5167 = vpack.c.b16 %v4971, %v4964
        %v5168 = vpack.c.b16 %v4972, %v4965
        %v5169 = vpack.c.b16 %v4973, %v4966
        %v5170 = vpack.c.b16 %v4974, %v4967
        %v5171 = vpack.c.b16 %v4975, %v4968
        %v5172 = vpack.c.b16 %v4983, %v4976
        %v5173 = vpack.c.b16 %v4984, %v4977
        %v5174 = vpack.c.b16 %v4985, %v4978
        %v5175 = vpack.c.b16 %v4986, %v4979
        %v5176 = vpack.c.b16 %v4987, %v4980
        %v5177 = vpack.c.b16 %v4988, %v4981
        %v5178 = vpack.c.b16 %v4989, %v4982
        %v5179 = vpack.c.b16 %v4997, %v4990
        %v5180 = vpack.c.b16 %v4998, %v4991
        %v5181 = vpack.c.b16 %v4999, %v4992
        %v5182 = vpack.c.b16 %v5000, %v4993
        %v5183 = vpack.c.b16 %v5001, %v4994
        %v5184 = vpack.c.b16 %v5002, %v4995
        %v5185 = vpack.c.b16 %v5003, %v4996
        %v5186 = vpack.c.b16 %v5011, %v5004
        %v5187 = vpack.c.b16 %v5012, %v5005
        %v5188 = vpack.c.b16 %v5013, %v5006
        %v5189 = vpack.c.b16 %v5014, %v5007
        %v5190 = vpack.c.b16 %v5015, %v5008
        %v5191 = vpack.c.b16 %v5016, %v5009
        %v5192 = vpack.c.b16 %v5017, %v5010
        %v5369 = vsel %vm1972, %v4202, 0
        %v5372 = vsel %vm1972, %v4206, 0
        %v5375 = vsel %vm1972, %v4210, 0
        %v5378 = vsel %vm1972, %v4214, 0
        %v5381 = vsel %vm1972, %v4218, 0
        %v5384 = vsel %vm1972, %v4222, 0
        %v5387 = vsel %vm1972, %v4226, 0
        %v5390 = vsel %vm1972, %v4230, 0
        %5392 = vmatprep.subr.bf16.mxu0 %v5019
        %5393 = vmatpush1.bf16.msra.mxu0 %v5018
        %5394 = vmatprep.subr.bf16.mxu0 %v5026
        %5395 = vmatpush1.bf16.msra.mxu0 %v5025
        %5396 = vmatprep.subr.bf16.mxu0 %v5033
        %5397 = vmatpush1.bf16.msra.mxu0 %v5032
        %5398 = vmatprep.subr.bf16.mxu0 %v5040
        %5399 = vmatpush1.bf16.msra.mxu0 %v5039
        %5400 = vmatprep.subr.bf16.mxu0 %v5047
        %5401 = vmatpush1.bf16.msra.mxu0 %v5046
        %5402 = vmatprep.subr.bf16.mxu0 %v5054
        %5403 = vmatpush1.bf16.msra.mxu0 %v5053
        %5404 = vmatprep.subr.bf16.mxu0 %v5061
        %5405 = vmatpush1.bf16.msra.mxu0 %v5060
        %5406 = vmatprep.subr.bf16.mxu0 %v5068
        %5407 = vmatpush1.bf16.msra.mxu0 %v5067
        %5408 = vmatprep.subr.bf16.mxu0 %v5075
        %5409 = vmatpush1.bf16.msra.mxu0 %v5074
        %5410 = vmatprep.subr.bf16.mxu0 %v5082
        %5411 = vmatpush1.bf16.msra.mxu0 %v5081
        %5412 = vmatprep.subr.bf16.mxu0 %v5089
        %5413 = vmatpush1.bf16.msra.mxu0 %v5088
        %5414 = vmatprep.subr.bf16.mxu0 %v5096
        %5415 = vmatpush1.bf16.msra.mxu0 %v5095
        %5416 = vmatprep.subr.bf16.mxu0 %v5103
        %5417 = vmatpush1.bf16.msra.mxu0 %v5102
        %5418 = vmatprep.subr.bf16.mxu0 %v5110
        %5419 = vmatpush1.bf16.msra.mxu0 %v5109
        %5420 = vmatprep.subr.bf16.mxu0 %v5117
        %5421 = vmatpush1.bf16.msra.mxu0 %v5116
        %5422 = vmatprep.subr.bf16.mxu0 %v5124
        %5423 = vmatpush1.bf16.msra.mxu0 %v5123
        %5424 = vmatprep.mubr.bf16.mxu0 %v4200
        %5425 = vmatmul.mubr.bf16.gmra.mrb[0].mxu0 %v4199
        %v5426 = vpop.f32.mrb[0].mxu0
        %v5427 = vadd.f32 %v4436, %v5426
        %v5428 = vpop.f32.mrb[0].mxu0
        %v5429 = vadd.f32 %v4440, %v5428
        %v5430 = vpop.f32.mrb[0].mxu0
        %v5431 = vadd.f32 %v4436, %v5430
        %v5432 = vpop.f32.mrb[0].mxu0
        %v5433 = vadd.f32 %v4440, %v5432
        %5434 = vmatprep.mubr.bf16.mxu0 %v4204
        %5435 = vmatmul.mubr.bf16.gmra.mrb[0].mxu0 %v4203
        %v5436 = vpop.f32.mrb[0].mxu0
        %v5437 = vadd.f32 %v4436, %v5436
        %v5438 = vpop.f32.mrb[0].mxu0
        %v5439 = vadd.f32 %v4440, %v5438
        %v5440 = vpop.f32.mrb[0].mxu0
        %v5441 = vadd.f32 %v4436, %v5440
        %v5442 = vpop.f32.mrb[0].mxu0
        %v5443 = vadd.f32 %v4440, %v5442
        %5444 = vmatprep.mubr.bf16.mxu0 %v4208
        %5445 = vmatmul.mubr.bf16.gmra.mrb[0].mxu0 %v4207
        %v5446 = vpop.f32.mrb[0].mxu0
        %v5447 = vadd.f32 %v4436, %v5446
        %v5448 = vpop.f32.mrb[0].mxu0
        %v5449 = vadd.f32 %v4440, %v5448
        %v5450 = vpop.f32.mrb[0].mxu0
        %v5451 = vadd.f32 %v4436, %v5450
        %v5452 = vpop.f32.mrb[0].mxu0
        %v5453 = vadd.f32 %v4440, %v5452
        %5454 = vmatprep.mubr.bf16.mxu0 %v4212
        %5455 = vmatmul.mubr.bf16.gmra.mrb[0].mxu0 %v4211
        %v5456 = vpop.f32.mrb[0].mxu0
        %v5457 = vadd.f32 %v4436, %v5456
        %v5458 = vpop.f32.mrb[0].mxu0
        %v5459 = vadd.f32 %v4440, %v5458
        %v5460 = vpop.f32.mrb[0].mxu0
        %v5461 = vadd.f32 %v4436, %v5460
        %v5462 = vpop.f32.mrb[0].mxu0
        %v5463 = vadd.f32 %v4440, %v5462
        %5464 = vmatprep.mubr.bf16.mxu0 %v4216
        %5465 = vmatmul.mubr.bf16.gmra.mrb[0].mxu0 %v4215
        %v5466 = vpop.f32.mrb[0].mxu0
        %v5467 = vadd.f32 %v4436, %v5466
        %v5468 = vpop.f32.mrb[0].mxu0
        %v5469 = vadd.f32 %v4440, %v5468
        %v5470 = vpop.f32.mrb[0].mxu0
        %v5471 = vadd.f32 %v4436, %v5470
        %v5472 = vpop.f32.mrb[0].mxu0
        %v5473 = vadd.f32 %v4440, %v5472
        %5474 = vmatprep.mubr.bf16.mxu0 %v4220
        %5475 = vmatmul.mubr.bf16.gmra.mrb[0].mxu0 %v4219
        %v5476 = vpop.f32.mrb[0].mxu0
        %v5477 = vadd.f32 %v4436, %v5476
        %v5478 = vpop.f32.mrb[0].mxu0
        %v5479 = vadd.f32 %v4440, %v5478
        %v5480 = vpop.f32.mrb[0].mxu0
        %v5481 = vadd.f32 %v4436, %v5480
        %v5482 = vpop.f32.mrb[0].mxu0
        %v5483 = vadd.f32 %v4440, %v5482
        %5484 = vmatprep.mubr.bf16.mxu0 %v4224
        %5485 = vmatmul.mubr.bf16.gmra.mrb[0].mxu0 %v4223
        %v5486 = vpop.f32.mrb[0].mxu0
        %v5487 = vadd.f32 %v4436, %v5486
        %v5488 = vpop.f32.mrb[0].mxu0
        %v5489 = vadd.f32 %v4440, %v5488
        %v5490 = vpop.f32.mrb[0].mxu0
        %v5491 = vadd.f32 %v4436, %v5490
        %v5492 = vpop.f32.mrb[0].mxu0
        %v5493 = vadd.f32 %v4440, %v5492
        %5494 = vmatprep.mubr.bf16.mxu0 %v4228
        %5495 = vmatmul.mubr.bf16.gmra.mrb[0].mxu0 %v4227
        %v5496 = vpop.f32.mrb[0].mxu0
        %v5497 = vadd.f32 %v4436, %v5496
        %v5498 = vpop.f32.mrb[0].mxu0
        %v5499 = vadd.f32 %v4440, %v5498
        %v5500 = vpop.f32.mrb[0].mxu0
        %v5501 = vadd.f32 %v4436, %v5500
        %v5502 = vpop.f32.mrb[0].mxu0
        %v5503 = vadd.f32 %v4440, %v5502
        %5504 = vdwg.mxu0
        %5505 = vmatprep.subr.bf16.mxu0 %v5131
        %5506 = vmatpush1.bf16.msra.mxu0 %v5130
        %5507 = vmatprep.subr.bf16.mxu0 %v5138
        %5508 = vmatpush1.bf16.msra.mxu0 %v5137
        %5509 = vmatprep.subr.bf16.mxu0 %v5145
        %5510 = vmatpush1.bf16.msra.mxu0 %v5144
        %5511 = vmatprep.subr.bf16.mxu0 %v5152
        %5512 = vmatpush1.bf16.msra.mxu0 %v5151
        %5513 = vmatprep.subr.bf16.mxu0 %v5159
        %5514 = vmatpush1.bf16.msra.mxu0 %v5158
        %5515 = vmatprep.subr.bf16.mxu0 %v5166
        %5516 = vmatpush1.bf16.msra.mxu0 %v5165
        %5517 = vmatprep.subr.bf16.mxu0 %v5173
        %5518 = vmatpush1.bf16.msra.mxu0 %v5172
        %5519 = vmatprep.subr.bf16.mxu0 %v5180
        %5520 = vmatpush1.bf16.msra.mxu0 %v5179
        %5521 = vmatprep.subr.bf16.mxu0 %v5187
        %5522 = vmatpush1.bf16.msra.mxu0 %v5186
        %5523 = vmatprep.subr.bf16.mxu0 0
        %5524 = vmatpush1.bf16.msra.mxu0 0
        %5525 = vmatprep.subr.bf16.mxu0 0
        %5526 = vmatpush1.bf16.msra.mxu0 0
        %5527 = vmatprep.subr.bf16.mxu0 0
        %5528 = vmatpush1.bf16.msra.mxu0 0
        %5529 = vmatprep.subr.bf16.mxu0 0
        %5530 = vmatpush1.bf16.msra.mxu0 0
        %5531 = vmatprep.subr.bf16.mxu0 0
        %5532 = vmatpush1.bf16.msra.mxu0 0
        %5533 = vmatprep.subr.bf16.mxu0 0
        %5534 = vmatpush1.bf16.msra.mxu0 0
        %5535 = vmatprep.subr.bf16.mxu0 0
        %5536 = vmatpush1.bf16.msra.mxu0 0
        %5537 = vmatprep.mubr.bf16.mxu0 %v5369
        %5538 = vmatmul.mubr.bf16.gmra.mrb[0].mxu0 %v4201
        %v5539 = vpop.f32.mrb[0].mxu0
        %v5540 = vadd.f32 %v5427, %v5539
        %v5541 = vpop.f32.mrb[0].mxu0
        %v5542 = vadd.f32 %v5429, %v5541
        %v5543 = vpop.f32.mrb[0].mxu0
        %v5544 = vadd.f32 %v5431, %v5543
        %v5545 = vpop.f32.mrb[0].mxu0
        %v5546 = vadd.f32 %v5433, %v5545
        %5547 = vmatprep.mubr.bf16.mxu0 %v5372
        %5548 = vmatmul.mubr.bf16.gmra.mrb[0].mxu0 %v4205
        %v5549 = vpop.f32.mrb[0].mxu0
        %v5550 = vadd.f32 %v5437, %v5549
        %v5551 = vpop.f32.mrb[0].mxu0
        %v5552 = vadd.f32 %v5439, %v5551
        %v5553 = vpop.f32.mrb[0].mxu0
        %v5554 = vadd.f32 %v5441, %v5553
        %v5555 = vpop.f32.mrb[0].mxu0
        %v5556 = vadd.f32 %v5443, %v5555
        %5557 = vmatprep.mubr.bf16.mxu0 %v5375
        %5558 = vmatmul.mubr.bf16.gmra.mrb[0].mxu0 %v4209
        %v5559 = vpop.f32.mrb[0].mxu0
        %v5560 = vadd.f32 %v5447, %v5559
        %v5561 = vpop.f32.mrb[0].mxu0
        %v5562 = vadd.f32 %v5449, %v5561
        %v5563 = vpop.f32.mrb[0].mxu0
        %v5564 = vadd.f32 %v5451, %v5563
        %v5565 = vpop.f32.mrb[0].mxu0
        %v5566 = vadd.f32 %v5453, %v5565
        %5567 = vmatprep.mubr.bf16.mxu0 %v5378
        %5568 = vmatmul.mubr.bf16.gmra.mrb[0].mxu0 %v4213
        %v5569 = vpop.f32.mrb[0].mxu0
        %v5570 = vadd.f32 %v5457, %v5569
        %v5571 = vpop.f32.mrb[0].mxu0
        %v5572 = vadd.f32 %v5459, %v5571
        %v5573 = vpop.f32.mrb[0].mxu0
        %v5574 = vadd.f32 %v5461, %v5573
        %v5575 = vpop.f32.mrb[0].mxu0
        %v5576 = vadd.f32 %v5463, %v5575
        %5577 = vmatprep.mubr.bf16.mxu0 %v5381
        %5578 = vmatmul.mubr.bf16.gmra.mrb[0].mxu0 %v4217
        %v5579 = vpop.f32.mrb[0].mxu0
        %v5580 = vadd.f32 %v5467, %v5579
        %v5581 = vpop.f32.mrb[0].mxu0
        %v5582 = vadd.f32 %v5469, %v5581
        %v5583 = vpop.f32.mrb[0].mxu0
        %v5584 = vadd.f32 %v5471, %v5583
        %v5585 = vpop.f32.mrb[0].mxu0
        %v5586 = vadd.f32 %v5473, %v5585
        %5587 = vmatprep.mubr.bf16.mxu0 %v5384
        %5588 = vmatmul.mubr.bf16.gmra.mrb[0].mxu0 %v4221
        %v5589 = vpop.f32.mrb[0].mxu0
        %v5590 = vadd.f32 %v5477, %v5589
        %v5591 = vpop.f32.mrb[0].mxu0
        %v5592 = vadd.f32 %v5479, %v5591
        %v5593 = vpop.f32.mrb[0].mxu0
        %v5594 = vadd.f32 %v5481, %v5593
        %v5595 = vpop.f32.mrb[0].mxu0
        %v5596 = vadd.f32 %v5483, %v5595
        %5597 = vmatprep.mubr.bf16.mxu0 %v5387
        %5598 = vmatmul.mubr.bf16.gmra.mrb[0].mxu0 %v4225
        %v5599 = vpop.f32.mrb[0].mxu0
        %v5600 = vadd.f32 %v5487, %v5599
        %v5601 = vpop.f32.mrb[0].mxu0
        %v5602 = vadd.f32 %v5489, %v5601
        %v5603 = vpop.f32.mrb[0].mxu0
        %v5604 = vadd.f32 %v5491, %v5603
        %v5605 = vpop.f32.mrb[0].mxu0
        %v5606 = vadd.f32 %v5493, %v5605
        %5607 = vmatprep.mubr.bf16.mxu0 %v5390
        %5608 = vmatmul.mubr.bf16.gmra.mrb[0].mxu0 %v4229
        %v5609 = vpop.f32.mrb[0].mxu0
        %v5610 = vadd.f32 %v5497, %v5609
        %v5611 = vpop.f32.mrb[0].mxu0
        %v5612 = vadd.f32 %v5499, %v5611
        %v5613 = vpop.f32.mrb[0].mxu0
        %v5614 = vadd.f32 %v5501, %v5613
        %v5615 = vpop.f32.mrb[0].mxu0
        %v5616 = vadd.f32 %v5503, %v5615
        %5617 = vdwg.mxu0
        %5618 = vmatprep.subr.bf16.mxu0 %v5021
        %5619 = vmatpush1.bf16.msra.mxu0 %v5020
        %5620 = vmatprep.subr.bf16.mxu0 %v5028
        %5621 = vmatpush1.bf16.msra.mxu0 %v5027
        %5622 = vmatprep.subr.bf16.mxu0 %v5035
        %5623 = vmatpush1.bf16.msra.mxu0 %v5034
        %5624 = vmatprep.subr.bf16.mxu0 %v5042
        %5625 = vmatpush1.bf16.msra.mxu0 %v5041
        %5626 = vmatprep.subr.bf16.mxu0 %v5049
        %5627 = vmatpush1.bf16.msra.mxu0 %v5048
        %5628 = vmatprep.subr.bf16.mxu0 %v5056
        %5629 = vmatpush1.bf16.msra.mxu0 %v5055
        %5630 = vmatprep.subr.bf16.mxu0 %v5063
        %5631 = vmatpush1.bf16.msra.mxu0 %v5062
        %5632 = vmatprep.subr.bf16.mxu0 %v5070
        %5633 = vmatpush1.bf16.msra.mxu0 %v5069
        %5634 = vmatprep.subr.bf16.mxu0 %v5077
        %5635 = vmatpush1.bf16.msra.mxu0 %v5076
        %5636 = vmatprep.subr.bf16.mxu0 %v5084
        %5637 = vmatpush1.bf16.msra.mxu0 %v5083
        %5638 = vmatprep.subr.bf16.mxu0 %v5091
        %5639 = vmatpush1.bf16.msra.mxu0 %v5090
        %5640 = vmatprep.subr.bf16.mxu0 %v5098
        %5641 = vmatpush1.bf16.msra.mxu0 %v5097
        %5642 = vmatprep.subr.bf16.mxu0 %v5105
        %5643 = vmatpush1.bf16.msra.mxu0 %v5104
        %5644 = vmatprep.subr.bf16.mxu0 %v5112
        %5645 = vmatpush1.bf16.msra.mxu0 %v5111
        %5646 = vmatprep.subr.bf16.mxu0 %v5119
        %5647 = vmatpush1.bf16.msra.mxu0 %v5118
        %5648 = vmatprep.subr.bf16.mxu0 %v5126
        %5649 = vmatpush1.bf16.msra.mxu0 %v5125
        %5650 = vmatprep.mubr.bf16.mxu0 %v4200
        %5651 = vmatmul.mubr.bf16.gmra.mrb[0].mxu0 %v4199
        %v5652 = vpop.f32.mrb[0].mxu0
        %v5653 = vadd.f32 %v4444, %v5652
        %v5654 = vpop.f32.mrb[0].mxu0
        %v5655 = vadd.f32 %v4448, %v5654
        %v5656 = vpop.f32.mrb[0].mxu0
        %v5657 = vadd.f32 %v4444, %v5656
        %v5658 = vpop.f32.mrb[0].mxu0
        %v5659 = vadd.f32 %v4448, %v5658
        %5660 = vmatprep.mubr.bf16.mxu0 %v4204
        %5661 = vmatmul.mubr.bf16.gmra.mrb[0].mxu0 %v4203
        %v5662 = vpop.f32.mrb[0].mxu0
        %v5663 = vadd.f32 %v4444, %v5662
        %v5664 = vpop.f32.mrb[0].mxu0
        %v5665 = vadd.f32 %v4448, %v5664
        %v5666 = vpop.f32.mrb[0].mxu0
        %v5667 = vadd.f32 %v4444, %v5666
        %v5668 = vpop.f32.mrb[0].mxu0
        %v5669 = vadd.f32 %v4448, %v5668
        %5670 = vmatprep.mubr.bf16.mxu0 %v4208
        %5671 = vmatmul.mubr.bf16.gmra.mrb[0].mxu0 %v4207
        %v5672 = vpop.f32.mrb[0].mxu0
        %v5673 = vadd.f32 %v4444, %v5672
        %v5674 = vpop.f32.mrb[0].mxu0
        %v5675 = vadd.f32 %v4448, %v5674
        %v5676 = vpop.f32.mrb[0].mxu0
        %v5677 = vadd.f32 %v4444, %v5676
        %v5678 = vpop.f32.mrb[0].mxu0
        %v5679 = vadd.f32 %v4448, %v5678
        %5680 = vmatprep.mubr.bf16.mxu0 %v4212
        %5681 = vmatmul.mubr.bf16.gmra.mrb[0].mxu0 %v4211
        %v5682 = vpop.f32.mrb[0].mxu0
        %v5683 = vadd.f32 %v4444, %v5682
        %v5684 = vpop.f32.mrb[0].mxu0
        %v5685 = vadd.f32 %v4448, %v5684
        %v5686 = vpop.f32.mrb[0].mxu0
        %v5687 = vadd.f32 %v4444, %v5686
        %v5688 = vpop.f32.mrb[0].mxu0
        %v5689 = vadd.f32 %v4448, %v5688
        %5690 = vmatprep.mubr.bf16.mxu0 %v4216
        %5691 = vmatmul.mubr.bf16.gmra.mrb[0].mxu0 %v4215
        %v5692 = vpop.f32.mrb[0].mxu0
        %v5693 = vadd.f32 %v4444, %v5692
        %v5694 = vpop.f32.mrb[0].mxu0
        %v5695 = vadd.f32 %v4448, %v5694
        %v5696 = vpop.f32.mrb[0].mxu0
        %v5697 = vadd.f32 %v4444, %v5696
        %v5698 = vpop.f32.mrb[0].mxu0
        %v5699 = vadd.f32 %v4448, %v5698
        %5700 = vmatprep.mubr.bf16.mxu0 %v4220
        %5701 = vmatmul.mubr.bf16.gmra.mrb[0].mxu0 %v4219
        %v5702 = vpop.f32.mrb[0].mxu0
        %v5703 = vadd.f32 %v4444, %v5702
        %v5704 = vpop.f32.mrb[0].mxu0
        %v5705 = vadd.f32 %v4448, %v5704
        %v5706 = vpop.f32.mrb[0].mxu0
        %v5707 = vadd.f32 %v4444, %v5706
        %v5708 = vpop.f32.mrb[0].mxu0
        %v5709 = vadd.f32 %v4448, %v5708
        %5710 = vmatprep.mubr.bf16.mxu0 %v4224
        %5711 = vmatmul.mubr.bf16.gmra.mrb[0].mxu0 %v4223
        %v5712 = vpop.f32.mrb[0].mxu0
        %v5713 = vadd.f32 %v4444, %v5712
        %v5714 = vpop.f32.mrb[0].mxu0
        %v5715 = vadd.f32 %v4448, %v5714
        %v5716 = vpop.f32.mrb[0].mxu0
        %v5717 = vadd.f32 %v4444, %v5716
        %v5718 = vpop.f32.mrb[0].mxu0
        %v5719 = vadd.f32 %v4448, %v5718
        %5720 = vmatprep.mubr.bf16.mxu0 %v4228
        %5721 = vmatmul.mubr.bf16.gmra.mrb[0].mxu0 %v4227
        %v5722 = vpop.f32.mrb[0].mxu0
        %v5723 = vadd.f32 %v4444, %v5722
        %v5724 = vpop.f32.mrb[0].mxu0
        %v5725 = vadd.f32 %v4448, %v5724
        %v5726 = vpop.f32.mrb[0].mxu0
        %v5727 = vadd.f32 %v4444, %v5726
        %v5728 = vpop.f32.mrb[0].mxu0
        %v5729 = vadd.f32 %v4448, %v5728
        %5730 = vdwg.mxu0
        %5731 = vmatprep.subr.bf16.mxu0 %v5133
        %5732 = vmatpush1.bf16.msra.mxu0 %v5132
        %5733 = vmatprep.subr.bf16.mxu0 %v5140
        %5734 = vmatpush1.bf16.msra.mxu0 %v5139
        %5735 = vmatprep.subr.bf16.mxu0 %v5147
        %5736 = vmatpush1.bf16.msra.mxu0 %v5146
        %5737 = vmatprep.subr.bf16.mxu0 %v5154
        %5738 = vmatpush1.bf16.msra.mxu0 %v5153
        %5739 = vmatprep.subr.bf16.mxu0 %v5161
        %5740 = vmatpush1.bf16.msra.mxu0 %v5160
        %5741 = vmatprep.subr.bf16.mxu0 %v5168
        %5742 = vmatpush1.bf16.msra.mxu0 %v5167
        %5743 = vmatprep.subr.bf16.mxu0 %v5175
        %5744 = vmatpush1.bf16.msra.mxu0 %v5174
        %5745 = vmatprep.subr.bf16.mxu0 %v5182
        %5746 = vmatpush1.bf16.msra.mxu0 %v5181
        %5747 = vmatprep.subr.bf16.mxu0 %v5189
        %5748 = vmatpush1.bf16.msra.mxu0 %v5188
        %5749 = vmatprep.subr.bf16.mxu0 0
        %5750 = vmatpush1.bf16.msra.mxu0 0
        %5751 = vmatprep.subr.bf16.mxu0 0
        %5752 = vmatpush1.bf16.msra.mxu0 0
        %5753 = vmatprep.subr.bf16.mxu0 0
        %5754 = vmatpush1.bf16.msra.mxu0 0
        %5755 = vmatprep.subr.bf16.mxu0 0
        %5756 = vmatpush1.bf16.msra.mxu0 0
        %5757 = vmatprep.subr.bf16.mxu0 0
        %5758 = vmatpush1.bf16.msra.mxu0 0
        %5759 = vmatprep.subr.bf16.mxu0 0
        %5760 = vmatpush1.bf16.msra.mxu0 0
        %5761 = vmatprep.subr.bf16.mxu0 0
        %5762 = vmatpush1.bf16.msra.mxu0 0
        %5763 = vmatprep.mubr.bf16.mxu0 %v5369
        %5764 = vmatmul.mubr.bf16.gmra.mrb[0].mxu0 %v4201
        %v5765 = vpop.f32.mrb[0].mxu0
        %v5766 = vadd.f32 %v5653, %v5765
        %v5767 = vpop.f32.mrb[0].mxu0
        %v5768 = vadd.f32 %v5655, %v5767
        %v5769 = vpop.f32.mrb[0].mxu0
        %v5770 = vadd.f32 %v5657, %v5769
        %v5771 = vpop.f32.mrb[0].mxu0
        %v5772 = vadd.f32 %v5659, %v5771
        %5773 = vmatprep.mubr.bf16.mxu0 %v5372
        %5774 = vmatmul.mubr.bf16.gmra.mrb[0].mxu0 %v4205
        %v5775 = vpop.f32.mrb[0].mxu0
        %v5776 = vadd.f32 %v5663, %v5775
        %v5777 = vpop.f32.mrb[0].mxu0
        %v5778 = vadd.f32 %v5665, %v5777
        %v5779 = vpop.f32.mrb[0].mxu0
        %v5780 = vadd.f32 %v5667, %v5779
        %v5781 = vpop.f32.mrb[0].mxu0
        %v5782 = vadd.f32 %v5669, %v5781
        %5783 = vmatprep.mubr.bf16.mxu0 %v5375
        %5784 = vmatmul.mubr.bf16.gmra.mrb[0].mxu0 %v4209
        %v5785 = vpop.f32.mrb[0].mxu0
        %v5786 = vadd.f32 %v5673, %v5785
        %v5787 = vpop.f32.mrb[0].mxu0
        %v5788 = vadd.f32 %v5675, %v5787
        %v5789 = vpop.f32.mrb[0].mxu0
        %v5790 = vadd.f32 %v5677, %v5789
        %v5791 = vpop.f32.mrb[0].mxu0
        %v5792 = vadd.f32 %v5679, %v5791
        %5793 = vmatprep.mubr.bf16.mxu0 %v5378
        %5794 = vmatmul.mubr.bf16.gmra.mrb[0].mxu0 %v4213
        %v5795 = vpop.f32.mrb[0].mxu0
        %v5796 = vadd.f32 %v5683, %v5795
        %v5797 = vpop.f32.mrb[0].mxu0
        %v5798 = vadd.f32 %v5685, %v5797
        %v5799 = vpop.f32.mrb[0].mxu0
        %v5800 = vadd.f32 %v5687, %v5799
        %v5801 = vpop.f32.mrb[0].mxu0
        %v5802 = vadd.f32 %v5689, %v5801
        %5803 = vmatprep.mubr.bf16.mxu0 %v5381
        %5804 = vmatmul.mubr.bf16.gmra.mrb[0].mxu0 %v4217
        %v5805 = vpop.f32.mrb[0].mxu0
        %v5806 = vadd.f32 %v5693, %v5805
        %v5807 = vpop.f32.mrb[0].mxu0
        %v5808 = vadd.f32 %v5695, %v5807
        %v5809 = vpop.f32.mrb[0].mxu0
        %v5810 = vadd.f32 %v5697, %v5809
        %v5811 = vpop.f32.mrb[0].mxu0
        %v5812 = vadd.f32 %v5699, %v5811
        %5813 = vmatprep.mubr.bf16.mxu0 %v5384
        %5814 = vmatmul.mubr.bf16.gmra.mrb[0].mxu0 %v4221
        %v5815 = vpop.f32.mrb[0].mxu0
        %v5816 = vadd.f32 %v5703, %v5815
        %v5817 = vpop.f32.mrb[0].mxu0
        %v5818 = vadd.f32 %v5705, %v5817
        %v5819 = vpop.f32.mrb[0].mxu0
        %v5820 = vadd.f32 %v5707, %v5819
        %v5821 = vpop.f32.mrb[0].mxu0
        %v5822 = vadd.f32 %v5709, %v5821
        %5823 = vmatprep.mubr.bf16.mxu0 %v5387
        %5824 = vmatmul.mubr.bf16.gmra.mrb[0].mxu0 %v4225
        %v5825 = vpop.f32.mrb[0].mxu0
        %v5826 = vadd.f32 %v5713, %v5825
        %v5827 = vpop.f32.mrb[0].mxu0
        %v5828 = vadd.f32 %v5715, %v5827
        %v5829 = vpop.f32.mrb[0].mxu0
        %v5830 = vadd.f32 %v5717, %v5829
        %v5831 = vpop.f32.mrb[0].mxu0
        %v5832 = vadd.f32 %v5719, %v5831
        %5833 = vmatprep.mubr.bf16.mxu0 %v5390
        %5834 = vmatmul.mubr.bf16.gmra.mrb[0].mxu0 %v4229
        %v5835 = vpop.f32.mrb[0].mxu0
        %v5836 = vadd.f32 %v5723, %v5835
        %v5837 = vpop.f32.mrb[0].mxu0
        %v5838 = vadd.f32 %v5725, %v5837
        %v5839 = vpop.f32.mrb[0].mxu0
        %v5840 = vadd.f32 %v5727, %v5839
        %v5841 = vpop.f32.mrb[0].mxu0
        %v5842 = vadd.f32 %v5729, %v5841
        %5843 = vdwg.mxu0
        %5844 = vmatprep.subr.bf16.mxu0 %v5023
        %5845 = vmatpush1.bf16.msra.mxu0 %v5022
        %5846 = vmatprep.subr.bf16.mxu0 %v5030
        %5847 = vmatpush1.bf16.msra.mxu0 %v5029
        %5848 = vmatprep.subr.bf16.mxu0 %v5037
        %5849 = vmatpush1.bf16.msra.mxu0 %v5036
        %5850 = vmatprep.subr.bf16.mxu0 %v5044
        %5851 = vmatpush1.bf16.msra.mxu0 %v5043
        %5852 = vmatprep.subr.bf16.mxu0 %v5051
        %5853 = vmatpush1.bf16.msra.mxu0 %v5050
        %5854 = vmatprep.subr.bf16.mxu0 %v5058
        %5855 = vmatpush1.bf16.msra.mxu0 %v5057
        %5856 = vmatprep.subr.bf16.mxu0 %v5065
        %5857 = vmatpush1.bf16.msra.mxu0 %v5064
        %5858 = vmatprep.subr.bf16.mxu0 %v5072
        %5859 = vmatpush1.bf16.msra.mxu0 %v5071
        %5860 = vmatprep.subr.bf16.mxu0 %v5079
        %5861 = vmatpush1.bf16.msra.mxu0 %v5078
        %5862 = vmatprep.subr.bf16.mxu0 %v5086
        %5863 = vmatpush1.bf16.msra.mxu0 %v5085
        %5864 = vmatprep.subr.bf16.mxu0 %v5093
        %5865 = vmatpush1.bf16.msra.mxu0 %v5092
        %5866 = vmatprep.subr.bf16.mxu0 %v5100
        %5867 = vmatpush1.bf16.msra.mxu0 %v5099
        %5868 = vmatprep.subr.bf16.mxu0 %v5107
        %5869 = vmatpush1.bf16.msra.mxu0 %v5106
        %5870 = vmatprep.subr.bf16.mxu0 %v5114
        %5871 = vmatpush1.bf16.msra.mxu0 %v5113
        %5872 = vmatprep.subr.bf16.mxu0 %v5121
        %5873 = vmatpush1.bf16.msra.mxu0 %v5120
        %5874 = vmatprep.subr.bf16.mxu0 %v5128
        %5875 = vmatpush1.bf16.msra.mxu0 %v5127
        %5876 = vmatprep.mubr.bf16.mxu0 %v4200
        %5877 = vmatmul.mubr.bf16.gmra.mrb[0].mxu0 %v4199
        %v5878 = vpop.f32.mrb[0].mxu0
        %v5879 = vadd.f32 %v4452, %v5878
        %v5880 = vpop.f32.mrb[0].mxu0
        %v5881 = vadd.f32 %v4456, %v5880
        %v5882 = vpop.f32.mrb[0].mxu0
        %v5883 = vadd.f32 %v4452, %v5882
        %v5884 = vpop.f32.mrb[0].mxu0
        %v5885 = vadd.f32 %v4456, %v5884
        %5886 = vmatprep.mubr.bf16.mxu0 %v4204
        %5887 = vmatmul.mubr.bf16.gmra.mrb[0].mxu0 %v4203
        %v5888 = vpop.f32.mrb[0].mxu0
        %v5889 = vadd.f32 %v4452, %v5888
        %v5890 = vpop.f32.mrb[0].mxu0
        %v5891 = vadd.f32 %v4456, %v5890
        %v5892 = vpop.f32.mrb[0].mxu0
        %v5893 = vadd.f32 %v4452, %v5892
        %v5894 = vpop.f32.mrb[0].mxu0
        %v5895 = vadd.f32 %v4456, %v5894
        %5896 = vmatprep.mubr.bf16.mxu0 %v4208
        %5897 = vmatmul.mubr.bf16.gmra.mrb[0].mxu0 %v4207
        %v5898 = vpop.f32.mrb[0].mxu0
        %v5899 = vadd.f32 %v4452, %v5898
        %v5900 = vpop.f32.mrb[0].mxu0
        %v5901 = vadd.f32 %v4456, %v5900
        %v5902 = vpop.f32.mrb[0].mxu0
        %v5903 = vadd.f32 %v4452, %v5902
        %v5904 = vpop.f32.mrb[0].mxu0
        %v5905 = vadd.f32 %v4456, %v5904
        %5906 = vmatprep.mubr.bf16.mxu0 %v4212
        %5907 = vmatmul.mubr.bf16.gmra.mrb[0].mxu0 %v4211
        %v5908 = vpop.f32.mrb[0].mxu0
        %v5909 = vadd.f32 %v4452, %v5908
        %v5910 = vpop.f32.mrb[0].mxu0
        %v5911 = vadd.f32 %v4456, %v5910
        %v5912 = vpop.f32.mrb[0].mxu0
        %v5913 = vadd.f32 %v4452, %v5912
        %v5914 = vpop.f32.mrb[0].mxu0
        %v5915 = vadd.f32 %v4456, %v5914
        %5916 = vmatprep.mubr.bf16.mxu0 %v4216
        %5917 = vmatmul.mubr.bf16.gmra.mrb[0].mxu0 %v4215
        %v5918 = vpop.f32.mrb[0].mxu0
        %v5919 = vadd.f32 %v4452, %v5918
        %v5920 = vpop.f32.mrb[0].mxu0
        %v5921 = vadd.f32 %v4456, %v5920
        %v5922 = vpop.f32.mrb[0].mxu0
        %v5923 = vadd.f32 %v4452, %v5922
        %v5924 = vpop.f32.mrb[0].mxu0
        %v5925 = vadd.f32 %v4456, %v5924
        %5926 = vmatprep.mubr.bf16.mxu0 %v4220
        %5927 = vmatmul.mubr.bf16.gmra.mrb[0].mxu0 %v4219
        %v5928 = vpop.f32.mrb[0].mxu0
        %v5929 = vadd.f32 %v4452, %v5928
        %v5930 = vpop.f32.mrb[0].mxu0
        %v5931 = vadd.f32 %v4456, %v5930
        %v5932 = vpop.f32.mrb[0].mxu0
        %v5933 = vadd.f32 %v4452, %v5932
        %v5934 = vpop.f32.mrb[0].mxu0
        %v5935 = vadd.f32 %v4456, %v5934
        %5936 = vmatprep.mubr.bf16.mxu0 %v4224
        %5937 = vmatmul.mubr.bf16.gmra.mrb[0].mxu0 %v4223
        %v5938 = vpop.f32.mrb[0].mxu0
        %v5939 = vadd.f32 %v4452, %v5938
        %v5940 = vpop.f32.mrb[0].mxu0
        %v5941 = vadd.f32 %v4456, %v5940
        %v5942 = vpop.f32.mrb[0].mxu0
        %v5943 = vadd.f32 %v4452, %v5942
        %v5944 = vpop.f32.mrb[0].mxu0
        %v5945 = vadd.f32 %v4456, %v5944
        %5946 = vmatprep.mubr.bf16.mxu0 %v4228
        %5947 = vmatmul.mubr.bf16.gmra.mrb[0].mxu0 %v4227
        %v5948 = vpop.f32.mrb[0].mxu0
        %v5949 = vadd.f32 %v4452, %v5948
        %v5950 = vpop.f32.mrb[0].mxu0
        %v5951 = vadd.f32 %v4456, %v5950
        %v5952 = vpop.f32.mrb[0].mxu0
        %v5953 = vadd.f32 %v4452, %v5952
        %v5954 = vpop.f32.mrb[0].mxu0
        %v5955 = vadd.f32 %v4456, %v5954
        %5956 = vdwg.mxu0
        %5957 = vmatprep.subr.bf16.mxu0 %v5135
        %5958 = vmatpush1.bf16.msra.mxu0 %v5134
        %5959 = vmatprep.subr.bf16.mxu0 %v5142
        %5960 = vmatpush1.bf16.msra.mxu0 %v5141
        %5961 = vmatprep.subr.bf16.mxu0 %v5149
        %5962 = vmatpush1.bf16.msra.mxu0 %v5148
        %5963 = vmatprep.subr.bf16.mxu0 %v5156
        %5964 = vmatpush1.bf16.msra.mxu0 %v5155
        %5965 = vmatprep.subr.bf16.mxu0 %v5163
        %5966 = vmatpush1.bf16.msra.mxu0 %v5162
        %5967 = vmatprep.subr.bf16.mxu0 %v5170
        %5968 = vmatpush1.bf16.msra.mxu0 %v5169
        %5969 = vmatprep.subr.bf16.mxu0 %v5177
        %5970 = vmatpush1.bf16.msra.mxu0 %v5176
        %5971 = vmatprep.subr.bf16.mxu0 %v5184
        %5972 = vmatpush1.bf16.msra.mxu0 %v5183
        %5973 = vmatprep.subr.bf16.mxu0 %v5191
        %5974 = vmatpush1.bf16.msra.mxu0 %v5190
        %5975 = vmatprep.subr.bf16.mxu0 0
        %5976 = vmatpush1.bf16.msra.mxu0 0
        %5977 = vmatprep.subr.bf16.mxu0 0
        %5978 = vmatpush1.bf16.msra.mxu0 0
        %5979 = vmatprep.subr.bf16.mxu0 0
        %5980 = vmatpush1.bf16.msra.mxu0 0
        %5981 = vmatprep.subr.bf16.mxu0 0
        %5982 = vmatpush1.bf16.msra.mxu0 0
        %5983 = vmatprep.subr.bf16.mxu0 0
        %5984 = vmatpush1.bf16.msra.mxu0 0
        %5985 = vmatprep.subr.bf16.mxu0 0
        %5986 = vmatpush1.bf16.msra.mxu0 0
        %5987 = vmatprep.subr.bf16.mxu0 0
        %5988 = vmatpush1.bf16.msra.mxu0 0
        %5989 = vmatprep.mubr.bf16.mxu0 %v5369
        %5990 = vmatmul.mubr.bf16.gmra.mrb[0].mxu0 %v4201
        %v5991 = vpop.f32.mrb[0].mxu0
        %v5992 = vadd.f32 %v5879, %v5991
        %v5993 = vpop.f32.mrb[0].mxu0
        %v5994 = vadd.f32 %v5881, %v5993
        %v5995 = vpop.f32.mrb[0].mxu0
        %v5996 = vadd.f32 %v5883, %v5995
        %v5997 = vpop.f32.mrb[0].mxu0
        %v5998 = vadd.f32 %v5885, %v5997
        %5999 = vmatprep.mubr.bf16.mxu0 %v5372
        %6000 = vmatmul.mubr.bf16.gmra.mrb[0].mxu0 %v4205
        %v6001 = vpop.f32.mrb[0].mxu0
        %v6002 = vadd.f32 %v5889, %v6001
        %v6003 = vpop.f32.mrb[0].mxu0
        %v6004 = vadd.f32 %v5891, %v6003
        %v6005 = vpop.f32.mrb[0].mxu0
        %v6006 = vadd.f32 %v5893, %v6005
        %v6007 = vpop.f32.mrb[0].mxu0
        %v6008 = vadd.f32 %v5895, %v6007
        %6009 = vmatprep.mubr.bf16.mxu0 %v5375
        %6010 = vmatmul.mubr.bf16.gmra.mrb[0].mxu0 %v4209
        %v6011 = vpop.f32.mrb[0].mxu0
        %v6012 = vadd.f32 %v5899, %v6011
        %v6013 = vpop.f32.mrb[0].mxu0
        %v6014 = vadd.f32 %v5901, %v6013
        %v6015 = vpop.f32.mrb[0].mxu0
        %v6016 = vadd.f32 %v5903, %v6015
        %v6017 = vpop.f32.mrb[0].mxu0
        %v6018 = vadd.f32 %v5905, %v6017
        %6019 = vmatprep.mubr.bf16.mxu0 %v5378
        %6020 = vmatmul.mubr.bf16.gmra.mrb[0].mxu0 %v4213
        %v6021 = vpop.f32.mrb[0].mxu0
        %v6022 = vadd.f32 %v5909, %v6021
        %v6023 = vpop.f32.mrb[0].mxu0
        %v6024 = vadd.f32 %v5911, %v6023
        %v6025 = vpop.f32.mrb[0].mxu0
        %v6026 = vadd.f32 %v5913, %v6025
        %v6027 = vpop.f32.mrb[0].mxu0
        %v6028 = vadd.f32 %v5915, %v6027
        %6029 = vmatprep.mubr.bf16.mxu0 %v5381
        %6030 = vmatmul.mubr.bf16.gmra.mrb[0].mxu0 %v4217
        %v6031 = vpop.f32.mrb[0].mxu0
        %v6032 = vadd.f32 %v5919, %v6031
        %v6033 = vpop.f32.mrb[0].mxu0
        %v6034 = vadd.f32 %v5921, %v6033
        %v6035 = vpop.f32.mrb[0].mxu0
        %v6036 = vadd.f32 %v5923, %v6035
        %v6037 = vpop.f32.mrb[0].mxu0
        %v6038 = vadd.f32 %v5925, %v6037
        %6039 = vmatprep.mubr.bf16.mxu0 %v5384
        %6040 = vmatmul.mubr.bf16.gmra.mrb[0].mxu0 %v4221
        %v6041 = vpop.f32.mrb[0].mxu0
        %v6042 = vadd.f32 %v5929, %v6041
        %v6043 = vpop.f32.mrb[0].mxu0
        %v6044 = vadd.f32 %v5931, %v6043
        %v6045 = vpop.f32.mrb[0].mxu0
        %v6046 = vadd.f32 %v5933, %v6045
        %v6047 = vpop.f32.mrb[0].mxu0
        %v6048 = vadd.f32 %v5935, %v6047
        %6049 = vmatprep.mubr.bf16.mxu0 %v5387
        %6050 = vmatmul.mubr.bf16.gmra.mrb[0].mxu0 %v4225
        %v6051 = vpop.f32.mrb[0].mxu0
        %v6052 = vadd.f32 %v5939, %v6051
        %v6053 = vpop.f32.mrb[0].mxu0
        %v6054 = vadd.f32 %v5941, %v6053
        %v6055 = vpop.f32.mrb[0].mxu0
        %v6056 = vadd.f32 %v5943, %v6055
        %v6057 = vpop.f32.mrb[0].mxu0
        %v6058 = vadd.f32 %v5945, %v6057
        %6059 = vmatprep.mubr.bf16.mxu0 %v5390
        %6060 = vmatmul.mubr.bf16.gmra.mrb[0].mxu0 %v4229
        %v6061 = vpop.f32.mrb[0].mxu0
        %v6062 = vadd.f32 %v5949, %v6061
        %v6063 = vpop.f32.mrb[0].mxu0
        %v6064 = vadd.f32 %v5951, %v6063
        %v6065 = vpop.f32.mrb[0].mxu0
        %v6066 = vadd.f32 %v5953, %v6065
        %v6067 = vpop.f32.mrb[0].mxu0
        %v6068 = vadd.f32 %v5955, %v6067
        %6069 = vdwg.mxu0
        %6070 = vmatprep.subr.bf16.mxu0 0
        %6071 = vmatpush1.bf16.msra.mxu0 %v5024
        %6072 = vmatprep.subr.bf16.mxu0 0
        %6073 = vmatpush1.bf16.msra.mxu0 %v5031
        %6074 = vmatprep.subr.bf16.mxu0 0
        %6075 = vmatpush1.bf16.msra.mxu0 %v5038
        %6076 = vmatprep.subr.bf16.mxu0 0
        %6077 = vmatpush1.bf16.msra.mxu0 %v5045
        %6078 = vmatprep.subr.bf16.mxu0 0
        %6079 = vmatpush1.bf16.msra.mxu0 %v5052
        %6080 = vmatprep.subr.bf16.mxu0 0
        %6081 = vmatpush1.bf16.msra.mxu0 %v5059
        %6082 = vmatprep.subr.bf16.mxu0 0
        %6083 = vmatpush1.bf16.msra.mxu0 %v5066
        %6084 = vmatprep.subr.bf16.mxu0 0
        %6085 = vmatpush1.bf16.msra.mxu0 %v5073
        %6086 = vmatprep.subr.bf16.mxu0 0
        %6087 = vmatpush1.bf16.msra.mxu0 %v5080
        %6088 = vmatprep.subr.bf16.mxu0 0
        %6089 = vmatpush1.bf16.msra.mxu0 %v5087
        %6090 = vmatprep.subr.bf16.mxu0 0
        %6091 = vmatpush1.bf16.msra.mxu0 %v5094
        %6092 = vmatprep.subr.bf16.mxu0 0
        %6093 = vmatpush1.bf16.msra.mxu0 %v5101
        %6094 = vmatprep.subr.bf16.mxu0 0
        %6095 = vmatpush1.bf16.msra.mxu0 %v5108
        %6096 = vmatprep.subr.bf16.mxu0 0
        %6097 = vmatpush1.bf16.msra.mxu0 %v5115
        %6098 = vmatprep.subr.bf16.mxu0 0
        %6099 = vmatpush1.bf16.msra.mxu0 %v5122
        %6100 = vmatprep.subr.bf16.mxu0 0
        %6101 = vmatpush1.bf16.msra.mxu0 %v5129
        %6102 = vmatprep.mubr.bf16.mxu0 %v4200
        %6103 = vmatmul.mubr.bf16.gmra.mrb[0].mxu0 %v4199
        %v6104 = vpop.f32.mrb[0].mxu0
        %v6105 = vadd.f32 %v4460, %v6104
        %v6106 = vpop.f32.mrb[0].mxu0
        %v6107 = vpop.f32.mrb[0].mxu0
        %v6108 = vadd.f32 %v4460, %v6107
        %v6109 = vpop.f32.mrb[0].mxu0
        %6110 = vmatprep.mubr.bf16.mxu0 %v4204
        %6111 = vmatmul.mubr.bf16.gmra.mrb[0].mxu0 %v4203
        %v6112 = vpop.f32.mrb[0].mxu0
        %v6113 = vadd.f32 %v4460, %v6112
        %v6114 = vpop.f32.mrb[0].mxu0
        %v6115 = vpop.f32.mrb[0].mxu0
        %v6116 = vadd.f32 %v4460, %v6115
        %v6117 = vpop.f32.mrb[0].mxu0
        %6118 = vmatprep.mubr.bf16.mxu0 %v4208
        %6119 = vmatmul.mubr.bf16.gmra.mrb[0].mxu0 %v4207
        %v6120 = vpop.f32.mrb[0].mxu0
        %v6121 = vadd.f32 %v4460, %v6120
        %v6122 = vpop.f32.mrb[0].mxu0
        %v6123 = vpop.f32.mrb[0].mxu0
        %v6124 = vadd.f32 %v4460, %v6123
        %v6125 = vpop.f32.mrb[0].mxu0
        %6126 = vmatprep.mubr.bf16.mxu0 %v4212
        %6127 = vmatmul.mubr.bf16.gmra.mrb[0].mxu0 %v4211
        %v6128 = vpop.f32.mrb[0].mxu0
        %v6129 = vadd.f32 %v4460, %v6128
        %v6130 = vpop.f32.mrb[0].mxu0
        %v6131 = vpop.f32.mrb[0].mxu0
        %v6132 = vadd.f32 %v4460, %v6131
        %v6133 = vpop.f32.mrb[0].mxu0
        %6134 = vmatprep.mubr.bf16.mxu0 %v4216
        %6135 = vmatmul.mubr.bf16.gmra.mrb[0].mxu0 %v4215
        %v6136 = vpop.f32.mrb[0].mxu0
        %v6137 = vadd.f32 %v4460, %v6136
        %v6138 = vpop.f32.mrb[0].mxu0
        %v6139 = vpop.f32.mrb[0].mxu0
        %v6140 = vadd.f32 %v4460, %v6139
        %v6141 = vpop.f32.mrb[0].mxu0
        %6142 = vmatprep.mubr.bf16.mxu0 %v4220
        %6143 = vmatmul.mubr.bf16.gmra.mrb[0].mxu0 %v4219
        %v6144 = vpop.f32.mrb[0].mxu0
        %v6145 = vadd.f32 %v4460, %v6144
        %v6146 = vpop.f32.mrb[0].mxu0
        %v6147 = vpop.f32.mrb[0].mxu0
        %v6148 = vadd.f32 %v4460, %v6147
        %v6149 = vpop.f32.mrb[0].mxu0
        %6150 = vmatprep.mubr.bf16.mxu0 %v4224
        %6151 = vmatmul.mubr.bf16.gmra.mrb[0].mxu0 %v4223
        %v6152 = vpop.f32.mrb[0].mxu0
        %v6153 = vadd.f32 %v4460, %v6152
        %v6154 = vpop.f32.mrb[0].mxu0
        %v6155 = vpop.f32.mrb[0].mxu0
        %v6156 = vadd.f32 %v4460, %v6155
        %v6157 = vpop.f32.mrb[0].mxu0
        %6158 = vmatprep.mubr.bf16.mxu0 %v4228
        %6159 = vmatmul.mubr.bf16.gmra.mrb[0].mxu0 %v4227
        %v6160 = vpop.f32.mrb[0].mxu0
        %v6161 = vadd.f32 %v4460, %v6160
        %v6162 = vpop.f32.mrb[0].mxu0
        %v6163 = vpop.f32.mrb[0].mxu0
        %v6164 = vadd.f32 %v4460, %v6163
        %v6165 = vpop.f32.mrb[0].mxu0
        %6166 = vdwg.mxu0
        %6167 = vmatprep.subr.bf16.mxu0 0
        %6168 = vmatpush1.bf16.msra.mxu0 %v5136
        %6169 = vmatprep.subr.bf16.mxu0 0
        %6170 = vmatpush1.bf16.msra.mxu0 %v5143
        %6171 = vmatprep.subr.bf16.mxu0 0
        %6172 = vmatpush1.bf16.msra.mxu0 %v5150
        %6173 = vmatprep.subr.bf16.mxu0 0
        %6174 = vmatpush1.bf16.msra.mxu0 %v5157
        %6175 = vmatprep.subr.bf16.mxu0 0
        %6176 = vmatpush1.bf16.msra.mxu0 %v5164
        %6177 = vmatprep.subr.bf16.mxu0 0
        %6178 = vmatpush1.bf16.msra.mxu0 %v5171
        %6179 = vmatprep.subr.bf16.mxu0 0
        %6180 = vmatpush1.bf16.msra.mxu0 %v5178
        %6181 = vmatprep.subr.bf16.mxu0 0
        %6182 = vmatpush1.bf16.msra.mxu0 %v5185
        %6183 = vmatprep.subr.bf16.mxu0 0
        %6184 = vmatpush1.bf16.msra.mxu0 %v5192
        %6185 = vmatprep.subr.bf16.mxu0 0
        %6186 = vmatpush1.bf16.msra.mxu0 0
        %6187 = vmatprep.subr.bf16.mxu0 0
        %6188 = vmatpush1.bf16.msra.mxu0 0
        %6189 = vmatprep.subr.bf16.mxu0 0
        %6190 = vmatpush1.bf16.msra.mxu0 0
        %6191 = vmatprep.subr.bf16.mxu0 0
        %6192 = vmatpush1.bf16.msra.mxu0 0
        %6193 = vmatprep.subr.bf16.mxu0 0
        %6194 = vmatpush1.bf16.msra.mxu0 0
        %6195 = vmatprep.subr.bf16.mxu0 0
        %6196 = vmatpush1.bf16.msra.mxu0 0
        %6197 = vmatprep.subr.bf16.mxu0 0
        %6198 = vmatpush1.bf16.msra.mxu0 0
        %6199 = vmatprep.mubr.bf16.mxu0 %v5369
        %6200 = vmatmul.mubr.bf16.gmra.mrb[0].mxu0 %v4201
        %v6201 = vpop.f32.mrb[0].mxu0
        %v6202 = vadd.f32 %v6105, %v6201
        %v6203 = vpop.f32.mrb[0].mxu0
        %v6204 = vpop.f32.mrb[0].mxu0
        %v6205 = vadd.f32 %v6108, %v6204
        %v6206 = vpop.f32.mrb[0].mxu0
        %6207 = vmatprep.mubr.bf16.mxu0 %v5372
        %6208 = vmatmul.mubr.bf16.gmra.mrb[0].mxu0 %v4205
        %v6209 = vpop.f32.mrb[0].mxu0
        %v6210 = vadd.f32 %v6113, %v6209
        %v6211 = vpop.f32.mrb[0].mxu0
        %v6212 = vpop.f32.mrb[0].mxu0
        %v6213 = vadd.f32 %v6116, %v6212
        %v6214 = vpop.f32.mrb[0].mxu0
        %6215 = vmatprep.mubr.bf16.mxu0 %v5375
        %6216 = vmatmul.mubr.bf16.gmra.mrb[0].mxu0 %v4209
        %v6217 = vpop.f32.mrb[0].mxu0
        %v6218 = vadd.f32 %v6121, %v6217
        %v6219 = vpop.f32.mrb[0].mxu0
        %v6220 = vpop.f32.mrb[0].mxu0
        %v6221 = vadd.f32 %v6124, %v6220
        %v6222 = vpop.f32.mrb[0].mxu0
        %6223 = vmatprep.mubr.bf16.mxu0 %v5378
        %6224 = vmatmul.mubr.bf16.gmra.mrb[0].mxu0 %v4213
        %v6225 = vpop.f32.mrb[0].mxu0
        %v6226 = vadd.f32 %v6129, %v6225
        %v6227 = vpop.f32.mrb[0].mxu0
        %v6228 = vpop.f32.mrb[0].mxu0
        %v6229 = vadd.f32 %v6132, %v6228
        %v6230 = vpop.f32.mrb[0].mxu0
        %6231 = vmatprep.mubr.bf16.mxu0 %v5381
        %6232 = vmatmul.mubr.bf16.gmra.mrb[0].mxu0 %v4217
        %v6233 = vpop.f32.mrb[0].mxu0
        %v6234 = vadd.f32 %v6137, %v6233
        %v6235 = vpop.f32.mrb[0].mxu0
        %v6236 = vpop.f32.mrb[0].mxu0
        %v6237 = vadd.f32 %v6140, %v6236
        %v6238 = vpop.f32.mrb[0].mxu0
        %6239 = vmatprep.mubr.bf16.mxu0 %v5384
        %6240 = vmatmul.mubr.bf16.gmra.mrb[0].mxu0 %v4221
        %v6241 = vpop.f32.mrb[0].mxu0
        %v6242 = vadd.f32 %v6145, %v6241
        %v6243 = vpop.f32.mrb[0].mxu0
        %v6244 = vpop.f32.mrb[0].mxu0
        %v6245 = vadd.f32 %v6148, %v6244
        %v6246 = vpop.f32.mrb[0].mxu0
        %6247 = vmatprep.mubr.bf16.mxu0 %v5387
        %6248 = vmatmul.mubr.bf16.gmra.mrb[0].mxu0 %v4225
        %v6249 = vpop.f32.mrb[0].mxu0
        %v6250 = vadd.f32 %v6153, %v6249
        %v6251 = vpop.f32.mrb[0].mxu0
        %v6252 = vpop.f32.mrb[0].mxu0
        %v6253 = vadd.f32 %v6156, %v6252
        %v6254 = vpop.f32.mrb[0].mxu0
        %6255 = vmatprep.mubr.bf16.mxu0 %v5390
        %6256 = vmatmul.mubr.bf16.gmra.mrb[0].mxu0 %v4229
        %v6257 = vpop.f32.mrb[0].mxu0
        %v6258 = vadd.f32 %v6161, %v6257
        %v6259 = vpop.f32.mrb[0].mxu0
        %v6260 = vpop.f32.mrb[0].mxu0
        %v6261 = vadd.f32 %v6164, %v6260
        %v6262 = vpop.f32.mrb[0].mxu0
        %6263 = vdwg.mxu0
        %v6264 = vxor.u32 %v5540, 2147483648
        %v6265 = vxor.u32 %v5542, 2147483648
        %v6266 = vxor.u32 %v5766, 2147483648
        %v6267 = vxor.u32 %v5768, 2147483648
        %v6268 = vxor.u32 %v5992, 2147483648
        %v6269 = vxor.u32 %v5994, 2147483648
        %v6270 = vxor.u32 %v6202, 2147483648
        %v6271 = vxor.u32 %v5544, 2147483648
        %v6272 = vxor.u32 %v5546, 2147483648
        %v6273 = vxor.u32 %v5770, 2147483648
        %v6274 = vxor.u32 %v5772, 2147483648
        %v6275 = vxor.u32 %v5996, 2147483648
        %v6276 = vxor.u32 %v5998, 2147483648
        %v6277 = vxor.u32 %v6205, 2147483648
        %v6278 = vxor.u32 %v5550, 2147483648
        %v6279 = vxor.u32 %v5552, 2147483648
        %v6280 = vxor.u32 %v5776, 2147483648
        %v6281 = vxor.u32 %v5778, 2147483648
        %v6282 = vxor.u32 %v6002, 2147483648
        %v6283 = vxor.u32 %v6004, 2147483648
        %v6284 = vxor.u32 %v6210, 2147483648
        %v6285 = vxor.u32 %v5554, 2147483648
        %v6286 = vxor.u32 %v5556, 2147483648
        %v6287 = vxor.u32 %v5780, 2147483648
        %v6288 = vxor.u32 %v5782, 2147483648
        %v6289 = vxor.u32 %v6006, 2147483648
        %v6290 = vxor.u32 %v6008, 2147483648
        %v6291 = vxor.u32 %v6213, 2147483648
        %v6292 = vxor.u32 %v5560, 2147483648
        %v6293 = vxor.u32 %v5562, 2147483648
        %v6294 = vxor.u32 %v5786, 2147483648
        %v6295 = vxor.u32 %v5788, 2147483648
        %v6296 = vxor.u32 %v6012, 2147483648
        %v6297 = vxor.u32 %v6014, 2147483648
        %v6298 = vxor.u32 %v6218, 2147483648
        %v6299 = vxor.u32 %v5564, 2147483648
        %v6300 = vxor.u32 %v5566, 2147483648
        %v6301 = vxor.u32 %v5790, 2147483648
        %v6302 = vxor.u32 %v5792, 2147483648
        %v6303 = vxor.u32 %v6016, 2147483648
        %v6304 = vxor.u32 %v6018, 2147483648
        %v6305 = vxor.u32 %v6221, 2147483648
        %v6306 = vxor.u32 %v5570, 2147483648
        %v6307 = vxor.u32 %v5572, 2147483648
        %v6308 = vxor.u32 %v5796, 2147483648
        %v6309 = vxor.u32 %v5798, 2147483648
        %v6310 = vxor.u32 %v6022, 2147483648
        %v6311 = vxor.u32 %v6024, 2147483648
        %v6312 = vxor.u32 %v6226, 2147483648
        %v6313 = vxor.u32 %v5574, 2147483648
        %v6314 = vxor.u32 %v5576, 2147483648
        %v6315 = vxor.u32 %v5800, 2147483648
        %v6316 = vxor.u32 %v5802, 2147483648
        %v6317 = vxor.u32 %v6026, 2147483648
        %v6318 = vxor.u32 %v6028, 2147483648
        %v6319 = vxor.u32 %v6229, 2147483648
        %v6320 = vxor.u32 %v5580, 2147483648
        %v6321 = vxor.u32 %v5582, 2147483648
        %v6322 = vxor.u32 %v5806, 2147483648
        %v6323 = vxor.u32 %v5808, 2147483648
        %v6324 = vxor.u32 %v6032, 2147483648
        %v6325 = vxor.u32 %v6034, 2147483648
        %v6326 = vxor.u32 %v6234, 2147483648
        %v6327 = vxor.u32 %v5584, 2147483648
        %v6328 = vxor.u32 %v5586, 2147483648
        %v6329 = vxor.u32 %v5810, 2147483648
        %v6330 = vxor.u32 %v5812, 2147483648
        %v6331 = vxor.u32 %v6036, 2147483648
        %v6332 = vxor.u32 %v6038, 2147483648
        %v6333 = vxor.u32 %v6237, 2147483648
        %v6334 = vxor.u32 %v5590, 2147483648
        %v6335 = vxor.u32 %v5592, 2147483648
        %v6336 = vxor.u32 %v5816, 2147483648
        %v6337 = vxor.u32 %v5818, 2147483648
        %v6338 = vxor.u32 %v6042, 2147483648
        %v6339 = vxor.u32 %v6044, 2147483648
        %v6340 = vxor.u32 %v6242, 2147483648
        %v6341 = vxor.u32 %v5594, 2147483648
        %v6342 = vxor.u32 %v5596, 2147483648
        %v6343 = vxor.u32 %v5820, 2147483648
        %v6344 = vxor.u32 %v5822, 2147483648
        %v6345 = vxor.u32 %v6046, 2147483648
        %v6346 = vxor.u32 %v6048, 2147483648
        %v6347 = vxor.u32 %v6245, 2147483648
        %v6348 = vxor.u32 %v5600, 2147483648
        %v6349 = vxor.u32 %v5602, 2147483648
        %v6350 = vxor.u32 %v5826, 2147483648
        %v6351 = vxor.u32 %v5828, 2147483648
        %v6352 = vxor.u32 %v6052, 2147483648
        %v6353 = vxor.u32 %v6054, 2147483648
        %v6354 = vxor.u32 %v6250, 2147483648
        %v6355 = vxor.u32 %v5604, 2147483648
        %v6356 = vxor.u32 %v5606, 2147483648
        %v6357 = vxor.u32 %v5830, 2147483648
        %v6358 = vxor.u32 %v5832, 2147483648
        %v6359 = vxor.u32 %v6056, 2147483648
        %v6360 = vxor.u32 %v6058, 2147483648
        %v6361 = vxor.u32 %v6253, 2147483648
        %v6362 = vxor.u32 %v5610, 2147483648
        %v6363 = vxor.u32 %v5612, 2147483648
        %v6364 = vxor.u32 %v5836, 2147483648
        %v6365 = vxor.u32 %v5838, 2147483648
        %v6366 = vxor.u32 %v6062, 2147483648
        %v6367 = vxor.u32 %v6064, 2147483648
        %v6368 = vxor.u32 %v6258, 2147483648
        %v6369 = vxor.u32 %v5614, 2147483648
        %v6370 = vxor.u32 %v5616, 2147483648
        %v6371 = vxor.u32 %v5840, 2147483648
        %v6372 = vxor.u32 %v5842, 2147483648
        %v6373 = vxor.u32 %v6066, 2147483648
        %v6374 = vxor.u32 %v6068, 2147483648
        %v6375 = vxor.u32 %v6261, 2147483648
        %v6376 = vmul.f32 %v6264, 1.442695
        %v6377 = vpow.pop %v6376
        %v6378 = vmul.f32 %v6265, 1.442695
        %v6379 = vpow.pop %v6378
        %v6380 = vmul.f32 %v6266, 1.442695
        %v6381 = vpow.pop %v6380
        %v6382 = vmul.f32 %v6267, 1.442695
        %v6383 = vpow.pop %v6382
        %v6384 = vmul.f32 %v6268, 1.442695
        %v6385 = vpow.pop %v6384
        %v6386 = vmul.f32 %v6269, 1.442695
        %v6387 = vpow.pop %v6386
        %v6388 = vmul.f32 %v6270, 1.442695
        %v6389 = vpow.pop %v6388
        %v6390 = vmul.f32 %v6271, 1.442695
        %v6391 = vpow.pop %v6390
        %v6392 = vmul.f32 %v6272, 1.442695
        %v6393 = vpow.pop %v6392
        %v6394 = vmul.f32 %v6273, 1.442695
        %v6395 = vpow.pop %v6394
        %v6396 = vmul.f32 %v6274, 1.442695
        %v6397 = vpow.pop %v6396
        %v6398 = vmul.f32 %v6275, 1.442695
        %v6399 = vpow.pop %v6398
        %v6400 = vmul.f32 %v6276, 1.442695
        %v6401 = vpow.pop %v6400
        %v6402 = vmul.f32 %v6277, 1.442695
        %v6403 = vpow.pop %v6402
        %v6404 = vmul.f32 %v6278, 1.442695
        %v6405 = vpow.pop %v6404
        %v6406 = vmul.f32 %v6279, 1.442695
        %v6407 = vpow.pop %v6406
        %v6408 = vmul.f32 %v6280, 1.442695
        %v6409 = vpow.pop %v6408
        %v6410 = vmul.f32 %v6281, 1.442695
        %v6411 = vpow.pop %v6410
        %v6412 = vmul.f32 %v6282, 1.442695
        %v6413 = vpow.pop %v6412
        %v6414 = vmul.f32 %v6283, 1.442695
        %v6415 = vpow.pop %v6414
        %v6416 = vmul.f32 %v6284, 1.442695
        %v6417 = vpow.pop %v6416
        %v6418 = vmul.f32 %v6285, 1.442695
        %v6419 = vpow.pop %v6418
        %v6420 = vmul.f32 %v6286, 1.442695
        %v6421 = vpow.pop %v6420
        %v6422 = vmul.f32 %v6287, 1.442695
        %v6423 = vpow.pop %v6422
        %v6424 = vmul.f32 %v6288, 1.442695
        %v6425 = vpow.pop %v6424
        %v6426 = vmul.f32 %v6289, 1.442695
        %v6427 = vpow.pop %v6426
        %v6428 = vmul.f32 %v6290, 1.442695
        %v6429 = vpow.pop %v6428
        %v6430 = vmul.f32 %v6291, 1.442695
        %v6431 = vpow.pop %v6430
        %v6432 = vmul.f32 %v6292, 1.442695
        %v6433 = vpow.pop %v6432
        %v6434 = vmul.f32 %v6293, 1.442695
        %v6435 = vpow.pop %v6434
        %v6436 = vmul.f32 %v6294, 1.442695
        %v6437 = vpow.pop %v6436
        %v6438 = vmul.f32 %v6295, 1.442695
        %v6439 = vpow.pop %v6438
        %v6440 = vmul.f32 %v6296, 1.442695
        %v6441 = vpow.pop %v6440
        %v6442 = vmul.f32 %v6297, 1.442695
        %v6443 = vpow.pop %v6442
        %v6444 = vmul.f32 %v6298, 1.442695
        %v6445 = vpow.pop %v6444
        %v6446 = vmul.f32 %v6299, 1.442695
        %v6447 = vpow.pop %v6446
        %v6448 = vmul.f32 %v6300, 1.442695
        %v6449 = vpow.pop %v6448
        %v6450 = vmul.f32 %v6301, 1.442695
        %v6451 = vpow.pop %v6450
        %v6452 = vmul.f32 %v6302, 1.442695
        %v6453 = vpow.pop %v6452
        %v6454 = vmul.f32 %v6303, 1.442695
        %v6455 = vpow.pop %v6454
        %v6456 = vmul.f32 %v6304, 1.442695
        %v6457 = vpow.pop %v6456
        %v6458 = vmul.f32 %v6305, 1.442695
        %v6459 = vpow.pop %v6458
        %v6460 = vmul.f32 %v6306, 1.442695
        %v6461 = vpow.pop %v6460
        %v6462 = vmul.f32 %v6307, 1.442695
        %v6463 = vpow.pop %v6462
        %v6464 = vmul.f32 %v6308, 1.442695
        %v6465 = vpow.pop %v6464
        %v6466 = vmul.f32 %v6309, 1.442695
        %v6467 = vpow.pop %v6466
        %v6468 = vmul.f32 %v6310, 1.442695
        %v6469 = vpow.pop %v6468
        %v6470 = vmul.f32 %v6311, 1.442695
        %v6471 = vpow.pop %v6470
        %v6472 = vmul.f32 %v6312, 1.442695
        %v6473 = vpow.pop %v6472
        %v6474 = vmul.f32 %v6313, 1.442695
        %v6475 = vpow.pop %v6474
        %v6476 = vmul.f32 %v6314, 1.442695
        %v6477 = vpow.pop %v6476
        %v6478 = vmul.f32 %v6315, 1.442695
        %v6479 = vpow.pop %v6478
        %v6480 = vmul.f32 %v6316, 1.442695
        %v6481 = vpow.pop %v6480
        %v6482 = vmul.f32 %v6317, 1.442695
        %v6483 = vpow.pop %v6482
        %v6484 = vmul.f32 %v6318, 1.442695
        %v6485 = vpow.pop %v6484
        %v6486 = vmul.f32 %v6319, 1.442695
        %v6487 = vpow.pop %v6486
        %v6488 = vmul.f32 %v6320, 1.442695
        %v6489 = vpow.pop %v6488
        %v6490 = vmul.f32 %v6321, 1.442695
        %v6491 = vpow.pop %v6490
        %v6492 = vmul.f32 %v6322, 1.442695
        %v6493 = vpow.pop %v6492
        %v6494 = vmul.f32 %v6323, 1.442695
        %v6495 = vpow.pop %v6494
        %v6496 = vmul.f32 %v6324, 1.442695
        %v6497 = vpow.pop %v6496
        %v6498 = vmul.f32 %v6325, 1.442695
        %v6499 = vpow.pop %v6498
        %v6500 = vmul.f32 %v6326, 1.442695
        %v6501 = vpow.pop %v6500
        %v6502 = vmul.f32 %v6327, 1.442695
        %v6503 = vpow.pop %v6502
        %v6504 = vmul.f32 %v6328, 1.442695
        %v6505 = vpow.pop %v6504
        %v6506 = vmul.f32 %v6329, 1.442695
        %v6507 = vpow.pop %v6506
        %v6508 = vmul.f32 %v6330, 1.442695
        %v6509 = vpow.pop %v6508
        %v6510 = vmul.f32 %v6331, 1.442695
        %v6511 = vpow.pop %v6510
        %v6512 = vmul.f32 %v6332, 1.442695
        %v6513 = vpow.pop %v6512
        %v6514 = vmul.f32 %v6333, 1.442695
        %v6515 = vpow.pop %v6514
        %v6516 = vmul.f32 %v6334, 1.442695
        %v6517 = vpow.pop %v6516
        %v6518 = vmul.f32 %v6335, 1.442695
        %v6519 = vpow.pop %v6518
        %v6520 = vmul.f32 %v6336, 1.442695
        %v6521 = vpow.pop %v6520
        %v6522 = vmul.f32 %v6337, 1.442695
        %v6523 = vpow.pop %v6522
        %v6524 = vmul.f32 %v6338, 1.442695
        %v6525 = vpow.pop %v6524
        %v6526 = vmul.f32 %v6339, 1.442695
        %v6527 = vpow.pop %v6526
        %v6528 = vmul.f32 %v6340, 1.442695
        %v6529 = vpow.pop %v6528
        %v6530 = vmul.f32 %v6341, 1.442695
        %v6531 = vpow.pop %v6530
        %v6532 = vmul.f32 %v6342, 1.442695
        %v6533 = vpow.pop %v6532
        %v6534 = vmul.f32 %v6343, 1.442695
        %v6535 = vpow.pop %v6534
        %v6536 = vmul.f32 %v6344, 1.442695
        %v6537 = vpow.pop %v6536
        %v6538 = vmul.f32 %v6345, 1.442695
        %v6539 = vpow.pop %v6538
        %v6540 = vmul.f32 %v6346, 1.442695
        %v6541 = vpow.pop %v6540
        %v6542 = vmul.f32 %v6347, 1.442695
        %v6543 = vpow.pop %v6542
        %v6544 = vmul.f32 %v6348, 1.442695
        %v6545 = vpow.pop %v6544
        %v6546 = vmul.f32 %v6349, 1.442695
        %v6547 = vpow.pop %v6546
        %v6548 = vmul.f32 %v6350, 1.442695
        %v6549 = vpow.pop %v6548
        %v6550 = vmul.f32 %v6351, 1.442695
        %v6551 = vpow.pop %v6550
        %v6552 = vmul.f32 %v6352, 1.442695
        %v6553 = vpow.pop %v6552
        %v6554 = vmul.f32 %v6353, 1.442695
        %v6555 = vpow.pop %v6554
        %v6556 = vmul.f32 %v6354, 1.442695
        %v6557 = vpow.pop %v6556
        %v6558 = vmul.f32 %v6355, 1.442695
        %v6559 = vpow.pop %v6558
        %v6560 = vmul.f32 %v6356, 1.442695
        %v6561 = vpow.pop %v6560
        %v6562 = vmul.f32 %v6357, 1.442695
        %v6563 = vpow.pop %v6562
        %v6564 = vmul.f32 %v6358, 1.442695
        %v6565 = vpow.pop %v6564
        %v6566 = vmul.f32 %v6359, 1.442695
        %v6567 = vpow.pop %v6566
        %v6568 = vmul.f32 %v6360, 1.442695
        %v6569 = vpow.pop %v6568
        %v6570 = vmul.f32 %v6361, 1.442695
        %v6571 = vpow.pop %v6570
        %v6572 = vmul.f32 %v6362, 1.442695
        %v6573 = vpow.pop %v6572
        %v6574 = vmul.f32 %v6363, 1.442695
        %v6575 = vpow.pop %v6574
        %v6576 = vmul.f32 %v6364, 1.442695
        %v6577 = vpow.pop %v6576
        %v6578 = vmul.f32 %v6365, 1.442695
        %v6579 = vpow.pop %v6578
        %v6580 = vmul.f32 %v6366, 1.442695
        %v6581 = vpow.pop %v6580
        %v6582 = vmul.f32 %v6367, 1.442695
        %v6583 = vpow.pop %v6582
        %v6584 = vmul.f32 %v6368, 1.442695
        %v6585 = vpow.pop %v6584
        %v6586 = vmul.f32 %v6369, 1.442695
        %v6587 = vpow.pop %v6586
        %v6588 = vmul.f32 %v6370, 1.442695
        %v6589 = vpow.pop %v6588
        %v6590 = vmul.f32 %v6371, 1.442695
        %v6591 = vpow.pop %v6590
        %v6592 = vmul.f32 %v6372, 1.442695
        %v6593 = vpow.pop %v6592
        %v6594 = vmul.f32 %v6373, 1.442695
        %v6595 = vpow.pop %v6594
        %v6596 = vmul.f32 %v6374, 1.442695
        %v6597 = vpow.pop %v6596
        %v6598 = vmul.f32 %v6375, 1.442695
        %v6599 = vpow.pop %v6598
        %v6600 = vadd.f32 %v6377, 1.0
        %v6601 = vadd.f32 %v6379, 1.0
        %v6602 = vadd.f32 %v6381, 1.0
        %v6603 = vadd.f32 %v6383, 1.0
        %v6604 = vadd.f32 %v6385, 1.0
        %v6605 = vadd.f32 %v6387, 1.0
        %v6606 = vadd.f32 %v6389, 1.0
        %v6607 = vadd.f32 %v6391, 1.0
        %v6608 = vadd.f32 %v6393, 1.0
        %v6609 = vadd.f32 %v6395, 1.0
        %v6610 = vadd.f32 %v6397, 1.0
        %v6611 = vadd.f32 %v6399, 1.0
        %v6612 = vadd.f32 %v6401, 1.0
        %v6613 = vadd.f32 %v6403, 1.0
        %v6614 = vadd.f32 %v6405, 1.0
        %v6615 = vadd.f32 %v6407, 1.0
        %v6616 = vadd.f32 %v6409, 1.0
        %v6617 = vadd.f32 %v6411, 1.0
        %v6618 = vadd.f32 %v6413, 1.0
        %v6619 = vadd.f32 %v6415, 1.0
        %v6620 = vadd.f32 %v6417, 1.0
        %v6621 = vadd.f32 %v6419, 1.0
        %v6622 = vadd.f32 %v6421, 1.0
        %v6623 = vadd.f32 %v6423, 1.0
        %v6624 = vadd.f32 %v6425, 1.0
        %v6625 = vadd.f32 %v6427, 1.0
        %v6626 = vadd.f32 %v6429, 1.0
        %v6627 = vadd.f32 %v6431, 1.0
        %v6628 = vadd.f32 %v6433, 1.0
        %v6629 = vadd.f32 %v6435, 1.0
        %v6630 = vadd.f32 %v6437, 1.0
        %v6631 = vadd.f32 %v6439, 1.0
        %v6632 = vadd.f32 %v6441, 1.0
        %v6633 = vadd.f32 %v6443, 1.0
        %v6634 = vadd.f32 %v6445, 1.0
        %v6635 = vadd.f32 %v6447, 1.0
        %v6636 = vadd.f32 %v6449, 1.0
        %v6637 = vadd.f32 %v6451, 1.0
        %v6638 = vadd.f32 %v6453, 1.0
        %v6639 = vadd.f32 %v6455, 1.0
        %v6640 = vadd.f32 %v6457, 1.0
        %v6641 = vadd.f32 %v6459, 1.0
        %v6642 = vadd.f32 %v6461, 1.0
        %v6643 = vadd.f32 %v6463, 1.0
        %v6644 = vadd.f32 %v6465, 1.0
        %v6645 = vadd.f32 %v6467, 1.0
        %v6646 = vadd.f32 %v6469, 1.0
        %v6647 = vadd.f32 %v6471, 1.0
        %v6648 = vadd.f32 %v6473, 1.0
        %v6649 = vadd.f32 %v6475, 1.0
        %v6650 = vadd.f32 %v6477, 1.0
        %v6651 = vadd.f32 %v6479, 1.0
        %v6652 = vadd.f32 %v6481, 1.0
        %v6653 = vadd.f32 %v6483, 1.0
        %v6654 = vadd.f32 %v6485, 1.0
        %v6655 = vadd.f32 %v6487, 1.0
        %v6656 = vadd.f32 %v6489, 1.0
        %v6657 = vadd.f32 %v6491, 1.0
        %v6658 = vadd.f32 %v6493, 1.0
        %v6659 = vadd.f32 %v6495, 1.0
        %v6660 = vadd.f32 %v6497, 1.0
        %v6661 = vadd.f32 %v6499, 1.0
        %v6662 = vadd.f32 %v6501, 1.0
        %v6663 = vadd.f32 %v6503, 1.0
        %v6664 = vadd.f32 %v6505, 1.0
        %v6665 = vadd.f32 %v6507, 1.0
        %v6666 = vadd.f32 %v6509, 1.0
        %v6667 = vadd.f32 %v6511, 1.0
        %v6668 = vadd.f32 %v6513, 1.0
        %v6669 = vadd.f32 %v6515, 1.0
        %v6670 = vadd.f32 %v6517, 1.0
        %v6671 = vadd.f32 %v6519, 1.0
        %v6672 = vadd.f32 %v6521, 1.0
        %v6673 = vadd.f32 %v6523, 1.0
        %v6674 = vadd.f32 %v6525, 1.0
        %v6675 = vadd.f32 %v6527, 1.0
        %v6676 = vadd.f32 %v6529, 1.0
        %v6677 = vadd.f32 %v6531, 1.0
        %v6678 = vadd.f32 %v6533, 1.0
        %v6679 = vadd.f32 %v6535, 1.0
        %v6680 = vadd.f32 %v6537, 1.0
        %v6681 = vadd.f32 %v6539, 1.0
        %v6682 = vadd.f32 %v6541, 1.0
        %v6683 = vadd.f32 %v6543, 1.0
        %v6684 = vadd.f32 %v6545, 1.0
        %v6685 = vadd.f32 %v6547, 1.0
        %v6686 = vadd.f32 %v6549, 1.0
        %v6687 = vadd.f32 %v6551, 1.0
        %v6688 = vadd.f32 %v6553, 1.0
        %v6689 = vadd.f32 %v6555, 1.0
        %v6690 = vadd.f32 %v6557, 1.0
        %v6691 = vadd.f32 %v6559, 1.0
        %v6692 = vadd.f32 %v6561, 1.0
        %v6693 = vadd.f32 %v6563, 1.0
        %v6694 = vadd.f32 %v6565, 1.0
        %v6695 = vadd.f32 %v6567, 1.0
        %v6696 = vadd.f32 %v6569, 1.0
        %v6697 = vadd.f32 %v6571, 1.0
        %v6698 = vadd.f32 %v6573, 1.0
        %v6699 = vadd.f32 %v6575, 1.0
        %v6700 = vadd.f32 %v6577, 1.0
        %v6701 = vadd.f32 %v6579, 1.0
        %v6702 = vadd.f32 %v6581, 1.0
        %v6703 = vadd.f32 %v6583, 1.0
        %v6704 = vadd.f32 %v6585, 1.0
        %v6705 = vadd.f32 %v6587, 1.0
        %v6706 = vadd.f32 %v6589, 1.0
        %v6707 = vadd.f32 %v6591, 1.0
        %v6708 = vadd.f32 %v6593, 1.0
        %v6709 = vadd.f32 %v6595, 1.0
        %v6710 = vadd.f32 %v6597, 1.0
        %v6711 = vadd.f32 %v6599, 1.0
        %v6712 = vrcp.pop %v6600
        %v6713 = vmul.f32 1.0, %v6712
        %v6714 = vrcp.pop %v6601
        %v6715 = vmul.f32 1.0, %v6714
        %v6716 = vrcp.pop %v6602
        %v6717 = vmul.f32 1.0, %v6716
        %v6718 = vrcp.pop %v6603
        %v6719 = vmul.f32 1.0, %v6718
        %v6720 = vrcp.pop %v6604
        %v6721 = vmul.f32 1.0, %v6720
        %v6722 = vrcp.pop %v6605
        %v6723 = vmul.f32 1.0, %v6722
        %v6724 = vrcp.pop %v6606
        %v6725 = vmul.f32 1.0, %v6724
        %v6726 = vrcp.pop %v6607
        %v6727 = vmul.f32 1.0, %v6726
        %v6728 = vrcp.pop %v6608
        %v6729 = vmul.f32 1.0, %v6728
        %v6730 = vrcp.pop %v6609
        %v6731 = vmul.f32 1.0, %v6730
        %v6732 = vrcp.pop %v6610
        %v6733 = vmul.f32 1.0, %v6732
        %v6734 = vrcp.pop %v6611
        %v6735 = vmul.f32 1.0, %v6734
        %v6736 = vrcp.pop %v6612
        %v6737 = vmul.f32 1.0, %v6736
        %v6738 = vrcp.pop %v6613
        %v6739 = vmul.f32 1.0, %v6738
        %v6740 = vrcp.pop %v6614
        %v6741 = vmul.f32 1.0, %v6740
        %v6742 = vrcp.pop %v6615
        %v6743 = vmul.f32 1.0, %v6742
        %v6744 = vrcp.pop %v6616
        %v6745 = vmul.f32 1.0, %v6744
        %v6746 = vrcp.pop %v6617
        %v6747 = vmul.f32 1.0, %v6746
        %v6748 = vrcp.pop %v6618
        %v6749 = vmul.f32 1.0, %v6748
        %v6750 = vrcp.pop %v6619
        %v6751 = vmul.f32 1.0, %v6750
        %v6752 = vrcp.pop %v6620
        %v6753 = vmul.f32 1.0, %v6752
        %v6754 = vrcp.pop %v6621
        %v6755 = vmul.f32 1.0, %v6754
        %v6756 = vrcp.pop %v6622
        %v6757 = vmul.f32 1.0, %v6756
        %v6758 = vrcp.pop %v6623
        %v6759 = vmul.f32 1.0, %v6758
        %v6760 = vrcp.pop %v6624
        %v6761 = vmul.f32 1.0, %v6760
        %v6762 = vrcp.pop %v6625
        %v6763 = vmul.f32 1.0, %v6762
        %v6764 = vrcp.pop %v6626
        %v6765 = vmul.f32 1.0, %v6764
        %v6766 = vrcp.pop %v6627
        %v6767 = vmul.f32 1.0, %v6766
        %v6768 = vrcp.pop %v6628
        %v6769 = vmul.f32 1.0, %v6768
        %v6770 = vrcp.pop %v6629
        %v6771 = vmul.f32 1.0, %v6770
        %v6772 = vrcp.pop %v6630
        %v6773 = vmul.f32 1.0, %v6772
        %v6774 = vrcp.pop %v6631
        %v6775 = vmul.f32 1.0, %v6774
        %v6776 = vrcp.pop %v6632
        %v6777 = vmul.f32 1.0, %v6776
        %v6778 = vrcp.pop %v6633
        %v6779 = vmul.f32 1.0, %v6778
        %v6780 = vrcp.pop %v6634
        %v6781 = vmul.f32 1.0, %v6780
        %v6782 = vrcp.pop %v6635
        %v6783 = vmul.f32 1.0, %v6782
        %v6784 = vrcp.pop %v6636
        %v6785 = vmul.f32 1.0, %v6784
        %v6786 = vrcp.pop %v6637
        %v6787 = vmul.f32 1.0, %v6786
        %v6788 = vrcp.pop %v6638
        %v6789 = vmul.f32 1.0, %v6788
        %v6790 = vrcp.pop %v6639
        %v6791 = vmul.f32 1.0, %v6790
        %v6792 = vrcp.pop %v6640
        %v6793 = vmul.f32 1.0, %v6792
        %v6794 = vrcp.pop %v6641
        %v6795 = vmul.f32 1.0, %v6794
        %v6796 = vrcp.pop %v6642
        %v6797 = vmul.f32 1.0, %v6796
        %v6798 = vrcp.pop %v6643
        %v6799 = vmul.f32 1.0, %v6798
        %v6800 = vrcp.pop %v6644
        %v6801 = vmul.f32 1.0, %v6800
        %v6802 = vrcp.pop %v6645
        %v6803 = vmul.f32 1.0, %v6802
        %v6804 = vrcp.pop %v6646
        %v6805 = vmul.f32 1.0, %v6804
        %v6806 = vrcp.pop %v6647
        %v6807 = vmul.f32 1.0, %v6806
        %v6808 = vrcp.pop %v6648
        %v6809 = vmul.f32 1.0, %v6808
        %v6810 = vrcp.pop %v6649
        %v6811 = vmul.f32 1.0, %v6810
        %v6812 = vrcp.pop %v6650
        %v6813 = vmul.f32 1.0, %v6812
        %v6814 = vrcp.pop %v6651
        %v6815 = vmul.f32 1.0, %v6814
        %v6816 = vrcp.pop %v6652
        %v6817 = vmul.f32 1.0, %v6816
        %v6818 = vrcp.pop %v6653
        %v6819 = vmul.f32 1.0, %v6818
        %v6820 = vrcp.pop %v6654
        %v6821 = vmul.f32 1.0, %v6820
        %v6822 = vrcp.pop %v6655
        %v6823 = vmul.f32 1.0, %v6822
        %v6824 = vrcp.pop %v6656
        %v6825 = vmul.f32 1.0, %v6824
        %v6826 = vrcp.pop %v6657
        %v6827 = vmul.f32 1.0, %v6826
        %v6828 = vrcp.pop %v6658
        %v6829 = vmul.f32 1.0, %v6828
        %v6830 = vrcp.pop %v6659
        %v6831 = vmul.f32 1.0, %v6830
        %v6832 = vrcp.pop %v6660
        %v6833 = vmul.f32 1.0, %v6832
        %v6834 = vrcp.pop %v6661
        %v6835 = vmul.f32 1.0, %v6834
        %v6836 = vrcp.pop %v6662
        %v6837 = vmul.f32 1.0, %v6836
        %v6838 = vrcp.pop %v6663
        %v6839 = vmul.f32 1.0, %v6838
        %v6840 = vrcp.pop %v6664
        %v6841 = vmul.f32 1.0, %v6840
        %v6842 = vrcp.pop %v6665
        %v6843 = vmul.f32 1.0, %v6842
        %v6844 = vrcp.pop %v6666
        %v6845 = vmul.f32 1.0, %v6844
        %v6846 = vrcp.pop %v6667
        %v6847 = vmul.f32 1.0, %v6846
        %v6848 = vrcp.pop %v6668
        %v6849 = vmul.f32 1.0, %v6848
        %v6850 = vrcp.pop %v6669
        %v6851 = vmul.f32 1.0, %v6850
        %v6852 = vrcp.pop %v6670
        %v6853 = vmul.f32 1.0, %v6852
        %v6854 = vrcp.pop %v6671
        %v6855 = vmul.f32 1.0, %v6854
        %v6856 = vrcp.pop %v6672
        %v6857 = vmul.f32 1.0, %v6856
        %v6858 = vrcp.pop %v6673
        %v6859 = vmul.f32 1.0, %v6858
        %v6860 = vrcp.pop %v6674
        %v6861 = vmul.f32 1.0, %v6860
        %v6862 = vrcp.pop %v6675
        %v6863 = vmul.f32 1.0, %v6862
        %v6864 = vrcp.pop %v6676
        %v6865 = vmul.f32 1.0, %v6864
        %v6866 = vrcp.pop %v6677
        %v6867 = vmul.f32 1.0, %v6866
        %v6868 = vrcp.pop %v6678
        %v6869 = vmul.f32 1.0, %v6868
        %v6870 = vrcp.pop %v6679
        %v6871 = vmul.f32 1.0, %v6870
        %v6872 = vrcp.pop %v6680
        %v6873 = vmul.f32 1.0, %v6872
        %v6874 = vrcp.pop %v6681
        %v6875 = vmul.f32 1.0, %v6874
        %v6876 = vrcp.pop %v6682
        %v6877 = vmul.f32 1.0, %v6876
        %v6878 = vrcp.pop %v6683
        %v6879 = vmul.f32 1.0, %v6878
        %v6880 = vrcp.pop %v6684
        %v6881 = vmul.f32 1.0, %v6880
        %v6882 = vrcp.pop %v6685
        %v6883 = vmul.f32 1.0, %v6882
        %v6884 = vrcp.pop %v6686
        %v6885 = vmul.f32 1.0, %v6884
        %v6886 = vrcp.pop %v6687
        %v6887 = vmul.f32 1.0, %v6886
        %v6888 = vrcp.pop %v6688
        %v6889 = vmul.f32 1.0, %v6888
        %v6890 = vrcp.pop %v6689
        %v6891 = vmul.f32 1.0, %v6890
        %v6892 = vrcp.pop %v6690
        %v6893 = vmul.f32 1.0, %v6892
        %v6894 = vrcp.pop %v6691
        %v6895 = vmul.f32 1.0, %v6894
        %v6896 = vrcp.pop %v6692
        %v6897 = vmul.f32 1.0, %v6896
        %v6898 = vrcp.pop %v6693
        %v6899 = vmul.f32 1.0, %v6898
        %v6900 = vrcp.pop %v6694
        %v6901 = vmul.f32 1.0, %v6900
        %v6902 = vrcp.pop %v6695
        %v6903 = vmul.f32 1.0, %v6902
        %v6904 = vrcp.pop %v6696
        %v6905 = vmul.f32 1.0, %v6904
        %v6906 = vrcp.pop %v6697
        %v6907 = vmul.f32 1.0, %v6906
        %v6908 = vrcp.pop %v6698
        %v6909 = vmul.f32 1.0, %v6908
        %v6910 = vrcp.pop %v6699
        %v6911 = vmul.f32 1.0, %v6910
        %v6912 = vrcp.pop %v6700
        %v6913 = vmul.f32 1.0, %v6912
        %v6914 = vrcp.pop %v6701
        %v6915 = vmul.f32 1.0, %v6914
        %v6916 = vrcp.pop %v6702
        %v6917 = vmul.f32 1.0, %v6916
        %v6918 = vrcp.pop %v6703
        %v6919 = vmul.f32 1.0, %v6918
        %v6920 = vrcp.pop %v6704
        %v6921 = vmul.f32 1.0, %v6920
        %v6922 = vrcp.pop %v6705
        %v6923 = vmul.f32 1.0, %v6922
        %v6924 = vrcp.pop %v6706
        %v6925 = vmul.f32 1.0, %v6924
        %v6926 = vrcp.pop %v6707
        %v6927 = vmul.f32 1.0, %v6926
        %v6928 = vrcp.pop %v6708
        %v6929 = vmul.f32 1.0, %v6928
        %v6930 = vrcp.pop %v6709
        %v6931 = vmul.f32 1.0, %v6930
        %v6932 = vrcp.pop %v6710
        %v6933 = vmul.f32 1.0, %v6932
        %v6934 = vrcp.pop %v6711
        %v6935 = vmul.f32 1.0, %v6934
        %6936 = vst [vmem:[%s426] sm:$0xff] %v6713
        %6937 = vst [vmem:[%s426 + $0x8] sm:$0xff] %v6715
        %6938 = vst [vmem:[%s426 + $0x10] sm:$0xff] %v6717
        %6939 = vst [vmem:[%s426 + $0x18] sm:$0xff] %v6719
        %6940 = vst [vmem:[%s426 + $0x20] sm:$0xff] %v6721
        %6941 = vst [vmem:[%s426 + $0x28] sm:$0xff] %v6723
        %6942 = vst.msk [vmem:[%s426 + $0x30] sm:$0xff] %vm1972, %v6725
        %6943 = vst [vmem:[%s426 + $0x38] sm:$0xff] %v6727
        %6944 = vst [vmem:[%s426 + $0x40] sm:$0xff] %v6729
        %6945 = vst [vmem:[%s426 + $0x48] sm:$0xff] %v6731
        %6946 = vst [vmem:[%s426 + $0x50] sm:$0xff] %v6733
        %6947 = vst [vmem:[%s426 + $0x58] sm:$0xff] %v6735
        %6948 = vst [vmem:[%s426 + $0x60] sm:$0xff] %v6737
        %6949 = vst.msk [vmem:[%s426 + $0x68] sm:$0xff] %vm1972, %v6739
        %6950 = vst [vmem:[%s426 + $0x70] sm:$0xff] %v6741
        %6951 = vst [vmem:[%s426 + $0x78] sm:$0xff] %v6743
        %6952 = vst [vmem:[%s426 + $0x80] sm:$0xff] %v6745
        %6953 = vst [vmem:[%s426 + $0x88] sm:$0xff] %v6747
        %6954 = vst [vmem:[%s426 + $0x90] sm:$0xff] %v6749
        %6955 = vst [vmem:[%s426 + $0x98] sm:$0xff] %v6751
        %6956 = vst.msk [vmem:[%s426 + $0xa0] sm:$0xff] %vm1972, %v6753
        %6957 = vst [vmem:[%s426 + $0xa8] sm:$0xff] %v6755
        %6958 = vst [vmem:[%s426 + $0xb0] sm:$0xff] %v6757
        %6959 = vst [vmem:[%s426 + $0xb8] sm:$0xff] %v6759
        %6960 = vst [vmem:[%s426 + $0xc0] sm:$0xff] %v6761
        %6961 = vst [vmem:[%s426 + $0xc8] sm:$0xff] %v6763
        %6962 = vst [vmem:[%s426 + $0xd0] sm:$0xff] %v6765
        %6963 = vst.msk [vmem:[%s426 + $0xd8] sm:$0xff] %vm1972, %v6767
        %6964 = vst [vmem:[%s426 + $0xe0] sm:$0xff] %v6769
        %6965 = vst [vmem:[%s426 + $0xe8] sm:$0xff] %v6771
        %6966 = vst [vmem:[%s426 + $0xf0] sm:$0xff] %v6773
        %6967 = vst [vmem:[%s426 + $0xf8] sm:$0xff] %v6775
        %6968 = vst [vmem:[%s426 + $0x100] sm:$0xff] %v6777
        %6969 = vst [vmem:[%s426 + $0x108] sm:$0xff] %v6779
        %6970 = vst.msk [vmem:[%s426 + $0x110] sm:$0xff] %vm1972, %v6781
        %6971 = vst [vmem:[%s426 + $0x118] sm:$0xff] %v6783
        %6972 = vst [vmem:[%s426 + $0x120] sm:$0xff] %v6785
        %6973 = vst [vmem:[%s426 + $0x128] sm:$0xff] %v6787
        %6974 = vst [vmem:[%s426 + $0x130] sm:$0xff] %v6789
        %6975 = vst [vmem:[%s426 + $0x138] sm:$0xff] %v6791
        %6976 = vst [vmem:[%s426 + $0x140] sm:$0xff] %v6793
        %6977 = vst.msk [vmem:[%s426 + $0x148] sm:$0xff] %vm1972, %v6795
        %6978 = vst [vmem:[%s426 + $0x150] sm:$0xff] %v6797
        %6979 = vst [vmem:[%s426 + $0x158] sm:$0xff] %v6799
        %6980 = vst [vmem:[%s426 + $0x160] sm:$0xff] %v6801
        %6981 = vst [vmem:[%s426 + $0x168] sm:$0xff] %v6803
        %6982 = vst [vmem:[%s426 + $0x170] sm:$0xff] %v6805
        %6983 = vst [vmem:[%s426 + $0x178] sm:$0xff] %v6807
        %6984 = vst.msk [vmem:[%s426 + $0x180] sm:$0xff] %vm1972, %v6809
        %6985 = vst [vmem:[%s426 + $0x188] sm:$0xff] %v6811
        %6986 = vst [vmem:[%s426 + $0x190] sm:$0xff] %v6813
        %6987 = vst [vmem:[%s426 + $0x198] sm:$0xff] %v6815
        %6988 = vst [vmem:[%s426 + $0x1a0] sm:$0xff] %v6817
        %6989 = vst [vmem:[%s426 + $0x1a8] sm:$0xff] %v6819
        %6990 = vst [vmem:[%s426 + $0x1b0] sm:$0xff] %v6821
        %6991 = vst.msk [vmem:[%s426 + $0x1b8] sm:$0xff] %vm1972, %v6823
        %6992 = vst [vmem:[%s426 + $0x1c0] sm:$0xff] %v6825
        %6993 = vst [vmem:[%s426 + $0x1c8] sm:$0xff] %v6827
        %6994 = vst [vmem:[%s426 + $0x1d0] sm:$0xff] %v6829
        %6995 = vst [vmem:[%s426 + $0x1d8] sm:$0xff] %v6831
        %6996 = vst [vmem:[%s426 + $0x1e0] sm:$0xff] %v6833
        %6997 = vst [vmem:[%s426 + $0x1e8] sm:$0xff] %v6835
        %6998 = vst.msk [vmem:[%s426 + $0x1f0] sm:$0xff] %vm1972, %v6837
        %6999 = vst [vmem:[%s426 + $0x1f8] sm:$0xff] %v6839
        %7000 = vst [vmem:[%s426 + $0x200] sm:$0xff] %v6841
        %7001 = vst [vmem:[%s426 + $0x208] sm:$0xff] %v6843
        %7002 = vst [vmem:[%s426 + $0x210] sm:$0xff] %v6845
        %7003 = vst [vmem:[%s426 + $0x218] sm:$0xff] %v6847
        %7004 = vst [vmem:[%s426 + $0x220] sm:$0xff] %v6849
        %7005 = vst.msk [vmem:[%s426 + $0x228] sm:$0xff] %vm1972, %v6851
        %7006 = vst [vmem:[%s426 + $0x230] sm:$0xff] %v6853
        %7007 = vst [vmem:[%s426 + $0x238] sm:$0xff] %v6855
        %7008 = vst [vmem:[%s426 + $0x240] sm:$0xff] %v6857
        %7009 = vst [vmem:[%s426 + $0x248] sm:$0xff] %v6859
        %7010 = vst [vmem:[%s426 + $0x250] sm:$0xff] %v6861
        %7011 = vst [vmem:[%s426 + $0x258] sm:$0xff] %v6863
        %7012 = vst.msk [vmem:[%s426 + $0x260] sm:$0xff] %vm1972, %v6865
        %7013 = vst [vmem:[%s426 + $0x268] sm:$0xff] %v6867
        %7014 = vst [vmem:[%s426 + $0x270] sm:$0xff] %v6869
        %7015 = vst [vmem:[%s426 + $0x278] sm:$0xff] %v6871
        %7016 = vst [vmem:[%s426 + $0x280] sm:$0xff] %v6873
        %7017 = vst [vmem:[%s426 + $0x288] sm:$0xff] %v6875
        %7018 = vst [vmem:[%s426 + $0x290] sm:$0xff] %v6877
        %7019 = vst.msk [vmem:[%s426 + $0x298] sm:$0xff] %vm1972, %v6879
        %7020 = vst [vmem:[%s426 + $0x2a0] sm:$0xff] %v6881
        %7021 = vst [vmem:[%s426 + $0x2a8] sm:$0xff] %v6883
        %7022 = vst [vmem:[%s426 + $0x2b0] sm:$0xff] %v6885
        %7023 = vst [vmem:[%s426 + $0x2b8] sm:$0xff] %v6887
        %7024 = vst [vmem:[%s426 + $0x2c0] sm:$0xff] %v6889
        %7025 = vst [vmem:[%s426 + $0x2c8] sm:$0xff] %v6891
        %7026 = vst.msk [vmem:[%s426 + $0x2d0] sm:$0xff] %vm1972, %v6893
        %7027 = vst [vmem:[%s426 + $0x2d8] sm:$0xff] %v6895
        %7028 = vst [vmem:[%s426 + $0x2e0] sm:$0xff] %v6897
        %7029 = vst [vmem:[%s426 + $0x2e8] sm:$0xff] %v6899
        %7030 = vst [vmem:[%s426 + $0x2f0] sm:$0xff] %v6901
        %7031 = vst [vmem:[%s426 + $0x2f8] sm:$0xff] %v6903
        %7032 = vst [vmem:[%s426 + $0x300] sm:$0xff] %v6905
        %7033 = vst.msk [vmem:[%s426 + $0x308] sm:$0xff] %vm1972, %v6907
        %7034 = vst [vmem:[%s426 + $0x310] sm:$0xff] %v6909
        %7035 = vst [vmem:[%s426 + $0x318] sm:$0xff] %v6911
        %7036 = vst [vmem:[%s426 + $0x320] sm:$0xff] %v6913
        %7037 = vst [vmem:[%s426 + $0x328] sm:$0xff] %v6915
        %7038 = vst [vmem:[%s426 + $0x330] sm:$0xff] %v6917
        %7039 = vst [vmem:[%s426 + $0x338] sm:$0xff] %v6919
        %7040 = vst.msk [vmem:[%s426 + $0x340] sm:$0xff] %vm1972, %v6921
        %7041 = vst [vmem:[%s426 + $0x348] sm:$0xff] %v6923
        %7042 = vst [vmem:[%s426 + $0x350] sm:$0xff] %v6925
        %7043 = vst [vmem:[%s426 + $0x358] sm:$0xff] %v6927
        %7044 = vst [vmem:[%s426 + $0x360] sm:$0xff] %v6929
        %7045 = vst [vmem:[%s426 + $0x368] sm:$0xff] %v6931
        %7046 = vst [vmem:[%s426 + $0x370] sm:$0xff] %v6933
        %7047 = vst.msk [vmem:[%s426 + $0x378] sm:$0xff] %vm1972, %v6935
        %s7048 = smul.u32 16, %s26
        %p7049 = scmp.lt.s32.totalorder %s7048, 47
        %s7050 = scalar_select %p7049, %s7048, 47
        %s7051 = smul.addr %s7050, 7
        %s7052 = smul.addr %s7051, 8
        %s7053 = scalar_lea.vmem %s10, %s7052
        %s7054 = sand.u32 %s280, 1
        %s7055 = scalar_lea.sflag [#allocation3], %s7054
        %s7056 = sand.u32 %s280, 1
        %s7057 = smul.addr %s7056, 256
        %s7058 = scalar_lea.vmem [#allocation2], %s7057
        // Predicated region
        $region61: #{tpu_custom_call.1} parent=59 // pred_check
          %p7059 = pneg %p264
        $region62: #{tpu_custom_call.1} parent=59 // pred_check_branch
          %7061 = sbr.rel (%p7059) target = $region64
        $region63: #{tpu_custom_call.1} parent=59 // pred_region
          %s7062 = smul.u32 16, %s26
        $region64: #{tpu_custom_call.1} parent=59 // pred_fallthru
          _
        // Predicated region
        $region65: #{tpu_custom_call.1} parent=59 // pred_check
          %p7063 = pneg %p290
        $region66: #{tpu_custom_call.1} parent=59 // pred_check_branch
          %7065 = sbr.rel (%p7063) target = $region68
        $region67: #{tpu_custom_call.1} parent=59 // pred_region
          %s7066 = smul.u32 16, %s26
          %s7068 = ssub.s32 4096, 4096
          %7069 = vsyncadd %s7055, %s7068
          %s7070 = smul.addr %s7066, 2
          %s7071 = smul.addr %s7070, 128
          %s7072 = scalar_lea.hbm %s11, %s7071
          %s7073 = sshll.u32 %s7058, 4
          %s7074 = int_to_ptr.vmem [resolvable:$true] %s7073
          %7079 = dma.vmem_to_hbm [thread:$0]  %s7074, 4096, %s7072, %s7055, 256, 256, 16
        $region68: #{tpu_custom_call.1} parent=59 // pred_fallthru
          _
      $region60: #{tpu_custom_call.1} parent=5 // pred_fallthru
        _
      %p7080 = scmp.le.s32.totalorder 2, %s21
      // Predicated region
      $region69: #{tpu_custom_call.1} parent=5 // pred_check
        %p7081 = pneg %p7080
      $region70: #{tpu_custom_call.1} parent=5 // pred_check_branch
        %7083 = sbr.rel (%p7081) target = $region72
      $region71: #{tpu_custom_call.1} parent=5 // pred_region
        %s7084 = ssub.s32 %s21, 2
        // Predicated region
        $region73: #{tpu_custom_call.1} parent=71 // pred_check
          %p7085 = pneg %p270
        $region74: #{tpu_custom_call.1} parent=71 // pred_check_branch
          %7087 = sbr.rel (%p7085) target = $region76
        $region75: #{tpu_custom_call.1} parent=71 // pred_region
          %s7088 = smul.u32 16, %s27
          %p7089 = scmp.lt.s32.totalorder %s7088, 47
          %s7090 = scalar_select %p7089, %s7088, 47
          %s7091 = smul.addr %s7090, 7
          %s7092 = smul.addr %s7091, 8
          %s7093 = scalar_lea.vmem %s10, %s7092
        $region76: #{tpu_custom_call.1} parent=71 // pred_fallthru
          _
        // Predicated region
        $region77: #{tpu_custom_call.1} parent=71 // pred_check
          %p7094 = pneg %p296
        $region78: #{tpu_custom_call.1} parent=71 // pred_check_branch
          %7096 = sbr.rel (%p7094) target = $region80
        $region79: #{tpu_custom_call.1} parent=71 // pred_region
          %s7097 = sand.u32 %s281, 1
          %s7098 = scalar_lea.sflag [#allocation3], %s7097
          %s7099 = sand.u32 %s281, 1
          %s7100 = smul.addr %s7099, 256
          %s7101 = scalar_lea.vmem [#allocation2], %s7100
          %7102 = dma.done %s7098, 4096
        $region80: #{tpu_custom_call.1} parent=71 // pred_fallthru
          _
      $region72: #{tpu_custom_call.1} parent=5 // pred_fallthru
        _
    $region6: #{tpu_custom_call.1} parent=1 // loop_footer
      %s25 = sadd.s32 1, %s21
    $region7: #{tpu_custom_call.1} parent=1 // loop_footer_branch
      %20 = sbr.rel target = $region3
    $region8: #{tpu_custom_call.1} parent=1 // loop_exit
      _
    %7103 = vsyncpa [#allocation3], 1
    %s7104 = scalar_lea.sflag [#allocation3], 1
    %7105 = vsyncpa %s7104, 1

</llo_original>
